<compile_context>
chip_gen: v5e
topology: v5e:2x2
jax: 0.10.0
libtpu: 0.0.40
codegen_flags: <defaults>
</compile_context>

<pallas_src>
import functools

import jax
import jax.numpy as jnp
from jax.experimental import pallas as pl
from jax.experimental.pallas import tpu as pltpu


def _bottleneck_kernel(xb_ref, xr_ref, w1_ref, b1_ref, w2_ref, b2_ref,
                       w3_ref, b3_ref, o_ref, h1buf_ref, *, H, W, tile_h, pad0):
    f32, bf16 = jnp.float32, jnp.bfloat16
    width = w1_ref.shape[1]
    rows = tile_h * W                     # valid output rows for this tile
    rows_ext = (tile_h + 2) * W           # + 1-row halo above and below

    i = pl.program_id(1)                  # row-tile index within the image
    row0 = i * tile_h

    # ---- conv1 (1x1) + bn1 + relu on this tile + halo ------------------------
    # xb is row-padded (one zero row top & bottom, NO column padding), so the
    # halo-extended input is a single contiguous, aligned slice of the resident
    # bf16 image: padded rows [row0, row0 + tile_h + 2).
    start = row0 * W
    if (tile_h * W) % 8 == 0:
        start = pl.multiple_of(start, 8)
    xt = xb_ref[0, pl.ds(start, rows_ext), :]                       # bf16
    h1 = jnp.dot(xt, w1_ref[...], preferred_element_type=f32) + b1_ref[...]
    h1 = jnp.maximum(h1, 0.0)
    # The zero pad rows of xb produce relu(b1) != 0 -> force the halo rows to
    # exact zero when the tile touches the top/bottom of the image.
    ridx = jax.lax.broadcasted_iota(jnp.int32, (rows_ext, 1), 0)
    keep = ((row0 > 0) | (ridx >= W)) & ((row0 + tile_h < H) | (ridx < rows_ext - W))
    h1buf_ref[pl.ds(pad0, rows_ext), :] = jnp.where(keep, h1, 0.0).astype(bf16)

    # ---- conv2 (3x3, pad=1) + bn2 + relu --------------------------------------
    # Dense layout: tap (dy, dx) for output position p=(r, c) reads the
    # contiguous slice starting at pad0 + dy*W + dx - 1.  The only "wrong"
    # values in that slice are the column wraps (c==0 for dx==0, c==W-1 for
    # dx==2), which correspond to the zero left/right padding of the true conv
    # and are removed with a select.  The two possible out-of-range reads
    # (index pad0-1 and pad0+rows_ext) only ever feed those masked positions,
    # so the scratch never needs zero-initialisation.
    cidx = jax.lax.broadcasted_iota(jnp.int32, (rows, 1), 0) % W
    not_left = cidx != 0                  # mask for dx == 0 taps
    not_right = cidx != (W - 1)           # mask for dx == 2 taps
    acc = jnp.zeros((rows, width), f32)
    for t in range(9):                    # 9 taps, static offsets
        dy, dx = divmod(t, 3)
        patch = h1buf_ref[pl.ds(pad0 + dy * W + dx - 1, rows), :]   # bf16
        if dx == 0:
            patch = jnp.where(not_left, patch, 0.0)
        elif dx == 2:
            patch = jnp.where(not_right, patch, 0.0)
        acc = acc + jnp.dot(patch, w2_ref[t], preferred_element_type=f32)
    h2 = jnp.maximum(acc + b2_ref[...], 0.0)

    # ---- conv3 (1x1) + bn3, residual add, relu (dense, lane-aligned store) ----
    h3 = jnp.dot(h2.astype(bf16), w3_ref[...], preferred_element_type=f32) + b3_ref[...]
    o_ref[0] = jnp.maximum(h3 + xr_ref[0], 0.0).astype(o_ref.dtype)


def _pick_tile_h(H, tile_h):
    """Never let the tile height silently degenerate toward 1-row tiles."""
    tile_h = min(tile_h, H)
    if H % tile_h == 0:
        return tile_h
    for cand in range(min(2 * tile_h, H), tile_h, -1):
        if H % cand == 0:
            return cand
    return H  # single tile per image


def bottleneck_pallas(x_nhwc, params, *, tile_h=8):
    """x_nhwc: (N, H, W, Cin) float32 (NHWC end-to-end).
    params: folded (w1,b1,w2,b2,w3,b3); weights bf16, biases f32 (1, C).
    tile_h: rows per grid step; raise (16/32) on 128-MiB VMEM parts (v5e/v6e),
    keep >=2 tiles per image on v7x so both TensorCores get work."""
    w1, b1, w2, b2, w3, b3 = params
    N, H, W, Cin = x_nhwc.shape
    width = w1.shape[1]
    Cout = w3.shape[1]
    assert Cin == Cout, "identity residual requires in_planes == 4*planes"
    # TODO(synk): downsample / stride>1 / groups>1 / dilation>1 / FiLM branches
    # of the PyTorch module are not modeled (defaults only).

    th = _pick_tile_h(H, tile_h)
    n_tiles = H // th
    rows_ext = (th + 2) * W
    pad0 = 8                                   # aligned slack before the h1 rows
    nbuf = pad0 + rows_ext + 8                 # +8 slack rows for tap over-read

    # conv1 source: bf16 (halves the resident VMEM block), one zero row of
    # padding above/below so every tile's halo read is one contiguous slice.
    xb = jnp.pad(x_nhwc.astype(jnp.bfloat16), ((0, 0), (1, 1), (0, 0), (0, 0)))
    xb = xb.reshape(N, (H + 2) * W, Cin)
    # residual source: f32, pipelined per tile (aligned reads).
    xr = x_nhwc.reshape(N, H * W, Cin)

    w2k = w2.reshape(9, width, width)          # tap-major for static indexing

    kernel = functools.partial(_bottleneck_kernel, H=H, W=W, tile_h=th, pad0=pad0)

    out = pl.pallas_call(
        kernel,
        out_shape=jax.ShapeDtypeStruct((N, H * W, Cout), jnp.float32),
        grid_spec=pltpu.PrefetchScalarGridSpec(
            num_scalar_prefetch=0,
            grid=(N, n_tiles),
            in_specs=[
                # whole row-padded bf16 image stays resident across the row
                # tiles of image n (conv1 + halo source).
                pl.BlockSpec((1, (H + 2) * W, Cin), lambda n, i: (n, 0, 0)),
                # per-tile f32 residual block (normal pipelined input).
                pl.BlockSpec((1, th * W, Cin), lambda n, i: (n, i, 0)),
                pl.BlockSpec((Cin, width), lambda n, i: (0, 0)),
                pl.BlockSpec((1, width), lambda n, i: (0, 0)),
                pl.BlockSpec((9, width, width), lambda n, i: (0, 0, 0)),
                pl.BlockSpec((1, width), lambda n, i: (0, 0)),
                pl.BlockSpec((width, Cout), lambda n, i: (0, 0)),
                pl.BlockSpec((1, Cout), lambda n, i: (0, 0)),
            ],
            out_specs=pl.BlockSpec((1, th * W, Cout), lambda n, i: (n, i, 0)),
            scratch_shapes=[pltpu.VMEM((nbuf, width), jnp.bfloat16)],
        ),
        compiler_params=pltpu.CompilerParams(
            # row tiles are fully independent (halo recompute), so both grid
            # axes can be split across TensorCores on v7x.
            dimension_semantics=("parallel", "parallel"),
            vmem_limit_bytes=48 * 1024 * 1024,
        ),
    )(xb, xr, w1, b1, w2k, b2, w3, b3)
    return out.reshape(N, H, W, Cout)


def make_params(key, in_planes, planes, base_width=64, groups=1):
    width = int(planes * (base_width / 64.0)) * groups
    cout = planes * 4
    ks = jax.random.split(key, 6)
    w1 = 0.1 * jax.random.normal(ks[0], (in_planes, width), jnp.float32)
    w2 = 0.1 * jax.random.normal(ks[1], (3, 3, width, width), jnp.float32)  # HWIO
    w3 = 0.1 * jax.random.normal(ks[2], (width, cout), jnp.float32)

    def bn(k, c):
        k1, k2, k3, k4 = jax.random.split(k, 4)
        gamma = jax.random.uniform(k1, (c,), jnp.float32, 0.5, 1.5)
        beta = 0.1 * jax.random.normal(k2, (c,), jnp.float32)
        mean = 0.1 * jax.random.normal(k3, (c,), jnp.float32)
        var = jax.random.uniform(k4, (c,), jnp.float32, 0.5, 1.5)
        return gamma, beta, mean, var

    return (w1, bn(ks[3], width), w2, bn(ks[4], width), w3, bn(ks[5], cout))


def fold_params(raw, eps=1e-5):
    """Fold BN (eval mode) into conv weights; weights -> bf16, biases -> f32."""
    w1, bn1, w2, bn2, w3, bn3 = raw

    def fold(w, bn_p, ch_axis):
        gamma, beta, mean, var = bn_p
        scale = gamma / jnp.sqrt(var + eps)
        bias = beta - mean * scale
        shp = [1] * w.ndim
        shp[ch_axis] = -1
        wf = (w * scale.reshape(shp)).astype(jnp.bfloat16)
        return wf, bias.reshape(1, -1).astype(jnp.float32)

    w1f, b1 = fold(w1, bn1, 1)
    w2f, b2 = fold(w2, bn2, 3)
    w3f, b3 = fold(w3, bn3, 1)
    return (w1f, b1, w2f, b2, w3f, b3)


def bottleneck_ref(x, params):
    """Pure-JAX reference (lax conv), NHWC, same folded/bf16 weights."""
    w1, b1, w2, b2, w3, b3 = params
    dn = ("NHWC", "HWIO", "NHWC")
    bf16, f32 = jnp.bfloat16, jnp.float32
    Cin, width = w1.shape
    Cout = w3.shape[1]

    def conv(h, w, pad):
        return jax.lax.conv_general_dilated(
            h.astype(bf16), w, (1, 1), pad, dimension_numbers=dn,
            preferred_element_type=f32)

    h = conv(x, w1.reshape(1, 1, Cin, width), "VALID")
    h = jnp.maximum(h + b1.reshape(1, 1, 1, -1), 0.0)
    h = conv(h, w2, ((1, 1), (1, 1)))
    h = jnp.maximum(h + b2.reshape(1, 1, 1, -1), 0.0)
    h = conv(h, w3.reshape(1, 1, width, Cout), "VALID")
    h = h + b3.reshape(1, 1, 1, -1)
    return jnp.maximum(h + x, 0.0)


if __name__ == "__main__":
    # Small shapes: batch=2, planes=32 -> width=32, Cout=in_planes=128 (lane
    # dense output channels), 16x16 spatial, NHWC end-to-end.  tile_h=8 gives
    # 2 row tiles per image so the halo-recompute path is exercised.
    # NOTE: width=32 badly underfills the MXU (K=N=32); real Bottleneck widths
    # (>=64/128) self-resolve this — don't tune from this shape.
    N, planes, H, W = 2, 32, 16, 16
    in_planes = planes * 4

    key = jax.random.PRNGKey(0)
    kx, kp = jax.random.split(key)
    x = jax.random.normal(kx, (N, H, W, in_planes), jnp.float32)
    params = fold_params(make_params(kp, in_planes, planes))

    out = jax.block_until_ready(bottleneck_pallas(x, params, tile_h=8))
    ref = jax.block_until_ready(bottleneck_ref(x, params))

    assert out.shape == (N, H, W, planes * 4)
    max_err = float(jnp.max(jnp.abs(out - ref)))
    assert jnp.allclose(out, ref, atol=5e-3, rtol=5e-3), f"mismatch: {max_err}"

    # TODO(synk): the PyTorch forward's debug print() calls (including the
    # unconditional language_embed.size(), which requires language_embed to be
    # passed) and the FiLM / downsample branches are not modeled.
    print("KERNEL_OK")
</pallas_src>

<mosaic_0001>
module attributes {stable_mosaic.version = 11 : i64} {
  func.func @_bottleneck_kernel(%arg0: i32, %arg1: i32, %arg2: memref<1x288x128xbf16, #tpu.memory_space<vmem>>, %arg3: memref<1x128x128xf32, #tpu.memory_space<vmem>>, %arg4: memref<128x32xbf16, #tpu.memory_space<vmem>>, %arg5: memref<1x32xf32, #tpu.memory_space<vmem>>, %arg6: memref<9x32x32xbf16, #tpu.memory_space<vmem>>, %arg7: memref<1x32xf32, #tpu.memory_space<vmem>>, %arg8: memref<32x128xbf16, #tpu.memory_space<vmem>>, %arg9: memref<1x128xf32, #tpu.memory_space<vmem>>, %arg10: memref<1x128x128xf32, #tpu.memory_space<vmem>>, %arg11: memref<176x32xbf16, #tpu.memory_space<vmem>>) attributes {dimension_semantics = [#tpu.dimension_semantics<parallel>, #tpu.dimension_semantics<parallel>], iteration_bounds = array<i64: 2, 2>, scalar_prefetch = 0 : i64, scratch_operands = 1 : i64, tpu.core_type = #tpu.core_type<tc>, window_params = [{transform_indices = @transform_0, window_bounds = array<i64: 1, 288, 128>}, {transform_indices = @transform_1, window_bounds = array<i64: 1, 128, 128>}, {pipeline_mode = #tpu.pipeline_mode<synchronous>, transform_indices = @transform_2, window_bounds = array<i64: 128, 32>}, {pipeline_mode = #tpu.pipeline_mode<synchronous>, transform_indices = @transform_3, window_bounds = array<i64: 1, 32>}, {pipeline_mode = #tpu.pipeline_mode<synchronous>, transform_indices = @transform_4, window_bounds = array<i64: 9, 32, 32>}, {pipeline_mode = #tpu.pipeline_mode<synchronous>, transform_indices = @transform_5, window_bounds = array<i64: 1, 32>}, {pipeline_mode = #tpu.pipeline_mode<synchronous>, transform_indices = @transform_6, window_bounds = array<i64: 32, 128>}, {pipeline_mode = #tpu.pipeline_mode<synchronous>, transform_indices = @transform_7, window_bounds = array<i64: 1, 128>}, {transform_indices = @transform_8, window_bounds = array<i64: 1, 128, 128>}]} {
    %c8_i32 = arith.constant 8 : i32
    %0 = arith.muli %arg1, %c8_i32 : i32
    %c16_i32 = arith.constant 16 : i32
    %1 = arith.muli %0, %c16_i32 : i32
    %2 = tpu.assume_multiple %1, 8 : i32
    %c0 = arith.constant 0 : index
    %3 = arith.index_cast %2 : i32 to index
    %c0_0 = arith.constant 0 : index
    %4 = vector.load %arg2[%c0, %3, %c0_0] : memref<1x288x128xbf16, #tpu.memory_space<vmem>>, vector<1x160x128xbf16>
    %5 = vector.shape_cast %4 : vector<1x160x128xbf16> to vector<160x128xbf16>
    %c0_1 = arith.constant 0 : index
    %c0_2 = arith.constant 0 : index
    %6 = vector.load %arg4[%c0_1, %c0_2] : memref<128x32xbf16, #tpu.memory_space<vmem>>, vector<128x32xbf16>
    %cst = arith.constant dense<0.000000e+00> : vector<160x32xf32>
    %7 = tpu.matmul %5, %6, %cst {dimension_numbers = #tpu.dot_dimension_numbers<[1], [0], [0], [1], [0, 0, 1, 1], [], []>} : vector<160x128xbf16>, vector<128x32xbf16>, vector<160x32xf32> -> vector<160x32xf32>
    %c0_3 = arith.constant 0 : index
    %c0_4 = arith.constant 0 : index
    %8 = vector.load %arg5[%c0_3, %c0_4] : memref<1x32xf32, #tpu.memory_space<vmem>>, vector<1x32xf32>
    %9 = vector.broadcast %8 : vector<1x32xf32> to vector<160x32xf32>
    %10 = arith.addf %7, %9 : vector<160x32xf32>
    %cst_5 = arith.constant 0.000000e+00 : f32
    %11 = vector.broadcast %cst_5 : f32 to vector<160x32xf32>
    %12 = arith.maximumf %10, %11 : vector<160x32xf32>
    %13 = tpu.iota {dimensions = array<i32: 0>} : vector<160x1xi32>
    %c0_i32 = arith.constant 0 : i32
    %14 = arith.cmpi sgt, %0, %c0_i32 : i32
    %c16_i32_6 = arith.constant 16 : i32
    %15 = vector.broadcast %c16_i32_6 : i32 to vector<160x1xi32>
    %16 = arith.cmpi sge, %13, %15 : vector<160x1xi32>
    %17 = vector.broadcast %14 : i1 to vector<160x1xi1>
    %18 = arith.ori %17, %16 : vector<160x1xi1>
    %c8_i32_7 = arith.constant 8 : i32
    %19 = arith.addi %0, %c8_i32_7 : i32
    %c16_i32_8 = arith.constant 16 : i32
    %20 = arith.cmpi slt, %19, %c16_i32_8 : i32
    %c144_i32 = arith.constant 144 : i32
    %21 = vector.broadcast %c144_i32 : i32 to vector<160x1xi32>
    %22 = arith.cmpi slt, %13, %21 : vector<160x1xi32>
    %23 = vector.broadcast %20 : i1 to vector<160x1xi1>
    %24 = arith.ori %23, %22 : vector<160x1xi1>
    %25 = arith.andi %18, %24 : vector<160x1xi1>
    %cst_9 = arith.constant 0.000000e+00 : f32
    %26 = vector.shape_cast %25 : vector<160x1xi1> to vector<160x1xi1>
    %27 = vector.broadcast %26 : vector<160x1xi1> to vector<160x32xi1>
    %28 = vector.broadcast %cst_9 : f32 to vector<160x32xf32>
    %29 = arith.select %27, %12, %28 : vector<160x32xi1>, vector<160x32xf32>
    %30 = arith.truncf %29 : vector<160x32xf32> to vector<160x32xbf16>
    %c8 = arith.constant 8 : index
    %c0_10 = arith.constant 0 : index
    %31 = vector.load %arg11[%c8, %c0_10] : memref<176x32xbf16, #tpu.memory_space<vmem>>, vector<160x32xbf16>
    tpu.vector_store %arg11[%c8, %c0_10], %30 {strides = array<i32>} : memref<176x32xbf16, #tpu.memory_space<vmem>>, vector<160x32xbf16>,
    %32 = tpu.iota {dimensions = array<i32: 0>} : vector<128x1xi32>
    %c16_i32_11 = arith.constant 16 : i32
    %c0_i32_12 = arith.constant 0 : i32
    %33 = arith.cmpi eq, %c16_i32_11, %c0_i32_12 : i32
    %c1_i32 = arith.constant 1 : i32
    %34 = arith.select %33, %c1_i32, %c16_i32_11 : i32
    %35 = vector.broadcast %34 : i32 to vector<128x1xi32>
    %36 = arith.remsi %32, %35 : vector<128x1xi32>
    %c0_i32_13 = arith.constant 0 : i32
    %37 = vector.broadcast %c0_i32_13 : i32 to vector<128x1xi32>
    %38 = arith.cmpi ne, %36, %37 : vector<128x1xi32>
    %c0_i32_14 = arith.constant 0 : i32
    %39 = vector.broadcast %c0_i32_14 : i32 to vector<128x1xi32>
    %40 = arith.cmpi slt, %36, %39 : vector<128x1xi32>
    %c0_i32_15 = arith.constant 0 : i32
    %41 = arith.cmpi slt, %34, %c0_i32_15 : i32
    %42 = vector.broadcast %41 : i1 to vector<128x1xi1>
    %43 = vector.broadcast %42 : vector<128x1xi1> to vector<128x1xi1>
    %44 = arith.xori %40, %43 : vector<128x1xi1>
    %45 = arith.andi %44, %38 : vector<128x1xi1>
    %46 = vector.broadcast %34 : i32 to vector<128x1xi32>
    %47 = arith.addi %36, %46 : vector<128x1xi32>
    %48 = arith.select %45, %47, %36 : vector<128x1xi1>, vector<128x1xi32>
    %c0_i32_16 = arith.constant 0 : i32
    %49 = vector.broadcast %c0_i32_16 : i32 to vector<128x1xi32>
    %50 = arith.cmpi ne, %48, %49 : vector<128x1xi32>
    %c15_i32 = arith.constant 15 : i32
    %51 = vector.broadcast %c15_i32 : i32 to vector<128x1xi32>
    %52 = arith.cmpi ne, %48, %51 : vector<128x1xi32>
    %cst_17 = arith.constant 0.000000e+00 : f32
    %53 = vector.broadcast %cst_17 : f32 to vector<128x32xf32>
    %c7 = arith.constant 7 : index
    %c0_18 = arith.constant 0 : index
    %54 = vector.load %arg11[%c7, %c0_18] : memref<176x32xbf16, #tpu.memory_space<vmem>>, vector<128x32xbf16>
    %cst_19 = arith.constant 0.000000e+00 : f32
    %55 = arith.truncf %cst_19 : f32 to bf16
    %56 = vector.shape_cast %50 : vector<128x1xi1> to vector<128x1xi1>
    %57 = vector.broadcast %56 : vector<128x1xi1> to vector<128x32xi1>
    %58 = vector.broadcast %55 : bf16 to vector<128x32xbf16>
    %59 = arith.select %57, %54, %58 : vector<128x32xi1>, vector<128x32xbf16>
    %c0_20 = arith.constant 0 : index
    %c0_21 = arith.constant 0 : index
    %c0_22 = arith.constant 0 : index
    %60 = vector.load %arg6[%c0_20, %c0_21, %c0_22] : memref<9x32x32xbf16, #tpu.memory_space<vmem>>, vector<1x32x32xbf16>
    %61 = vector.shape_cast %60 : vector<1x32x32xbf16> to vector<32x32xbf16>
    %cst_23 = arith.constant dense<0.000000e+00> : vector<128x32xf32>
    %62 = tpu.matmul %59, %61, %cst_23 {dimension_numbers = #tpu.dot_dimension_numbers<[1], [0], [0], [1], [0, 0, 1, 1], [], []>} : vector<128x32xbf16>, vector<32x32xbf16>, vector<128x32xf32> -> vector<128x32xf32>
    %63 = arith.addf %53, %62 : vector<128x32xf32>
    %c8_24 = arith.constant 8 : index
    %c0_25 = arith.constant 0 : index
    %64 = vector.load %arg11[%c8_24, %c0_25] : memref<176x32xbf16, #tpu.memory_space<vmem>>, vector<128x32xbf16>
    %c1 = arith.constant 1 : index
    %c0_26 = arith.constant 0 : index
    %c0_27 = arith.constant 0 : index
    %65 = vector.load %arg6[%c1, %c0_26, %c0_27] : memref<9x32x32xbf16, #tpu.memory_space<vmem>>, vector<1x32x32xbf16>
    %66 = vector.shape_cast %65 : vector<1x32x32xbf16> to vector<32x32xbf16>
    %cst_28 = arith.constant dense<0.000000e+00> : vector<128x32xf32>
    %67 = tpu.matmul %64, %66, %cst_28 {dimension_numbers = #tpu.dot_dimension_numbers<[1], [0], [0], [1], [0, 0, 1, 1], [], []>} : vector<128x32xbf16>, vector<32x32xbf16>, vector<128x32xf32> -> vector<128x32xf32>
    %68 = arith.addf %63, %67 : vector<128x32xf32>
    %c9 = arith.constant 9 : index
    %c0_29 = arith.constant 0 : index
    %69 = vector.load %arg11[%c9, %c0_29] : memref<176x32xbf16, #tpu.memory_space<vmem>>, vector<128x32xbf16>
    %cst_30 = arith.constant 0.000000e+00 : f32
    %70 = arith.truncf %cst_30 : f32 to bf16
    %71 = vector.shape_cast %52 : vector<128x1xi1> to vector<128x1xi1>
    %72 = vector.broadcast %71 : vector<128x1xi1> to vector<128x32xi1>
    %73 = vector.broadcast %70 : bf16 to vector<128x32xbf16>
    %74 = arith.select %72, %69, %73 : vector<128x32xi1>, vector<128x32xbf16>
    %c2 = arith.constant 2 : index
    %c0_31 = arith.constant 0 : index
    %c0_32 = arith.constant 0 : index
    %75 = vector.load %arg6[%c2, %c0_31, %c0_32] : memref<9x32x32xbf16, #tpu.memory_space<vmem>>, vector<1x32x32xbf16>
    %76 = vector.shape_cast %75 : vector<1x32x32xbf16> to vector<32x32xbf16>
    %cst_33 = arith.constant dense<0.000000e+00> : vector<128x32xf32>
    %77 = tpu.matmul %74, %76, %cst_33 {dimension_numbers = #tpu.dot_dimension_numbers<[1], [0], [0], [1], [0, 0, 1, 1], [], []>} : vector<128x32xbf16>, vector<32x32xbf16>, vector<128x32xf32> -> vector<128x32xf32>
    %78 = arith.addf %68, %77 : vector<128x32xf32>
    %c23 = arith.constant 23 : index
    %c0_34 = arith.constant 0 : index
    %79 = vector.load %arg11[%c23, %c0_34] : memref<176x32xbf16, #tpu.memory_space<vmem>>, vector<128x32xbf16>
    %cst_35 = arith.constant 0.000000e+00 : f32
    %80 = arith.truncf %cst_35 : f32 to bf16
    %81 = vector.shape_cast %50 : vector<128x1xi1> to vector<128x1xi1>
    %82 = vector.broadcast %81 : vector<128x1xi1> to vector<128x32xi1>
    %83 = vector.broadcast %80 : bf16 to vector<128x32xbf16>
    %84 = arith.select %82, %79, %83 : vector<128x32xi1>, vector<128x32xbf16>
    %c3 = arith.constant 3 : index
    %c0_36 = arith.constant 0 : index
    %c0_37 = arith.constant 0 : index
    %85 = vector.load %arg6[%c3, %c0_36, %c0_37] : memref<9x32x32xbf16, #tpu.memory_space<vmem>>, vector<1x32x32xbf16>
    %86 = vector.shape_cast %85 : vector<1x32x32xbf16> to vector<32x32xbf16>
    %cst_38 = arith.constant dense<0.000000e+00> : vector<128x32xf32>
    %87 = tpu.matmul %84, %86, %cst_38 {dimension_numbers = #tpu.dot_dimension_numbers<[1], [0], [0], [1], [0, 0, 1, 1], [], []>} : vector<128x32xbf16>, vector<32x32xbf16>, vector<128x32xf32> -> vector<128x32xf32>
    %88 = arith.addf %78, %87 : vector<128x32xf32>
    %c24 = arith.constant 24 : index
    %c0_39 = arith.constant 0 : index
    %89 = vector.load %arg11[%c24, %c0_39] : memref<176x32xbf16, #tpu.memory_space<vmem>>, vector<128x32xbf16>
    %c4 = arith.constant 4 : index
    %c0_40 = arith.constant 0 : index
    %c0_41 = arith.constant 0 : index
    %90 = vector.load %arg6[%c4, %c0_40, %c0_41] : memref<9x32x32xbf16, #tpu.memory_space<vmem>>, vector<1x32x32xbf16>
    %91 = vector.shape_cast %90 : vector<1x32x32xbf16> to vector<32x32xbf16>
    %cst_42 = arith.constant dense<0.000000e+00> : vector<128x32xf32>
    %92 = tpu.matmul %89, %91, %cst_42 {dimension_numbers = #tpu.dot_dimension_numbers<[1], [0], [0], [1], [0, 0, 1, 1], [], []>} : vector<128x32xbf16>, vector<32x32xbf16>, vector<128x32xf32> -> vector<128x32xf32>
    %93 = arith.addf %88, %92 : vector<128x32xf32>
    %c25 = arith.constant 25 : index
    %c0_43 = arith.constant 0 : index
    %94 = vector.load %arg11[%c25, %c0_43] : memref<176x32xbf16, #tpu.memory_space<vmem>>, vector<128x32xbf16>
    %cst_44 = arith.constant 0.000000e+00 : f32
    %95 = arith.truncf %cst_44 : f32 to bf16
    %96 = vector.shape_cast %52 : vector<128x1xi1> to vector<128x1xi1>
    %97 = vector.broadcast %96 : vector<128x1xi1> to vector<128x32xi1>
    %98 = vector.broadcast %95 : bf16 to vector<128x32xbf16>
    %99 = arith.select %97, %94, %98 : vector<128x32xi1>, vector<128x32xbf16>
    %c5 = arith.constant 5 : index
    %c0_45 = arith.constant 0 : index
    %c0_46 = arith.constant 0 : index
    %100 = vector.load %arg6[%c5, %c0_45, %c0_46] : memref<9x32x32xbf16, #tpu.memory_space<vmem>>, vector<1x32x32xbf16>
    %101 = vector.shape_cast %100 : vector<1x32x32xbf16> to vector<32x32xbf16>
    %cst_47 = arith.constant dense<0.000000e+00> : vector<128x32xf32>
    %102 = tpu.matmul %99, %101, %cst_47 {dimension_numbers = #tpu.dot_dimension_numbers<[1], [0], [0], [1], [0, 0, 1, 1], [], []>} : vector<128x32xbf16>, vector<32x32xbf16>, vector<128x32xf32> -> vector<128x32xf32>
    %103 = arith.addf %93, %102 : vector<128x32xf32>
    %c39 = arith.constant 39 : index
    %c0_48 = arith.constant 0 : index
    %104 = vector.load %arg11[%c39, %c0_48] : memref<176x32xbf16, #tpu.memory_space<vmem>>, vector<128x32xbf16>
    %cst_49 = arith.constant 0.000000e+00 : f32
    %105 = arith.truncf %cst_49 : f32 to bf16
    %106 = vector.shape_cast %50 : vector<128x1xi1> to vector<128x1xi1>
    %107 = vector.broadcast %106 : vector<128x1xi1> to vector<128x32xi1>
    %108 = vector.broadcast %105 : bf16 to vector<128x32xbf16>
    %109 = arith.select %107, %104, %108 : vector<128x32xi1>, vector<128x32xbf16>
    %c6 = arith.constant 6 : index
    %c0_50 = arith.constant 0 : index
    %c0_51 = arith.constant 0 : index
    %110 = vector.load %arg6[%c6, %c0_50, %c0_51] : memref<9x32x32xbf16, #tpu.memory_space<vmem>>, vector<1x32x32xbf16>
    %111 = vector.shape_cast %110 : vector<1x32x32xbf16> to vector<32x32xbf16>
    %cst_52 = arith.constant dense<0.000000e+00> : vector<128x32xf32>
    %112 = tpu.matmul %109, %111, %cst_52 {dimension_numbers = #tpu.dot_dimension_numbers<[1], [0], [0], [1], [0, 0, 1, 1], [], []>} : vector<128x32xbf16>, vector<32x32xbf16>, vector<128x32xf32> -> vector<128x32xf32>
    %113 = arith.addf %103, %112 : vector<128x32xf32>
    %c40 = arith.constant 40 : index
    %c0_53 = arith.constant 0 : index
    %114 = vector.load %arg11[%c40, %c0_53] : memref<176x32xbf16, #tpu.memory_space<vmem>>, vector<128x32xbf16>
    %c7_54 = arith.constant 7 : index
    %c0_55 = arith.constant 0 : index
    %c0_56 = arith.constant 0 : index
    %115 = vector.load %arg6[%c7_54, %c0_55, %c0_56] : memref<9x32x32xbf16, #tpu.memory_space<vmem>>, vector<1x32x32xbf16>
    %116 = vector.shape_cast %115 : vector<1x32x32xbf16> to vector<32x32xbf16>
    %cst_57 = arith.constant dense<0.000000e+00> : vector<128x32xf32>
    %117 = tpu.matmul %114, %116, %cst_57 {dimension_numbers = #tpu.dot_dimension_numbers<[1], [0], [0], [1], [0, 0, 1, 1], [], []>} : vector<128x32xbf16>, vector<32x32xbf16>, vector<128x32xf32> -> vector<128x32xf32>
    %118 = arith.addf %113, %117 : vector<128x32xf32>
    %c41 = arith.constant 41 : index
    %c0_58 = arith.constant 0 : index
    %119 = vector.load %arg11[%c41, %c0_58] : memref<176x32xbf16, #tpu.memory_space<vmem>>, vector<128x32xbf16>
    %cst_59 = arith.constant 0.000000e+00 : f32
    %120 = arith.truncf %cst_59 : f32 to bf16
    %121 = vector.shape_cast %52 : vector<128x1xi1> to vector<128x1xi1>
    %122 = vector.broadcast %121 : vector<128x1xi1> to vector<128x32xi1>
    %123 = vector.broadcast %120 : bf16 to vector<128x32xbf16>
    %124 = arith.select %122, %119, %123 : vector<128x32xi1>, vector<128x32xbf16>
    %c8_60 = arith.constant 8 : index
    %c0_61 = arith.constant 0 : index
    %c0_62 = arith.constant 0 : index
    %125 = vector.load %arg6[%c8_60, %c0_61, %c0_62] : memref<9x32x32xbf16, #tpu.memory_space<vmem>>, vector<1x32x32xbf16>
    %126 = vector.shape_cast %125 : vector<1x32x32xbf16> to vector<32x32xbf16>
    %cst_63 = arith.constant dense<0.000000e+00> : vector<128x32xf32>
    %127 = tpu.matmul %124, %126, %cst_63 {dimension_numbers = #tpu.dot_dimension_numbers<[1], [0], [0], [1], [0, 0, 1, 1], [], []>} : vector<128x32xbf16>, vector<32x32xbf16>, vector<128x32xf32> -> vector<128x32xf32>
    %128 = arith.addf %118, %127 : vector<128x32xf32>
    %c0_64 = arith.constant 0 : index
    %c0_65 = arith.constant 0 : index
    %129 = vector.load %arg7[%c0_64, %c0_65] : memref<1x32xf32, #tpu.memory_space<vmem>>, vector<1x32xf32>
    %130 = vector.broadcast %129 : vector<1x32xf32> to vector<128x32xf32>
    %131 = arith.addf %128, %130 : vector<128x32xf32>
    %cst_66 = arith.constant 0.000000e+00 : f32
    %132 = vector.broadcast %cst_66 : f32 to vector<128x32xf32>
    %133 = arith.maximumf %131, %132 : vector<128x32xf32>
    %134 = arith.truncf %133 : vector<128x32xf32> to vector<128x32xbf16>
    %c0_67 = arith.constant 0 : index
    %c0_68 = arith.constant 0 : index
    %135 = vector.load %arg8[%c0_67, %c0_68] : memref<32x128xbf16, #tpu.memory_space<vmem>>, vector<32x128xbf16>
    %cst_69 = arith.constant dense<0.000000e+00> : vector<128x128xf32>
    %136 = tpu.matmul %134, %135, %cst_69 {dimension_numbers = #tpu.dot_dimension_numbers<[1], [0], [0], [1], [0, 0, 1, 1], [], []>} : vector<128x32xbf16>, vector<32x128xbf16>, vector<128x128xf32> -> vector<128x128xf32>
    %c0_70 = arith.constant 0 : index
    %c0_71 = arith.constant 0 : index
    %137 = vector.load %arg9[%c0_70, %c0_71] : memref<1x128xf32, #tpu.memory_space<vmem>>, vector<1x128xf32>
    %138 = vector.broadcast %137 : vector<1x128xf32> to vector<128x128xf32>
    %139 = arith.addf %136, %138 : vector<128x128xf32>
    %c0_72 = arith.constant 0 : index
    %c0_73 = arith.constant 0 : index
    %c0_74 = arith.constant 0 : index
    %140 = vector.load %arg3[%c0_72, %c0_73, %c0_74] : memref<1x128x128xf32, #tpu.memory_space<vmem>>, vector<1x128x128xf32>
    %141 = vector.shape_cast %140 : vector<1x128x128xf32> to vector<128x128xf32>
    %142 = arith.addf %139, %141 : vector<128x128xf32>
    %cst_75 = arith.constant 0.000000e+00 : f32
    %143 = vector.broadcast %cst_75 : f32 to vector<128x128xf32>
    %144 = arith.maximumf %142, %143 : vector<128x128xf32>
    %c0_76 = arith.constant 0 : index
    %c0_77 = arith.constant 0 : index
    %c0_78 = arith.constant 0 : index
    %145 = vector.load %arg10[%c0_76, %c0_77, %c0_78] : memref<1x128x128xf32, #tpu.memory_space<vmem>>, vector<1x128x128xf32>
    %146 = vector.shape_cast %145 : vector<1x128x128xf32> to vector<128x128xf32>
    %147 = vector.shape_cast %144 : vector<128x128xf32> to vector<1x128x128xf32>
    tpu.vector_store %arg10[%c0_76, %c0_77, %c0_78], %147 {strides = array<i32>} : memref<1x128x128xf32, #tpu.memory_space<vmem>>, vector<1x128x128xf32>,
    return
  }
  func.func @transform_0(%arg0: i32, %arg1: i32) -> (i32, i32, i32) {
    %c0_i32 = arith.constant 0 : i32
    %c0_i32_0 = arith.constant 0 : i32
    %c0_i32_1 = arith.constant 0 : i32
    return %arg0, %c0_i32, %c0_i32_0 : i32, i32, i32
  }
  func.func @transform_1(%arg0: i32, %arg1: i32) -> (i32, i32, i32) {
    %c0_i32 = arith.constant 0 : i32
    %c0_i32_0 = arith.constant 0 : i32
    return %arg0, %arg1, %c0_i32 : i32, i32, i32
  }
  func.func @transform_2(%arg0: i32, %arg1: i32) -> (i32, i32) {
    %c0_i32 = arith.constant 0 : i32
    %c0_i32_0 = arith.constant 0 : i32
    %c0_i32_1 = arith.constant 0 : i32
    return %c0_i32, %c0_i32_0 : i32, i32
  }
  func.func @transform_3(%arg0: i32, %arg1: i32) -> (i32, i32) {
    %c0_i32 = arith.constant 0 : i32
    %c0_i32_0 = arith.constant 0 : i32
    %c0_i32_1 = arith.constant 0 : i32
    return %c0_i32, %c0_i32_0 : i32, i32
  }
  func.func @transform_4(%arg0: i32, %arg1: i32) -> (i32, i32, i32) {
    %c0_i32 = arith.constant 0 : i32
    %c0_i32_0 = arith.constant 0 : i32
    %c0_i32_1 = arith.constant 0 : i32
    %c0_i32_2 = arith.constant 0 : i32
    return %c0_i32, %c0_i32_0, %c0_i32_1 : i32, i32, i32
  }
  func.func @transform_5(%arg0: i32, %arg1: i32) -> (i32, i32) {
    %c0_i32 = arith.constant 0 : i32
    %c0_i32_0 = arith.constant 0 : i32
    %c0_i32_1 = arith.constant 0 : i32
    return %c0_i32, %c0_i32_0 : i32, i32
  }
  func.func @transform_6(%arg0: i32, %arg1: i32) -> (i32, i32) {
    %c0_i32 = arith.constant 0 : i32
    %c0_i32_0 = arith.constant 0 : i32
    %c0_i32_1 = arith.constant 0 : i32
    return %c0_i32, %c0_i32_0 : i32, i32
  }
  func.func @transform_7(%arg0: i32, %arg1: i32) -> (i32, i32) {
    %c0_i32 = arith.constant 0 : i32
    %c0_i32_0 = arith.constant 0 : i32
    %c0_i32_1 = arith.constant 0 : i32
    return %c0_i32, %c0_i32_0 : i32, i32
  }
  func.func @transform_8(%arg0: i32, %arg1: i32) -> (i32, i32, i32) {
    %c0_i32 = arith.constant 0 : i32
    %c0_i32_0 = arith.constant 0 : i32
    return %arg0, %arg1, %c0_i32 : i32, i32, i32
  }
}

</mosaic_0001>

<llo_original>
// kernel: tpu_custom_call.1
$region0: #{tpu_custom_call.1}
  #allocation0 [shape = 'u32[]', space=smem, size = 0x4, offset = 0x4, fixed_abs, tag = 'smem constant byte address 0x4 - core index']
  #allocation1 [shape = 'u32[72,128]{1,0:T(1,128)}', space=vmem, size = 0x9000, scoped, tag = 'internal scratch']
  #allocation2 [shape = 'bf16[176,32]{1,0:T(8,128)(2,1)}', space=vmem, size = 0xb000, scoped, tag = 'scratch operand']
  %s0 = inlined_call_operand.hbm [shape: bf16[2,288,128], index: 0, kind: input, shape index: {}]
  %s1 = inlined_call_operand.hbm [shape: f32[2,256,128], index: 1, kind: input, shape index: {}]
  %s2 = inlined_call_operand.vmem [shape: bf16[128,32], index: 2, kind: input, shape index: {}]
  %s3 = inlined_call_operand.vmem [shape: f32[1,32], index: 3, kind: input, shape index: {}]
  %s4 = inlined_call_operand.hbm [shape: bf16[9,32,32], index: 4, kind: input, shape index: {}]
  %s5 = inlined_call_operand.vmem [shape: f32[1,32], index: 5, kind: input, shape index: {}]
  %s6 = inlined_call_operand.vmem [shape: bf16[32,128], index: 6, kind: input, shape index: {}]
  %s7 = inlined_call_operand.vmem [shape: f32[1,128], index: 7, kind: input, shape index: {}]
  %s8 = inlined_call_operand.hbm [shape: f32[2,256,128], index: 8, kind: output, shape index: {}]
  %s9 = sld [smem:[#allocation0]]
  $region77: #{tpu_custom_call.1} parent=0
    _
  %s11 = ssub.s32 1, %s9
  %s12 = scalar_select 0, %s11, %s9
  $region1: #{tpu_custom_call.1} parent=0
    #allocation3 [shape = 'u8[147456]{0}', space=vmem, size = 0x24000, scoped, tag = 'input window, operand 0']
    #allocation4 [shape = 's32[2]{0}', space=sflag, size = 0x8, scoped, tag = 'scoped memory for tpu_custom_call.1']
    #allocation5 [shape = 's32[2]{0}', space=sflag, size = 0x8, scoped, tag = 'scoped memory for tpu_custom_call.1']
    #allocation6 [shape = 'u8[131072]{0}', space=vmem, size = 0x20000, scoped, tag = 'input window, operand 1']
    #allocation7 [shape = 's32[2]{0}', space=sflag, size = 0x8, scoped, tag = 'scoped memory for tpu_custom_call.1']
    #allocation8 [shape = 'u8[73728]{0}', space=vmem, size = 0x12000, scoped, tag = 'input window, operand 4, single buffered']
    #allocation9 [shape = 'u8[131072]{0}', space=vmem, size = 0x20000, scoped, tag = 'output window, operand 0']
    %13 = vsyncpa [#allocation4], 0
    %s14 = scalar_lea.sflag [#allocation4], 1
    %15 = vsyncpa %s14, 0
    %16 = vsyncpa [#allocation7], 0
    %s17 = scalar_lea.sflag [#allocation7], 1
    %18 = vsyncpa %s17, 0
    %19 = vsyncpa [#allocation5], 0
    %s20 = scalar_lea.sflag [#allocation5], 1
    %21 = vsyncpa %s20, 0
    loop: start=0, step=1, limit=6
    $region2: #{tpu_custom_call.1} parent=1 // loop_pre_header
      _
    $region3: #{tpu_custom_call.1} parent=1 // loop_header
      %s23 = sphi 0, %s27
      %p24 = scmp.ge.s32.totalorder %s23, 6
      %s30 = sphi 0, %s42
      %s31 = sphi 0, %s38
      %s32 = sphi 0, %s30
      %s33 = sphi 0, %s31
      %s34 = sphi 0, %s32
      %s35 = sphi 0, %s33
      %s45 = sphi 0, %s47
      %s48 = sphi 0, %s45
      %s49 = sphi 0, %s48
      %s65 = sphi 0, %s49
      %s73 = sphi 0, %s75
      %s76 = sphi 0, %s73
      %s77 = sphi 0, %s76
      %s93 = sphi 0, %s77
      %s97 = sphi 0, %s97
      %s99 = sphi 0, %s97
      %s100 = sphi 0, %s99
      %s114 = sphi 0, %s100
      %s118 = sphi 0, %s118
      %s120 = sphi 0, %s118
      %s121 = sphi 0, %s120
      %s135 = sphi 0, %s121
      %s139 = sphi 0, %s139
      %s141 = sphi 0, %s139
      %s142 = sphi 0, %s141
      %s156 = sphi 0, %s142
      %s160 = sphi 0, %s160
      %s162 = sphi 0, %s160
      %s163 = sphi 0, %s162
      %s177 = sphi 0, %s163
      %s181 = sphi 0, %s181
      %s183 = sphi 0, %s181
      %s184 = sphi 0, %s183
      %s198 = sphi 0, %s184
      %s202 = sphi 0, %s202
      %s204 = sphi 0, %s202
      %s205 = sphi 0, %s204
      %s219 = sphi 0, %s205
      %s227 = sphi 0, %s229
      %s230 = sphi 0, %s227
      %s231 = sphi 0, %s230
      %s247 = sphi 0, %s231
    $region4: #{tpu_custom_call.1} parent=1 // loop_header_branch
      %26 = sbr.rel (%p24) target = $region8
    $region5: #{tpu_custom_call.1} parent=1 // loop_body
      %s28 = ssub.s32 %s23, 1
      %s29 = ssub.s32 %s23, 2
      %s36 = sadd.s32 1, %s31
      %p37 = scmp.ge.s32.totalorder %s36, 2
      %s38 = scalar_select %p37, 0, %s36
      %s39 = sadd.s32 1, %s30
      %s40 = scalar_select %p37, %s39, %s30
      %p41 = scmp.ge.s32.totalorder %s40, 2
      %s42 = scalar_select %p41, 0, %s40
      %s43 = ssub.s32 %s30, %s42
      %p44 = scmp.eq.s32.totalorder %s43, 0
      %s46 = sadd.s32 %s45, 1
      %s47 = scalar_select %p44, %s45, %s46
      %p50 = pneg %p44
      %p51 = scmp.eq.s32.totalorder %s23, 3
      %p52 = por %p50, %p51
      %p53 = scmp.ne.s32.totalorder %s45, %s48
      %p54 = scmp.eq.s32.totalorder %s23, 0
      %p55 = por %p53, %p54
      %p56 = scmp.ne.s32.totalorder %s45, %s48
      %p57 = scmp.eq.s32.totalorder %s28, 3
      %p58 = por %p56, %p57
      %p59 = scmp.ne.s32.totalorder %s48, %s49
      %p60 = scmp.eq.s32.totalorder %s28, 0
      %p61 = por %p59, %p60
      %p62 = scmp.ne.s32.totalorder %s48, %s49
      %p63 = scmp.eq.s32.totalorder %s29, 3
      %p64 = por %p62, %p63
      %p66 = scmp.ne.s32.totalorder %s49, %s65
      %p67 = scmp.eq.s32.totalorder %s29, 0
      %p68 = por %p66, %p67
      %s69 = ssub.s32 %s30, %s42
      %s70 = ssub.s32 %s31, %s38
      %s71 = sor.u32 %s69, %s70
      %p72 = scmp.eq.s32.totalorder %s71, 0
      %s74 = sadd.s32 %s73, 1
      %s75 = scalar_select %p72, %s73, %s74
      %p78 = pneg %p72
      %p79 = scmp.eq.s32.totalorder %s23, 3
      %p80 = por %p78, %p79
      %p81 = scmp.ne.s32.totalorder %s73, %s76
      %p82 = scmp.eq.s32.totalorder %s23, 0
      %p83 = por %p81, %p82
      %p84 = scmp.ne.s32.totalorder %s73, %s76
      %p85 = scmp.eq.s32.totalorder %s28, 3
      %p86 = por %p84, %p85
      %p87 = scmp.ne.s32.totalorder %s76, %s77
      %p88 = scmp.eq.s32.totalorder %s28, 0
      %p89 = por %p87, %p88
      %p90 = scmp.ne.s32.totalorder %s76, %s77
      %p91 = scmp.eq.s32.totalorder %s29, 3
      %p92 = por %p90, %p91
      %p94 = scmp.ne.s32.totalorder %s77, %s93
      %p95 = scmp.eq.s32.totalorder %s29, 0
      %p96 = por %p94, %p95
      %s98 = sadd.s32 %s97, 1
      %p101 = scmp.eq.s32.totalorder %s23, 3
      %p102 = scmp.ne.s32.totalorder %s97, %s99
      %p103 = scmp.eq.s32.totalorder %s23, 0
      %p104 = por %p102, %p103
      %p105 = scmp.ne.s32.totalorder %s97, %s99
      %p106 = scmp.eq.s32.totalorder %s28, 3
      %p107 = por %p105, %p106
      %p108 = scmp.ne.s32.totalorder %s99, %s100
      %p109 = scmp.eq.s32.totalorder %s28, 0
      %p110 = por %p108, %p109
      %p111 = scmp.ne.s32.totalorder %s99, %s100
      %p112 = scmp.eq.s32.totalorder %s29, 3
      %p113 = por %p111, %p112
      %p115 = scmp.ne.s32.totalorder %s100, %s114
      %p116 = scmp.eq.s32.totalorder %s29, 0
      %p117 = por %p115, %p116
      %s119 = sadd.s32 %s118, 1
      %p122 = scmp.eq.s32.totalorder %s23, 3
      %p123 = scmp.ne.s32.totalorder %s118, %s120
      %p124 = scmp.eq.s32.totalorder %s23, 0
      %p125 = por %p123, %p124
      %p126 = scmp.ne.s32.totalorder %s118, %s120
      %p127 = scmp.eq.s32.totalorder %s28, 3
      %p128 = por %p126, %p127
      %p129 = scmp.ne.s32.totalorder %s120, %s121
      %p130 = scmp.eq.s32.totalorder %s28, 0
      %p131 = por %p129, %p130
      %p132 = scmp.ne.s32.totalorder %s120, %s121
      %p133 = scmp.eq.s32.totalorder %s29, 3
      %p134 = por %p132, %p133
      %p136 = scmp.ne.s32.totalorder %s121, %s135
      %p137 = scmp.eq.s32.totalorder %s29, 0
      %p138 = por %p136, %p137
      %s140 = sadd.s32 %s139, 1
      %p143 = scmp.eq.s32.totalorder %s23, 3
      %p144 = scmp.ne.s32.totalorder %s139, %s141
      %p145 = scmp.eq.s32.totalorder %s23, 0
      %p146 = por %p144, %p145
      %p147 = scmp.ne.s32.totalorder %s139, %s141
      %p148 = scmp.eq.s32.totalorder %s28, 3
      %p149 = por %p147, %p148
      %p150 = scmp.ne.s32.totalorder %s141, %s142
      %p151 = scmp.eq.s32.totalorder %s28, 0
      %p152 = por %p150, %p151
      %p153 = scmp.ne.s32.totalorder %s141, %s142
      %p154 = scmp.eq.s32.totalorder %s29, 3
      %p155 = por %p153, %p154
      %p157 = scmp.ne.s32.totalorder %s142, %s156
      %p158 = scmp.eq.s32.totalorder %s29, 0
      %p159 = por %p157, %p158
      %s161 = sadd.s32 %s160, 1
      %p164 = scmp.eq.s32.totalorder %s23, 3
      %p165 = scmp.ne.s32.totalorder %s160, %s162
      %p166 = scmp.eq.s32.totalorder %s23, 0
      %p167 = por %p165, %p166
      %p168 = scmp.ne.s32.totalorder %s160, %s162
      %p169 = scmp.eq.s32.totalorder %s28, 3
      %p170 = por %p168, %p169
      %p171 = scmp.ne.s32.totalorder %s162, %s163
      %p172 = scmp.eq.s32.totalorder %s28, 0
      %p173 = por %p171, %p172
      %p174 = scmp.ne.s32.totalorder %s162, %s163
      %p175 = scmp.eq.s32.totalorder %s29, 3
      %p176 = por %p174, %p175
      %p178 = scmp.ne.s32.totalorder %s163, %s177
      %p179 = scmp.eq.s32.totalorder %s29, 0
      %p180 = por %p178, %p179
      %s182 = sadd.s32 %s181, 1
      %p185 = scmp.eq.s32.totalorder %s23, 3
      %p186 = scmp.ne.s32.totalorder %s181, %s183
      %p187 = scmp.eq.s32.totalorder %s23, 0
      %p188 = por %p186, %p187
      %p189 = scmp.ne.s32.totalorder %s181, %s183
      %p190 = scmp.eq.s32.totalorder %s28, 3
      %p191 = por %p189, %p190
      %p192 = scmp.ne.s32.totalorder %s183, %s184
      %p193 = scmp.eq.s32.totalorder %s28, 0
      %p194 = por %p192, %p193
      %p195 = scmp.ne.s32.totalorder %s183, %s184
      %p196 = scmp.eq.s32.totalorder %s29, 3
      %p197 = por %p195, %p196
      %p199 = scmp.ne.s32.totalorder %s184, %s198
      %p200 = scmp.eq.s32.totalorder %s29, 0
      %p201 = por %p199, %p200
      %s203 = sadd.s32 %s202, 1
      %p206 = scmp.eq.s32.totalorder %s23, 3
      %p207 = scmp.ne.s32.totalorder %s202, %s204
      %p208 = scmp.eq.s32.totalorder %s23, 0
      %p209 = por %p207, %p208
      %p210 = scmp.ne.s32.totalorder %s202, %s204
      %p211 = scmp.eq.s32.totalorder %s28, 3
      %p212 = por %p210, %p211
      %p213 = scmp.ne.s32.totalorder %s204, %s205
      %p214 = scmp.eq.s32.totalorder %s28, 0
      %p215 = por %p213, %p214
      %p216 = scmp.ne.s32.totalorder %s204, %s205
      %p217 = scmp.eq.s32.totalorder %s29, 3
      %p218 = por %p216, %p217
      %p220 = scmp.ne.s32.totalorder %s205, %s219
      %p221 = scmp.eq.s32.totalorder %s29, 0
      %p222 = por %p220, %p221
      %s223 = ssub.s32 %s30, %s42
      %s224 = ssub.s32 %s31, %s38
      %s225 = sor.u32 %s223, %s224
      %p226 = scmp.eq.s32.totalorder %s225, 0
      %s228 = sadd.s32 %s227, 1
      %s229 = scalar_select %p226, %s227, %s228
      %p232 = pneg %p226
      %p233 = scmp.eq.s32.totalorder %s23, 3
      %p234 = por %p232, %p233
      %p235 = scmp.ne.s32.totalorder %s227, %s230
      %p236 = scmp.eq.s32.totalorder %s23, 0
      %p237 = por %p235, %p236
      %p238 = scmp.ne.s32.totalorder %s227, %s230
      %p239 = scmp.eq.s32.totalorder %s28, 3
      %p240 = por %p238, %p239
      %p241 = scmp.ne.s32.totalorder %s230, %s231
      %p242 = scmp.eq.s32.totalorder %s28, 0
      %p243 = por %p241, %p242
      %p244 = scmp.ne.s32.totalorder %s230, %s231
      %p245 = scmp.eq.s32.totalorder %s29, 3
      %p246 = por %p244, %p245
      %p248 = scmp.ne.s32.totalorder %s231, %s247
      %p249 = scmp.eq.s32.totalorder %s29, 0
      %p250 = por %p248, %p249
      %p251 = scmp.le.s32.totalorder 1, %s23
      %p252 = scmp.lt.s32.totalorder %s23, 5
      %p253 = pnand %p251, %p252
      %p254 = pneg %p253
      // Predicated region
      $region9: #{tpu_custom_call.1} parent=5 // pred_check
        _
      $region10: #{tpu_custom_call.1} parent=5 // pred_check_branch
        %256 = sbr.rel (%p253) target = $region12
      $region11: #{tpu_custom_call.1} parent=5 // pred_region
        %s257 = ssub.s32 %s23, 1
        // Predicated region
        $region13: #{tpu_custom_call.1} parent=11 // pred_check
          %p258 = pneg %p110
        $region14: #{tpu_custom_call.1} parent=11 // pred_check_branch
          %260 = sbr.rel (%p258) target = $region16
        $region15: #{tpu_custom_call.1} parent=11 // pred_region
          _
        $region16: #{tpu_custom_call.1} parent=11 // pred_fallthru
          _
        // Predicated region
        $region17: #{tpu_custom_call.1} parent=11 // pred_check
          %p261 = pneg %p131
        $region18: #{tpu_custom_call.1} parent=11 // pred_check_branch
          %263 = sbr.rel (%p261) target = $region20
        $region19: #{tpu_custom_call.1} parent=11 // pred_region
          _
        $region20: #{tpu_custom_call.1} parent=11 // pred_fallthru
          _
        // Predicated region
        $region21: #{tpu_custom_call.1} parent=11 // pred_check
          %p264 = pneg %p152
        $region22: #{tpu_custom_call.1} parent=11 // pred_check_branch
          %266 = sbr.rel (%p264) target = $region24
        $region23: #{tpu_custom_call.1} parent=11 // pred_region
          %268 = vsyncadd [#allocation7], 0
          %s269 = sshll.u32 %s4, 4
          %s270 = int_to_ptr.hbm [resolvable:$true] %s269
          %s271 = sshll.u32 [#allocation8], 4
          %s272 = int_to_ptr.vmem [resolvable:$true] %s271
          %277 = dma.hbm_to_vmem [thread:$0]  %s270, 2304, %s272, [#allocation7], 64, 64, 4
        $region24: #{tpu_custom_call.1} parent=11 // pred_fallthru
          _
        // Predicated region
        $region25: #{tpu_custom_call.1} parent=11 // pred_check
          %p278 = pneg %p173
        $region26: #{tpu_custom_call.1} parent=11 // pred_check_branch
          %280 = sbr.rel (%p278) target = $region28
        $region27: #{tpu_custom_call.1} parent=11 // pred_region
          _
        $region28: #{tpu_custom_call.1} parent=11 // pred_fallthru
          _
        // Predicated region
        $region29: #{tpu_custom_call.1} parent=11 // pred_check
          %p281 = pneg %p194
        $region30: #{tpu_custom_call.1} parent=11 // pred_check_branch
          %283 = sbr.rel (%p281) target = $region32
        $region31: #{tpu_custom_call.1} parent=11 // pred_region
          _
        $region32: #{tpu_custom_call.1} parent=11 // pred_fallthru
          _
        // Predicated region
        $region33: #{tpu_custom_call.1} parent=11 // pred_check
          %p284 = pneg %p215
        $region34: #{tpu_custom_call.1} parent=11 // pred_check_branch
          %286 = sbr.rel (%p284) target = $region36
        $region35: #{tpu_custom_call.1} parent=11 // pred_region
          _
        $region36: #{tpu_custom_call.1} parent=11 // pred_fallthru
          _
      $region12: #{tpu_custom_call.1} parent=5 // pred_fallthru
        _
      %p287 = scmp.lt.s32.totalorder %s23, 4
      // Predicated region
      $region37: #{tpu_custom_call.1} parent=5 // pred_check
        %p288 = pneg %p287
      $region38: #{tpu_custom_call.1} parent=5 // pred_check_branch
        %290 = sbr.rel (%p288) target = $region40
      $region39: #{tpu_custom_call.1} parent=5 // pred_region
        // Predicated region
        $region41: #{tpu_custom_call.1} parent=39 // pred_check
          %p291 = pneg %p55
        $region42: #{tpu_custom_call.1} parent=39 // pred_check_branch
          %293 = sbr.rel (%p291) target = $region44
        $region43: #{tpu_custom_call.1} parent=39 // pred_region
          %s294 = sand.u32 %s45, 1
          %s295 = scalar_lea.sflag [#allocation4], %s294
          %s296 = sand.u32 %s45, 1
          %s297 = smul.addr %s296, 144
          %s298 = scalar_lea.vmem [#allocation3], %s297
          %300 = vsyncadd %s295, 0
          %s301 = smul.addr %s30, 36
          %s302 = smul.addr %s301, 4
          %s303 = scalar_lea.hbm %s0, %s302
          %s304 = sshll.u32 %s303, 4
          %s305 = int_to_ptr.hbm [resolvable:$true] %s304
          %s306 = sshll.u32 %s298, 4
          %s307 = int_to_ptr.vmem [resolvable:$true] %s306
          %312 = dma.hbm_to_vmem [thread:$0]  %s305, 2304, %s307, %s295, 64, 64, 4
        $region44: #{tpu_custom_call.1} parent=39 // pred_fallthru
          _
        // Predicated region
        $region45: #{tpu_custom_call.1} parent=39 // pred_check
          %p313 = pneg %p83
        $region46: #{tpu_custom_call.1} parent=39 // pred_check_branch
          %315 = sbr.rel (%p313) target = $region48
        $region47: #{tpu_custom_call.1} parent=39 // pred_region
          %s316 = sand.u32 %s23, 1
          %s317 = scalar_lea.sflag [#allocation7], %s316
          %s318 = sand.u32 %s73, 1
          %s319 = smul.addr %s318, 128
          %s320 = scalar_lea.vmem [#allocation6], %s319
          %s321 = smul.u32 16, %s31
          %323 = vsyncadd %s317, 0
          %s324 = smul.addr %s30, 32
          %s325 = sadd.s32 %s321, %s324
          %s326 = smul.addr %s325, 8
          %s327 = scalar_lea.hbm %s1, %s326
          %s328 = sshll.u32 %s327, 4
          %s329 = int_to_ptr.hbm [resolvable:$true] %s328
          %s330 = sshll.u32 %s320, 4
          %s331 = int_to_ptr.vmem [resolvable:$true] %s330
          %336 = dma.hbm_to_vmem [thread:$0]  %s329, 2048, %s331, %s317, 128, 128, 8
        $region48: #{tpu_custom_call.1} parent=39 // pred_fallthru
          _
      $region40: #{tpu_custom_call.1} parent=5 // pred_fallthru
        _
      %p337 = scmp.le.s32.totalorder 1, %s23
      %p338 = scmp.lt.s32.totalorder %s23, 5
      %p339 = pnand %p337, %p338
      %p340 = pneg %p339
      // Predicated region
      $region49: #{tpu_custom_call.1} parent=5 // pred_check
        _
      $region50: #{tpu_custom_call.1} parent=5 // pred_check_branch
        %342 = sbr.rel (%p339) target = $region52
      $region51: #{tpu_custom_call.1} parent=5 // pred_region
        %s343 = ssub.s32 %s23, 1
        %s344 = sand.u32 %s48, 1
        %s345 = scalar_lea.sflag [#allocation4], %s344
        %s346 = sand.u32 %s48, 1
        %s347 = smul.addr %s346, 144
        %s348 = scalar_lea.vmem [#allocation3], %s347
        // Predicated region
        $region53: #{tpu_custom_call.1} parent=51 // pred_check
          %p349 = pneg %p61
        $region54: #{tpu_custom_call.1} parent=51 // pred_check_branch
          %351 = sbr.rel (%p349) target = $region56
        $region55: #{tpu_custom_call.1} parent=51 // pred_region
          %353 = dma.done %s345, 2304
        $region56: #{tpu_custom_call.1} parent=51 // pred_fallthru
          _
        %s354 = sand.u32 %s28, 1
        %s355 = scalar_lea.sflag [#allocation7], %s354
        %s356 = sand.u32 %s76, 1
        %s357 = smul.addr %s356, 128
        %s358 = scalar_lea.vmem [#allocation6], %s357
        // Predicated region
        $region57: #{tpu_custom_call.1} parent=51 // pred_check
          %p359 = pneg %p89
        $region58: #{tpu_custom_call.1} parent=51 // pred_check_branch
          %361 = sbr.rel (%p359) target = $region60
        $region59: #{tpu_custom_call.1} parent=51 // pred_region
          %363 = dma.done %s355, 2048
        $region60: #{tpu_custom_call.1} parent=51 // pred_fallthru
          _
        // Predicated region
        $region61: #{tpu_custom_call.1} parent=51 // pred_check
          %p364 = pneg %p152
        $region62: #{tpu_custom_call.1} parent=51 // pred_check_branch
          %366 = sbr.rel (%p364) target = $region64
        $region63: #{tpu_custom_call.1} parent=51 // pred_region
          %368 = dma.done [#allocation7], 2304
        $region64: #{tpu_custom_call.1} parent=51 // pred_fallthru
          _
        %s369 = sand.u32 %s48, 1
        %s370 = scalar_lea.sflag [#allocation4], %s369
        %s371 = sand.u32 %s48, 1
        %s372 = smul.addr %s371, 144
        %s373 = scalar_lea.vmem [#allocation3], %s372
        %p374 = pneg %p61
        %p375 = pneg %p58
        %s376 = sand.u32 %s28, 1
        %s377 = scalar_lea.sflag [#allocation7], %s376
        %s378 = sand.u32 %s76, 1
        %s379 = smul.addr %s378, 128
        %s380 = scalar_lea.vmem [#allocation6], %s379
        %p381 = pneg %p89
        %p382 = pneg %p86
        %p383 = pneg %p110
        %p384 = pneg %p107
        %p385 = pneg %p131
        %p386 = pneg %p128
        %p387 = pneg %p152
        %p388 = pneg %p149
        %p389 = pneg %p173
        %p390 = pneg %p170
        %p391 = pneg %p194
        %p392 = pneg %p191
        %p393 = pneg %p215
        %p394 = pneg %p212
        %p395 = pneg %p243
        %p396 = pneg %p240
        %s397 = sand.u32 %s230, 1
        %s398 = scalar_lea.sflag [#allocation5], %s397
        %s399 = sand.u32 %s230, 1
        %s400 = smul.addr %s399, 128
        %s401 = scalar_lea.vmem [#allocation9], %s400
        %s402 = smul.u32 16, %s33
        %s403 = smul.u32 16, %s33
        %s407 = smul.u32 %s33, 8
        %s408 = smul.u32 %s33, 128
        %s409 = sshra.s32 %s408, 3
        %s410 = sand.u32 %s408, 7
        %s411 = smul.addr %s409, 4
        %s412 = scalar_lea.vmem %s348, %s411 [#allocation3]
        %v413 = vld [vmem:[%s412] sm:$0xf]
        %v414 = vld [vmem:[%s412 + $0x4] sm:$0xf]
        %v415 = vld [vmem:[%s412 + $0x8] sm:$0xf]
        %v416 = vld [vmem:[%s412 + $0xc] sm:$0xf]
        %v417 = vld [vmem:[%s412 + $0x10] sm:$0xf]
        %v418 = vld [vmem:[%s412 + $0x14] sm:$0xf]
        %v419 = vld [vmem:[%s412 + $0x18] sm:$0xf]
        %v420 = vld [vmem:[%s412 + $0x1c] sm:$0xf]
        %v421 = vld [vmem:[%s412 + $0x20] sm:$0xf]
        %v422 = vld [vmem:[%s412 + $0x24] sm:$0xf]
        %v423 = vld [vmem:[%s412 + $0x28] sm:$0xf]
        %v424 = vld [vmem:[%s412 + $0x2c] sm:$0xf]
        %v425 = vld [vmem:[%s412 + $0x30] sm:$0xf]
        %v426 = vld [vmem:[%s412 + $0x34] sm:$0xf]
        %v427 = vld [vmem:[%s412 + $0x38] sm:$0xf]
        %v428 = vld [vmem:[%s412 + $0x3c] sm:$0xf]
        %v429 = vld [vmem:[%s412 + $0x40] sm:$0xf]
        %v430 = vld [vmem:[%s412 + $0x44] sm:$0xf]
        %v431 = vld [vmem:[%s412 + $0x48] sm:$0xf]
        %v432 = vld [vmem:[%s412 + $0x4c] sm:$0xf]
        %v433 = vld [vmem:[%s2] sm:$0xf]
        %v434 = vld [vmem:[%s2 + $0x4] sm:$0xf]
        %v435 = vld [vmem:[%s2 + $0x8] sm:$0xf]
        %v436 = vld [vmem:[%s2 + $0xc] sm:$0xf]
        %v437 = vld [vmem:[%s2 + $0x10] sm:$0xf]
        %v438 = vld [vmem:[%s2 + $0x14] sm:$0xf]
        %v439 = vld [vmem:[%s2 + $0x18] sm:$0xf]
        %v440 = vld [vmem:[%s2 + $0x1c] sm:$0xf]
        %v441 = vld [vmem:[%s2 + $0x20] sm:$0xf]
        %v442 = vld [vmem:[%s2 + $0x24] sm:$0xf]
        %v443 = vld [vmem:[%s2 + $0x28] sm:$0xf]
        %v444 = vld [vmem:[%s2 + $0x2c] sm:$0xf]
        %v445 = vld [vmem:[%s2 + $0x30] sm:$0xf]
        %v446 = vld [vmem:[%s2 + $0x34] sm:$0xf]
        %v447 = vld [vmem:[%s2 + $0x38] sm:$0xf]
        %v448 = vld [vmem:[%s2 + $0x3c] sm:$0xf]
        %v449 = vld [vmem:[%s3] sm:$0x1]
        %v451 = vperm.slane %v449, 0
        %v473 = vunpack.c.l.b16 %v413
        %v474 = vunpack.c.l.b16 %v414
        %v475 = vunpack.c.l.b16 %v415
        %v476 = vunpack.c.l.b16 %v416
        %v477 = vunpack.c.l.b16 %v417
        %v478 = vunpack.c.l.b16 %v418
        %v479 = vunpack.c.l.b16 %v419
        %v480 = vunpack.c.l.b16 %v420
        %v481 = vunpack.c.l.b16 %v421
        %v482 = vunpack.c.l.b16 %v422
        %v483 = vunpack.c.l.b16 %v423
        %v484 = vunpack.c.l.b16 %v424
        %v485 = vunpack.c.l.b16 %v425
        %v486 = vunpack.c.l.b16 %v426
        %v487 = vunpack.c.l.b16 %v427
        %v488 = vunpack.c.l.b16 %v428
        %v489 = vunpack.c.l.b16 %v429
        %v490 = vunpack.c.l.b16 %v430
        %v491 = vunpack.c.l.b16 %v431
        %v492 = vunpack.c.l.b16 %v432
        %v493 = vpack.c.b16 %v474, %v473
        %v494 = vpack.c.b16 %v476, %v475
        %v495 = vpack.c.b16 %v478, %v477
        %v496 = vpack.c.b16 %v480, %v479
        %v497 = vpack.c.b16 %v482, %v481
        %v498 = vpack.c.b16 %v484, %v483
        %v499 = vpack.c.b16 %v486, %v485
        %v500 = vpack.c.b16 %v488, %v487
        %v501 = vpack.c.b16 %v490, %v489
        %v502 = vpack.c.b16 %v492, %v491
        %v529 = vunpack.c.l.b16 %v433
        %v530 = vunpack.c.l.b16 %v434
        %v531 = vunpack.c.l.b16 %v435
        %v532 = vunpack.c.l.b16 %v436
        %v533 = vunpack.c.l.b16 %v437
        %v534 = vunpack.c.l.b16 %v438
        %v535 = vunpack.c.l.b16 %v439
        %v536 = vunpack.c.l.b16 %v440
        %v537 = vunpack.c.l.b16 %v441
        %v538 = vunpack.c.l.b16 %v442
        %v539 = vunpack.c.l.b16 %v443
        %v540 = vunpack.c.l.b16 %v444
        %v541 = vunpack.c.l.b16 %v445
        %v542 = vunpack.c.l.b16 %v446
        %v543 = vunpack.c.l.b16 %v447
        %v544 = vunpack.c.l.b16 %v448
        %v545 = vpack.c.b16 %v530, %v529
        %v546 = vpack.c.b16 %v532, %v531
        %v547 = vpack.c.b16 %v534, %v533
        %v548 = vpack.c.b16 %v536, %v535
        %v549 = vpack.c.b16 %v538, %v537
        %v550 = vpack.c.b16 %v540, %v539
        %v551 = vpack.c.b16 %v542, %v541
        %v552 = vpack.c.b16 %v544, %v543
        %561 = vmatpush.bf16.msra.mxu0 %v552
        %562 = vmatpush.bf16.msra.mxu0 %v551
        %563 = vmatpush.bf16.msra.mxu0 %v550
        %564 = vmatpush.bf16.msra.mxu0 %v549
        %565 = vmatpush.bf16.msra.mxu0 %v548
        %566 = vmatpush.bf16.msra.mxu0 %v547
        %567 = vmatpush.bf16.msra.mxu0 %v546
        %568 = vmatpush.bf16.msra.mxu0 %v545
        %569 = vmatmul.bf16.gmra.mxu0 %v493
        %v570 = vpop.f32.mrf.mxu0
        %v571 = vadd.f32 %v451, %v570
        %v572 = vpop.f32.mrf.mxu0
        %v573 = vadd.f32 %v451, %v572
        %574 = vmatmul.bf16.gmra.mxu0 %v494
        %v575 = vpop.f32.mrf.mxu0
        %v576 = vadd.f32 %v451, %v575
        %v577 = vpop.f32.mrf.mxu0
        %v578 = vadd.f32 %v451, %v577
        %579 = vmatmul.bf16.gmra.mxu0 %v495
        %v580 = vpop.f32.mrf.mxu0
        %v581 = vadd.f32 %v451, %v580
        %v582 = vpop.f32.mrf.mxu0
        %v583 = vadd.f32 %v451, %v582
        %584 = vmatmul.bf16.gmra.mxu0 %v496
        %v585 = vpop.f32.mrf.mxu0
        %v586 = vadd.f32 %v451, %v585
        %v587 = vpop.f32.mrf.mxu0
        %v588 = vadd.f32 %v451, %v587
        %589 = vmatmul.bf16.gmra.mxu0 %v497
        %v590 = vpop.f32.mrf.mxu0
        %v591 = vadd.f32 %v451, %v590
        %v592 = vpop.f32.mrf.mxu0
        %v593 = vadd.f32 %v451, %v592
        %594 = vmatmul.bf16.gmra.mxu0 %v498
        %v595 = vpop.f32.mrf.mxu0
        %v596 = vadd.f32 %v451, %v595
        %v597 = vpop.f32.mrf.mxu0
        %v598 = vadd.f32 %v451, %v597
        %599 = vmatmul.bf16.gmra.mxu0 %v499
        %v600 = vpop.f32.mrf.mxu0
        %v601 = vadd.f32 %v451, %v600
        %v602 = vpop.f32.mrf.mxu0
        %v603 = vadd.f32 %v451, %v602
        %604 = vmatmul.bf16.gmra.mxu0 %v500
        %v605 = vpop.f32.mrf.mxu0
        %v606 = vadd.f32 %v451, %v605
        %v607 = vpop.f32.mrf.mxu0
        %v608 = vadd.f32 %v451, %v607
        %609 = vmatmul.bf16.gmra.mxu0 %v501
        %v610 = vpop.f32.mrf.mxu0
        %v611 = vadd.f32 %v451, %v610
        %v612 = vpop.f32.mrf.mxu0
        %v613 = vadd.f32 %v451, %v612
        %614 = vmatmul.bf16.gmra.mxu0 %v502
        %v615 = vpop.f32.mrf.mxu0
        %v616 = vadd.f32 %v451, %v615
        %v617 = vpop.f32.mrf.mxu0
        %v618 = vadd.f32 %v451, %v617
        %619 = vdwg.mxu0
        %v620 = vmax.f32 %v571, 0.0
        %v621 = vmax.f32 %v573, 0.0
        %v622 = vmax.f32 %v576, 0.0
        %v623 = vmax.f32 %v578, 0.0
        %v624 = vmax.f32 %v581, 0.0
        %v625 = vmax.f32 %v583, 0.0
        %v626 = vmax.f32 %v586, 0.0
        %v627 = vmax.f32 %v588, 0.0
        %v628 = vmax.f32 %v591, 0.0
        %v629 = vmax.f32 %v593, 0.0
        %v630 = vmax.f32 %v596, 0.0
        %v631 = vmax.f32 %v598, 0.0
        %v632 = vmax.f32 %v601, 0.0
        %v633 = vmax.f32 %v603, 0.0
        %v634 = vmax.f32 %v606, 0.0
        %v635 = vmax.f32 %v608, 0.0
        %v636 = vmax.f32 %v611, 0.0
        %v637 = vmax.f32 %v613, 0.0
        %v638 = vmax.f32 %v616, 0.0
        %v639 = vmax.f32 %v618, 0.0
        %v640 = vlaneseq
        %v641 = vshrl.u32 %v640, 7
        %v642 = vadd.s32 %v641, 8
        %v643 = vadd.s32 %v641, 16
        %v644 = vadd.s32 %v641, 24
        %v645 = vadd.s32 %v641, 32
        %v646 = vadd.s32 %v641, 40
        %v647 = vadd.s32 %v641, 48
        %v648 = vadd.s32 %v641, 56
        %v649 = vadd.s32 %v641, 64
        %v650 = vadd.s32 %v641, 72
        %v651 = vadd.s32 %v641, 80
        %v652 = vadd.s32 %v641, 88
        %v653 = vadd.s32 %v641, 96
        %v654 = vadd.s32 %v641, 104
        %v655 = vadd.s32 %v641, 112
        %v656 = vadd.s32 %v641, 120
        %v657 = vadd.s32 %v641, 128
        %v658 = vadd.s32 %v641, 136
        %v659 = vadd.s32 %v641, 144
        %v660 = vadd.s32 %v641, 152
        %p661 = scmp.gt.s32.totalorder %s407, 0
        %vm662 = vcmp.ge.s32.totalorder %v641, 16
        %vm663 = vcmp.ge.s32.totalorder %v642, 16
        %vm664 = vcmp.ge.s32.totalorder %v643, 16
        %vm665 = vcmp.ge.s32.totalorder %v644, 16
        %vm666 = vcmp.ge.s32.totalorder %v645, 16
        %vm667 = vcmp.ge.s32.totalorder %v646, 16
        %vm668 = vcmp.ge.s32.totalorder %v647, 16
        %vm669 = vcmp.ge.s32.totalorder %v648, 16
        %vm670 = vcmp.ge.s32.totalorder %v649, 16
        %vm671 = vcmp.ge.s32.totalorder %v650, 16
        %vm672 = vcmp.ge.s32.totalorder %v651, 16
        %vm673 = vcmp.ge.s32.totalorder %v652, 16
        %vm674 = vcmp.ge.s32.totalorder %v653, 16
        %vm675 = vcmp.ge.s32.totalorder %v654, 16
        %vm676 = vcmp.ge.s32.totalorder %v655, 16
        %vm677 = vcmp.ge.s32.totalorder %v656, 16
        %vm678 = vcmp.ge.s32.totalorder %v657, 16
        %vm679 = vcmp.ge.s32.totalorder %v658, 16
        %vm680 = vcmp.ge.s32.totalorder %v659, 16
        %vm681 = vcmp.ge.s32.totalorder %v660, 16
        %s682 = scalar_select %p661, 1, 0
        %v683 = vstv %s682
        %vm684 = vcmp.eq.s32.totalorder %v683, 1
        %vm685 = vmor %vm684, %vm662
        %vm686 = vmor %vm684, %vm663
        %vm687 = vmor %vm684, %vm664
        %vm688 = vmor %vm684, %vm665
        %vm689 = vmor %vm684, %vm666
        %vm690 = vmor %vm684, %vm667
        %vm691 = vmor %vm684, %vm668
        %vm692 = vmor %vm684, %vm669
        %vm693 = vmor %vm684, %vm670
        %vm694 = vmor %vm684, %vm671
        %vm695 = vmor %vm684, %vm672
        %vm696 = vmor %vm684, %vm673
        %vm697 = vmor %vm684, %vm674
        %vm698 = vmor %vm684, %vm675
        %vm699 = vmor %vm684, %vm676
        %vm700 = vmor %vm684, %vm677
        %vm701 = vmor %vm684, %vm678
        %vm702 = vmor %vm684, %vm679
        %vm703 = vmor %vm684, %vm680
        %vm704 = vmor %vm684, %vm681
        %s705 = sadd.s32 %s407, 8
        %p706 = scmp.lt.s32.totalorder %s705, 16
        %vm707 = vcmp.lt.s32.totalorder %v641, 144
        %vm708 = vcmp.lt.s32.totalorder %v642, 144
        %vm709 = vcmp.lt.s32.totalorder %v643, 144
        %vm710 = vcmp.lt.s32.totalorder %v644, 144
        %vm711 = vcmp.lt.s32.totalorder %v645, 144
        %vm712 = vcmp.lt.s32.totalorder %v646, 144
        %vm713 = vcmp.lt.s32.totalorder %v647, 144
        %vm714 = vcmp.lt.s32.totalorder %v648, 144
        %vm715 = vcmp.lt.s32.totalorder %v649, 144
        %vm716 = vcmp.lt.s32.totalorder %v650, 144
        %vm717 = vcmp.lt.s32.totalorder %v651, 144
        %vm718 = vcmp.lt.s32.totalorder %v652, 144
        %vm719 = vcmp.lt.s32.totalorder %v653, 144
        %vm720 = vcmp.lt.s32.totalorder %v654, 144
        %vm721 = vcmp.lt.s32.totalorder %v655, 144
        %vm722 = vcmp.lt.s32.totalorder %v656, 144
        %vm723 = vcmp.lt.s32.totalorder %v657, 144
        %vm724 = vcmp.lt.s32.totalorder %v658, 144
        %vm725 = vcmp.lt.s32.totalorder %v659, 144
        %vm726 = vcmp.lt.s32.totalorder %v660, 144
        %s727 = scalar_select %p706, 1, 0
        %v728 = vstv %s727
        %vm729 = vcmp.eq.s32.totalorder %v728, 1
        %vm730 = vmor %vm729, %vm707
        %vm731 = vmor %vm729, %vm708
        %vm732 = vmor %vm729, %vm709
        %vm733 = vmor %vm729, %vm710
        %vm734 = vmor %vm729, %vm711
        %vm735 = vmor %vm729, %vm712
        %vm736 = vmor %vm729, %vm713
        %vm737 = vmor %vm729, %vm714
        %vm738 = vmor %vm729, %vm715
        %vm739 = vmor %vm729, %vm716
        %vm740 = vmor %vm729, %vm717
        %vm741 = vmor %vm729, %vm718
        %vm742 = vmor %vm729, %vm719
        %vm743 = vmor %vm729, %vm720
        %vm744 = vmor %vm729, %vm721
        %vm745 = vmor %vm729, %vm722
        %vm746 = vmor %vm729, %vm723
        %vm747 = vmor %vm729, %vm724
        %vm748 = vmor %vm729, %vm725
        %vm749 = vmor %vm729, %vm726
        %vm750 = vmand %vm685, %vm730
        %vm751 = vmand %vm686, %vm731
        %vm752 = vmand %vm687, %vm732
        %vm753 = vmand %vm688, %vm733
        %vm754 = vmand %vm689, %vm734
        %vm755 = vmand %vm690, %vm735
        %vm756 = vmand %vm691, %vm736
        %vm757 = vmand %vm692, %vm737
        %vm758 = vmand %vm693, %vm738
        %vm759 = vmand %vm694, %vm739
        %vm760 = vmand %vm695, %vm740
        %vm761 = vmand %vm696, %vm741
        %vm762 = vmand %vm697, %vm742
        %vm763 = vmand %vm698, %vm743
        %vm764 = vmand %vm699, %vm744
        %vm765 = vmand %vm700, %vm745
        %vm766 = vmand %vm701, %vm746
        %vm767 = vmand %vm702, %vm747
        %vm768 = vmand %vm703, %vm748
        %vm769 = vmand %vm704, %vm749
        %v770 = vsel %vm750, 1, 0
        %v771 = vsel %vm751, 1, 0
        %v772 = vsel %vm752, 1, 0
        %v773 = vsel %vm753, 1, 0
        %v774 = vsel %vm754, 1, 0
        %v775 = vsel %vm755, 1, 0
        %v776 = vsel %vm756, 1, 0
        %v777 = vsel %vm757, 1, 0
        %v778 = vsel %vm758, 1, 0
        %v779 = vsel %vm759, 1, 0
        %v780 = vsel %vm760, 1, 0
        %v781 = vsel %vm761, 1, 0
        %v782 = vsel %vm762, 1, 0
        %v783 = vsel %vm763, 1, 0
        %v784 = vsel %vm764, 1, 0
        %v785 = vsel %vm765, 1, 0
        %v786 = vsel %vm766, 1, 0
        %v787 = vsel %vm767, 1, 0
        %v788 = vsel %vm768, 1, 0
        %v789 = vsel %vm769, 1, 0
        %vm790 = vcmp.eq.s32.totalorder %v770, 1
        %vm791 = vcmp.eq.s32.totalorder %v771, 1
        %vm792 = vcmp.eq.s32.totalorder %v772, 1
        %vm793 = vcmp.eq.s32.totalorder %v773, 1
        %vm794 = vcmp.eq.s32.totalorder %v774, 1
        %vm795 = vcmp.eq.s32.totalorder %v775, 1
        %vm796 = vcmp.eq.s32.totalorder %v776, 1
        %vm797 = vcmp.eq.s32.totalorder %v777, 1
        %vm798 = vcmp.eq.s32.totalorder %v778, 1
        %vm799 = vcmp.eq.s32.totalorder %v779, 1
        %vm800 = vcmp.eq.s32.totalorder %v780, 1
        %vm801 = vcmp.eq.s32.totalorder %v781, 1
        %vm802 = vcmp.eq.s32.totalorder %v782, 1
        %vm803 = vcmp.eq.s32.totalorder %v783, 1
        %vm804 = vcmp.eq.s32.totalorder %v784, 1
        %vm805 = vcmp.eq.s32.totalorder %v785, 1
        %vm806 = vcmp.eq.s32.totalorder %v786, 1
        %vm807 = vcmp.eq.s32.totalorder %v787, 1
        %vm808 = vcmp.eq.s32.totalorder %v788, 1
        %vm809 = vcmp.eq.s32.totalorder %v789, 1
        %v810 = vsel %vm790, %v620, 0.0
        %v811 = vsel %vm791, %v621, 0.0
        %v812 = vsel %vm792, %v622, 0.0
        %v813 = vsel %vm793, %v623, 0.0
        %v814 = vsel %vm794, %v624, 0.0
        %v815 = vsel %vm795, %v625, 0.0
        %v816 = vsel %vm796, %v626, 0.0
        %v817 = vsel %vm797, %v627, 0.0
        %v818 = vsel %vm798, %v628, 0.0
        %v819 = vsel %vm799, %v629, 0.0
        %v820 = vsel %vm800, %v630, 0.0
        %v821 = vsel %vm801, %v631, 0.0
        %v822 = vsel %vm802, %v632, 0.0
        %v823 = vsel %vm803, %v633, 0.0
        %v824 = vsel %vm804, %v634, 0.0
        %v825 = vsel %vm805, %v635, 0.0
        %v826 = vsel %vm806, %v636, 0.0
        %v827 = vsel %vm807, %v637, 0.0
        %v828 = vsel %vm808, %v638, 0.0
        %v829 = vsel %vm809, %v639, 0.0
        %v830 = vpack.c.bf16 %v810, %v810
        %v831 = vpack.c.bf16 %v811, %v811
        %v832 = vpack.c.bf16 %v812, %v812
        %v833 = vpack.c.bf16 %v813, %v813
        %v834 = vpack.c.bf16 %v814, %v814
        %v835 = vpack.c.bf16 %v815, %v815
        %v836 = vpack.c.bf16 %v816, %v816
        %v837 = vpack.c.bf16 %v817, %v817
        %v838 = vpack.c.bf16 %v818, %v818
        %v839 = vpack.c.bf16 %v819, %v819
        %v840 = vpack.c.bf16 %v820, %v820
        %v841 = vpack.c.bf16 %v821, %v821
        %v842 = vpack.c.bf16 %v822, %v822
        %v843 = vpack.c.bf16 %v823, %v823
        %v844 = vpack.c.bf16 %v824, %v824
        %v845 = vpack.c.bf16 %v825, %v825
        %v846 = vpack.c.bf16 %v826, %v826
        %v847 = vpack.c.bf16 %v827, %v827
        %v848 = vpack.c.bf16 %v828, %v828
        %v849 = vpack.c.bf16 %v829, %v829
        %vm850 = vcmask 257024
        %851 = vst.msk [vmem:[#allocation2 + $0x4] sm:$0xf] %vm850, %v830
        %852 = vst.msk [vmem:[#allocation2 + $0x8] sm:$0xf] %vm850, %v831
        %853 = vst.msk [vmem:[#allocation2 + $0xc] sm:$0xf] %vm850, %v832
        %854 = vst.msk [vmem:[#allocation2 + $0x10] sm:$0xf] %vm850, %v833
        %855 = vst.msk [vmem:[#allocation2 + $0x14] sm:$0xf] %vm850, %v834
        %856 = vst.msk [vmem:[#allocation2 + $0x18] sm:$0xf] %vm850, %v835
        %857 = vst.msk [vmem:[#allocation2 + $0x1c] sm:$0xf] %vm850, %v836
        %858 = vst.msk [vmem:[#allocation2 + $0x20] sm:$0xf] %vm850, %v837
        %859 = vst.msk [vmem:[#allocation2 + $0x24] sm:$0xf] %vm850, %v838
        %860 = vst.msk [vmem:[#allocation2 + $0x28] sm:$0xf] %vm850, %v839
        %861 = vst.msk [vmem:[#allocation2 + $0x2c] sm:$0xf] %vm850, %v840
        %862 = vst.msk [vmem:[#allocation2 + $0x30] sm:$0xf] %vm850, %v841
        %863 = vst.msk [vmem:[#allocation2 + $0x34] sm:$0xf] %vm850, %v842
        %864 = vst.msk [vmem:[#allocation2 + $0x38] sm:$0xf] %vm850, %v843
        %865 = vst.msk [vmem:[#allocation2 + $0x3c] sm:$0xf] %vm850, %v844
        %866 = vst.msk [vmem:[#allocation2 + $0x40] sm:$0xf] %vm850, %v845
        %867 = vst.msk [vmem:[#allocation2 + $0x44] sm:$0xf] %vm850, %v846
        %868 = vst.msk [vmem:[#allocation2 + $0x48] sm:$0xf] %vm850, %v847
        %869 = vst.msk [vmem:[#allocation2 + $0x4c] sm:$0xf] %vm850, %v848
        %870 = vst.msk [vmem:[#allocation2 + $0x50] sm:$0xf] %vm850, %v849
        %vm871 = vcmp.lt.s32.totalorder %v641, 0
        %v872 = vsub.s32 0, %v641
        %v873 = vsel %vm871, %v872, %v641
        %v874 = vshrl.u32 %v873, 4
        %v875 = vand.u32 %v873, 15
        %v876 = vsub.s32 0, %v875
        %v877 = vsel %vm871, %v876, %v875
        %vm878 = vcmp.lt.s32.totalorder %v642, 0
        %v879 = vsub.s32 0, %v642
        %v880 = vsel %vm878, %v879, %v642
        %v881 = vshrl.u32 %v880, 4
        %v882 = vand.u32 %v880, 15
        %v883 = vsub.s32 0, %v882
        %v884 = vsel %vm878, %v883, %v882
        %vm885 = vcmp.lt.s32.totalorder %v643, 0
        %v886 = vsub.s32 0, %v643
        %v887 = vsel %vm885, %v886, %v643
        %v888 = vshrl.u32 %v887, 4
        %v889 = vand.u32 %v887, 15
        %v890 = vsub.s32 0, %v889
        %v891 = vsel %vm885, %v890, %v889
        %vm892 = vcmp.lt.s32.totalorder %v644, 0
        %v893 = vsub.s32 0, %v644
        %v894 = vsel %vm892, %v893, %v644
        %v895 = vshrl.u32 %v894, 4
        %v896 = vand.u32 %v894, 15
        %v897 = vsub.s32 0, %v896
        %v898 = vsel %vm892, %v897, %v896
        %vm899 = vcmp.lt.s32.totalorder %v645, 0
        %v900 = vsub.s32 0, %v645
        %v901 = vsel %vm899, %v900, %v645
        %v902 = vshrl.u32 %v901, 4
        %v903 = vand.u32 %v901, 15
        %v904 = vsub.s32 0, %v903
        %v905 = vsel %vm899, %v904, %v903
        %vm906 = vcmp.lt.s32.totalorder %v646, 0
        %v907 = vsub.s32 0, %v646
        %v908 = vsel %vm906, %v907, %v646
        %v909 = vshrl.u32 %v908, 4
        %v910 = vand.u32 %v908, 15
        %v911 = vsub.s32 0, %v910
        %v912 = vsel %vm906, %v911, %v910
        %vm913 = vcmp.lt.s32.totalorder %v647, 0
        %v914 = vsub.s32 0, %v647
        %v915 = vsel %vm913, %v914, %v647
        %v916 = vshrl.u32 %v915, 4
        %v917 = vand.u32 %v915, 15
        %v918 = vsub.s32 0, %v917
        %v919 = vsel %vm913, %v918, %v917
        %vm920 = vcmp.lt.s32.totalorder %v648, 0
        %v921 = vsub.s32 0, %v648
        %v922 = vsel %vm920, %v921, %v648
        %v923 = vshrl.u32 %v922, 4
        %v924 = vand.u32 %v922, 15
        %v925 = vsub.s32 0, %v924
        %v926 = vsel %vm920, %v925, %v924
        %vm927 = vcmp.lt.s32.totalorder %v649, 0
        %v928 = vsub.s32 0, %v649
        %v929 = vsel %vm927, %v928, %v649
        %v930 = vshrl.u32 %v929, 4
        %v931 = vand.u32 %v929, 15
        %v932 = vsub.s32 0, %v931
        %v933 = vsel %vm927, %v932, %v931
        %vm934 = vcmp.lt.s32.totalorder %v650, 0
        %v935 = vsub.s32 0, %v650
        %v936 = vsel %vm934, %v935, %v650
        %v937 = vshrl.u32 %v936, 4
        %v938 = vand.u32 %v936, 15
        %v939 = vsub.s32 0, %v938
        %v940 = vsel %vm934, %v939, %v938
        %vm941 = vcmp.lt.s32.totalorder %v651, 0
        %v942 = vsub.s32 0, %v651
        %v943 = vsel %vm941, %v942, %v651
        %v944 = vshrl.u32 %v943, 4
        %v945 = vand.u32 %v943, 15
        %v946 = vsub.s32 0, %v945
        %v947 = vsel %vm941, %v946, %v945
        %vm948 = vcmp.lt.s32.totalorder %v652, 0
        %v949 = vsub.s32 0, %v652
        %v950 = vsel %vm948, %v949, %v652
        %v951 = vshrl.u32 %v950, 4
        %v952 = vand.u32 %v950, 15
        %v953 = vsub.s32 0, %v952
        %v954 = vsel %vm948, %v953, %v952
        %vm955 = vcmp.lt.s32.totalorder %v653, 0
        %v956 = vsub.s32 0, %v653
        %v957 = vsel %vm955, %v956, %v653
        %v958 = vshrl.u32 %v957, 4
        %v959 = vand.u32 %v957, 15
        %v960 = vsub.s32 0, %v959
        %v961 = vsel %vm955, %v960, %v959
        %vm962 = vcmp.lt.s32.totalorder %v654, 0
        %v963 = vsub.s32 0, %v654
        %v964 = vsel %vm962, %v963, %v654
        %v965 = vshrl.u32 %v964, 4
        %v966 = vand.u32 %v964, 15
        %v967 = vsub.s32 0, %v966
        %v968 = vsel %vm962, %v967, %v966
        %vm969 = vcmp.lt.s32.totalorder %v655, 0
        %v970 = vsub.s32 0, %v655
        %v971 = vsel %vm969, %v970, %v655
        %v972 = vshrl.u32 %v971, 4
        %v973 = vand.u32 %v971, 15
        %v974 = vsub.s32 0, %v973
        %v975 = vsel %vm969, %v974, %v973
        %vm976 = vcmp.lt.s32.totalorder %v656, 0
        %v977 = vsub.s32 0, %v656
        %v978 = vsel %vm976, %v977, %v656
        %v979 = vshrl.u32 %v978, 4
        %v980 = vand.u32 %v978, 15
        %v981 = vsub.s32 0, %v980
        %v982 = vsel %vm976, %v981, %v980
        %vm983 = vcmp.ne.s32.totalorder %v877, 0
        %vm984 = vcmp.ne.s32.totalorder %v884, 0
        %vm985 = vcmp.ne.s32.totalorder %v891, 0
        %vm986 = vcmp.ne.s32.totalorder %v898, 0
        %vm987 = vcmp.ne.s32.totalorder %v905, 0
        %vm988 = vcmp.ne.s32.totalorder %v912, 0
        %vm989 = vcmp.ne.s32.totalorder %v919, 0
        %vm990 = vcmp.ne.s32.totalorder %v926, 0
        %vm991 = vcmp.ne.s32.totalorder %v933, 0
        %vm992 = vcmp.ne.s32.totalorder %v940, 0
        %vm993 = vcmp.ne.s32.totalorder %v947, 0
        %vm994 = vcmp.ne.s32.totalorder %v954, 0
        %vm995 = vcmp.ne.s32.totalorder %v961, 0
        %vm996 = vcmp.ne.s32.totalorder %v968, 0
        %vm997 = vcmp.ne.s32.totalorder %v975, 0
        %vm998 = vcmp.ne.s32.totalorder %v982, 0
        %vm999 = vcmp.lt.s32.totalorder %v877, 0
        %vm1000 = vcmp.lt.s32.totalorder %v884, 0
        %vm1001 = vcmp.lt.s32.totalorder %v891, 0
        %vm1002 = vcmp.lt.s32.totalorder %v898, 0
        %vm1003 = vcmp.lt.s32.totalorder %v905, 0
        %vm1004 = vcmp.lt.s32.totalorder %v912, 0
        %vm1005 = vcmp.lt.s32.totalorder %v919, 0
        %vm1006 = vcmp.lt.s32.totalorder %v926, 0
        %vm1007 = vcmp.lt.s32.totalorder %v933, 0
        %vm1008 = vcmp.lt.s32.totalorder %v940, 0
        %vm1009 = vcmp.lt.s32.totalorder %v947, 0
        %vm1010 = vcmp.lt.s32.totalorder %v954, 0
        %vm1011 = vcmp.lt.s32.totalorder %v961, 0
        %vm1012 = vcmp.lt.s32.totalorder %v968, 0
        %vm1013 = vcmp.lt.s32.totalorder %v975, 0
        %vm1014 = vcmp.lt.s32.totalorder %v982, 0
        %vm1015 = vmand %vm999, %vm983
        %vm1016 = vmand %vm1000, %vm984
        %vm1017 = vmand %vm1001, %vm985
        %vm1018 = vmand %vm1002, %vm986
        %vm1019 = vmand %vm1003, %vm987
        %vm1020 = vmand %vm1004, %vm988
        %vm1021 = vmand %vm1005, %vm989
        %vm1022 = vmand %vm1006, %vm990
        %vm1023 = vmand %vm1007, %vm991
        %vm1024 = vmand %vm1008, %vm992
        %vm1025 = vmand %vm1009, %vm993
        %vm1026 = vmand %vm1010, %vm994
        %vm1027 = vmand %vm1011, %vm995
        %vm1028 = vmand %vm1012, %vm996
        %vm1029 = vmand %vm1013, %vm997
        %vm1030 = vmand %vm1014, %vm998
        %v1031 = vadd.s32 %v877, 16
        %v1032 = vadd.s32 %v884, 16
        %v1033 = vadd.s32 %v891, 16
        %v1034 = vadd.s32 %v898, 16
        %v1035 = vadd.s32 %v905, 16
        %v1036 = vadd.s32 %v912, 16
        %v1037 = vadd.s32 %v919, 16
        %v1038 = vadd.s32 %v926, 16
        %v1039 = vadd.s32 %v933, 16
        %v1040 = vadd.s32 %v940, 16
        %v1041 = vadd.s32 %v947, 16
        %v1042 = vadd.s32 %v954, 16
        %v1043 = vadd.s32 %v961, 16
        %v1044 = vadd.s32 %v968, 16
        %v1045 = vadd.s32 %v975, 16
        %v1046 = vadd.s32 %v982, 16
        %v1047 = vsel %vm1015, %v1031, %v877
        %v1048 = vsel %vm1016, %v1032, %v884
        %v1049 = vsel %vm1017, %v1033, %v891
        %v1050 = vsel %vm1018, %v1034, %v898
        %v1051 = vsel %vm1019, %v1035, %v905
        %v1052 = vsel %vm1020, %v1036, %v912
        %v1053 = vsel %vm1021, %v1037, %v919
        %v1054 = vsel %vm1022, %v1038, %v926
        %v1055 = vsel %vm1023, %v1039, %v933
        %v1056 = vsel %vm1024, %v1040, %v940
        %v1057 = vsel %vm1025, %v1041, %v947
        %v1058 = vsel %vm1026, %v1042, %v954
        %v1059 = vsel %vm1027, %v1043, %v961
        %v1060 = vsel %vm1028, %v1044, %v968
        %v1061 = vsel %vm1029, %v1045, %v975
        %v1062 = vsel %vm1030, %v1046, %v982
        %vm1063 = vcmp.ne.s32.totalorder %v1047, 0
        %vm1064 = vcmp.ne.s32.totalorder %v1048, 0
        %vm1065 = vcmp.ne.s32.totalorder %v1049, 0
        %vm1066 = vcmp.ne.s32.totalorder %v1050, 0
        %vm1067 = vcmp.ne.s32.totalorder %v1051, 0
        %vm1068 = vcmp.ne.s32.totalorder %v1052, 0
        %vm1069 = vcmp.ne.s32.totalorder %v1053, 0
        %vm1070 = vcmp.ne.s32.totalorder %v1054, 0
        %vm1071 = vcmp.ne.s32.totalorder %v1055, 0
        %vm1072 = vcmp.ne.s32.totalorder %v1056, 0
        %vm1073 = vcmp.ne.s32.totalorder %v1057, 0
        %vm1074 = vcmp.ne.s32.totalorder %v1058, 0
        %vm1075 = vcmp.ne.s32.totalorder %v1059, 0
        %vm1076 = vcmp.ne.s32.totalorder %v1060, 0
        %vm1077 = vcmp.ne.s32.totalorder %v1061, 0
        %vm1078 = vcmp.ne.s32.totalorder %v1062, 0
        %vm1079 = vcmp.ne.s32.totalorder %v1047, 15
        %vm1080 = vcmp.ne.s32.totalorder %v1048, 15
        %vm1081 = vcmp.ne.s32.totalorder %v1049, 15
        %vm1082 = vcmp.ne.s32.totalorder %v1050, 15
        %vm1083 = vcmp.ne.s32.totalorder %v1051, 15
        %vm1084 = vcmp.ne.s32.totalorder %v1052, 15
        %vm1085 = vcmp.ne.s32.totalorder %v1053, 15
        %vm1086 = vcmp.ne.s32.totalorder %v1054, 15
        %vm1087 = vcmp.ne.s32.totalorder %v1055, 15
        %vm1088 = vcmp.ne.s32.totalorder %v1056, 15
        %vm1089 = vcmp.ne.s32.totalorder %v1057, 15
        %vm1090 = vcmp.ne.s32.totalorder %v1058, 15
        %vm1091 = vcmp.ne.s32.totalorder %v1059, 15
        %vm1092 = vcmp.ne.s32.totalorder %v1060, 15
        %vm1093 = vcmp.ne.s32.totalorder %v1061, 15
        %vm1094 = vcmp.ne.s32.totalorder %v1062, 15
        %v1095 = vld [vmem:[#allocation2] sm:$0x8]
        %v1096 = vld [vmem:[#allocation2 + $0x4] sm:$0xf]
        %v1097 = vld [vmem:[#allocation2 + $0x8] sm:$0xf]
        %v1098 = vld [vmem:[#allocation2 + $0xc] sm:$0xf]
        %v1099 = vld [vmem:[#allocation2 + $0x10] sm:$0xf]
        %v1100 = vld [vmem:[#allocation2 + $0x14] sm:$0xf]
        %v1101 = vld [vmem:[#allocation2 + $0x18] sm:$0xf]
        %v1102 = vld [vmem:[#allocation2 + $0x1c] sm:$0xf]
        %v1103 = vld [vmem:[#allocation2 + $0x20] sm:$0xf]
        %v1104 = vld [vmem:[#allocation2 + $0x24] sm:$0xf]
        %v1105 = vld [vmem:[#allocation2 + $0x28] sm:$0xf]
        %v1106 = vld [vmem:[#allocation2 + $0x2c] sm:$0xf]
        %v1107 = vld [vmem:[#allocation2 + $0x30] sm:$0xf]
        %v1108 = vld [vmem:[#allocation2 + $0x34] sm:$0xf]
        %v1109 = vld [vmem:[#allocation2 + $0x38] sm:$0xf]
        %v1110 = vld [vmem:[#allocation2 + $0x3c] sm:$0xf]
        %v1111 = vld [vmem:[#allocation2 + $0x40] sm:$0xf]
        %v1112 = vsel %vm1063, 1, 0
        %v1113 = vsel %vm1064, 1, 0
        %v1114 = vsel %vm1065, 1, 0
        %v1115 = vsel %vm1066, 1, 0
        %v1116 = vsel %vm1067, 1, 0
        %v1117 = vsel %vm1068, 1, 0
        %v1118 = vsel %vm1069, 1, 0
        %v1119 = vsel %vm1070, 1, 0
        %v1120 = vsel %vm1071, 1, 0
        %v1121 = vsel %vm1072, 1, 0
        %v1122 = vsel %vm1073, 1, 0
        %v1123 = vsel %vm1074, 1, 0
        %v1124 = vsel %vm1075, 1, 0
        %v1125 = vsel %vm1076, 1, 0
        %v1126 = vsel %vm1077, 1, 0
        %v1127 = vsel %vm1078, 1, 0
        %vm1128 = vcmp.eq.s32.totalorder %v1112, 1
        %vm1129 = vcmp.eq.s32.totalorder %v1113, 1
        %vm1130 = vcmp.eq.s32.totalorder %v1114, 1
        %vm1131 = vcmp.eq.s32.totalorder %v1115, 1
        %vm1132 = vcmp.eq.s32.totalorder %v1116, 1
        %vm1133 = vcmp.eq.s32.totalorder %v1117, 1
        %vm1134 = vcmp.eq.s32.totalorder %v1118, 1
        %vm1135 = vcmp.eq.s32.totalorder %v1119, 1
        %vm1136 = vcmp.eq.s32.totalorder %v1120, 1
        %vm1137 = vcmp.eq.s32.totalorder %v1121, 1
        %vm1138 = vcmp.eq.s32.totalorder %v1122, 1
        %vm1139 = vcmp.eq.s32.totalorder %v1123, 1
        %vm1140 = vcmp.eq.s32.totalorder %v1124, 1
        %vm1141 = vcmp.eq.s32.totalorder %v1125, 1
        %vm1142 = vcmp.eq.s32.totalorder %v1126, 1
        %vm1143 = vcmp.eq.s32.totalorder %v1127, 1
        %vm1144 = vmpackc.low %vm1128, %vm1128
        %vm1145 = vmpackc.low %vm1129, %vm1129
        %vm1146 = vmpackc.low %vm1130, %vm1130
        %vm1147 = vmpackc.low %vm1131, %vm1131
        %vm1148 = vmpackc.low %vm1132, %vm1132
        %vm1149 = vmpackc.low %vm1133, %vm1133
        %vm1150 = vmpackc.low %vm1134, %vm1134
        %vm1151 = vmpackc.low %vm1135, %vm1135
        %vm1152 = vmpackc.low %vm1136, %vm1136
        %vm1153 = vmpackc.low %vm1137, %vm1137
        %vm1154 = vmpackc.low %vm1138, %vm1138
        %vm1155 = vmpackc.low %vm1139, %vm1139
        %vm1156 = vmpackc.low %vm1140, %vm1140
        %vm1157 = vmpackc.low %vm1141, %vm1141
        %vm1158 = vmpackc.low %vm1142, %vm1142
        %vm1159 = vmpackc.low %vm1143, %vm1143
        %v1160 = vsel %vm1144, 65537, 0
        %v1161 = vsel %vm1145, 65537, 0
        %v1162 = vsel %vm1146, 65537, 0
        %v1163 = vsel %vm1147, 65537, 0
        %v1164 = vsel %vm1148, 65537, 0
        %v1165 = vsel %vm1149, 65537, 0
        %v1166 = vsel %vm1150, 65537, 0
        %v1167 = vsel %vm1151, 65537, 0
        %v1168 = vsel %vm1152, 65537, 0
        %v1169 = vsel %vm1153, 65537, 0
        %v1170 = vsel %vm1154, 65537, 0
        %v1171 = vsel %vm1155, 65537, 0
        %v1172 = vsel %vm1156, 65537, 0
        %v1173 = vsel %vm1157, 65537, 0
        %v1174 = vsel %vm1158, 65537, 0
        %v1175 = vsel %vm1159, 65537, 0
        %vm1176 = vsmask.f32 3328
        %vm1177 = vsmask.f32 7440
        %vm1178 = vmor %vm1176, %vm1177
        %v1180 = vshll.u32 %v1160, 16
        %v1182 = vrot.slane %v1180, 5
        %v1183 = vshrl.u32 %v1160, 16
        %v1185 = vrot.slane %v1183, 4
        %v1186 = vor.u32 %v1185, %v1182
        %v1187 = vrot.slane %v1186, 4
        %v1189 = vshll.u32 %v1161, 16
        %v1191 = vrot.slane %v1189, 5
        %v1192 = vsel %vm1178, %v1187, %v1191
        %v1193 = vshrl.u32 %v1161, 16
        %v1195 = vrot.slane %v1193, 4
        %v1196 = vor.u32 %v1195, %v1191
        %v1197 = vrot.slane %v1196, 4
        %v1199 = vshll.u32 %v1162, 16
        %v1201 = vrot.slane %v1199, 5
        %v1202 = vsel %vm1178, %v1197, %v1201
        %v1203 = vshrl.u32 %v1162, 16
        %v1205 = vrot.slane %v1203, 4
        %v1206 = vor.u32 %v1205, %v1201
        %v1207 = vrot.slane %v1206, 4
        %v1209 = vshll.u32 %v1163, 16
        %v1211 = vrot.slane %v1209, 5
        %v1212 = vsel %vm1178, %v1207, %v1211
        %v1213 = vshrl.u32 %v1163, 16
        %v1215 = vrot.slane %v1213, 4
        %v1216 = vor.u32 %v1215, %v1211
        %v1217 = vrot.slane %v1216, 4
        %v1219 = vshll.u32 %v1164, 16
        %v1221 = vrot.slane %v1219, 5
        %v1222 = vsel %vm1178, %v1217, %v1221
        %v1223 = vshrl.u32 %v1164, 16
        %v1225 = vrot.slane %v1223, 4
        %v1226 = vor.u32 %v1225, %v1221
        %v1227 = vrot.slane %v1226, 4
        %v1229 = vshll.u32 %v1165, 16
        %v1231 = vrot.slane %v1229, 5
        %v1232 = vsel %vm1178, %v1227, %v1231
        %v1233 = vshrl.u32 %v1165, 16
        %v1235 = vrot.slane %v1233, 4
        %v1236 = vor.u32 %v1235, %v1231
        %v1237 = vrot.slane %v1236, 4
        %v1239 = vshll.u32 %v1166, 16
        %v1241 = vrot.slane %v1239, 5
        %v1242 = vsel %vm1178, %v1237, %v1241
        %v1243 = vshrl.u32 %v1166, 16
        %v1245 = vrot.slane %v1243, 4
        %v1246 = vor.u32 %v1245, %v1241
        %v1247 = vrot.slane %v1246, 4
        %v1249 = vshll.u32 %v1167, 16
        %v1251 = vrot.slane %v1249, 5
        %v1252 = vsel %vm1178, %v1247, %v1251
        %v1253 = vshrl.u32 %v1167, 16
        %v1255 = vrot.slane %v1253, 4
        %v1256 = vor.u32 %v1255, %v1251
        %v1257 = vrot.slane %v1256, 4
        %v1259 = vshll.u32 %v1168, 16
        %v1261 = vrot.slane %v1259, 5
        %v1262 = vsel %vm1178, %v1257, %v1261
        %v1263 = vshrl.u32 %v1168, 16
        %v1265 = vrot.slane %v1263, 4
        %v1266 = vor.u32 %v1265, %v1261
        %v1267 = vrot.slane %v1266, 4
        %v1269 = vshll.u32 %v1169, 16
        %v1271 = vrot.slane %v1269, 5
        %v1272 = vsel %vm1178, %v1267, %v1271
        %v1273 = vshrl.u32 %v1169, 16
        %v1275 = vrot.slane %v1273, 4
        %v1276 = vor.u32 %v1275, %v1271
        %v1277 = vrot.slane %v1276, 4
        %v1279 = vshll.u32 %v1170, 16
        %v1281 = vrot.slane %v1279, 5
        %v1282 = vsel %vm1178, %v1277, %v1281
        %v1283 = vshrl.u32 %v1170, 16
        %v1285 = vrot.slane %v1283, 4
        %v1286 = vor.u32 %v1285, %v1281
        %v1287 = vrot.slane %v1286, 4
        %v1289 = vshll.u32 %v1171, 16
        %v1291 = vrot.slane %v1289, 5
        %v1292 = vsel %vm1178, %v1287, %v1291
        %v1293 = vshrl.u32 %v1171, 16
        %v1295 = vrot.slane %v1293, 4
        %v1296 = vor.u32 %v1295, %v1291
        %v1297 = vrot.slane %v1296, 4
        %v1299 = vshll.u32 %v1172, 16
        %v1301 = vrot.slane %v1299, 5
        %v1302 = vsel %vm1178, %v1297, %v1301
        %v1303 = vshrl.u32 %v1172, 16
        %v1305 = vrot.slane %v1303, 4
        %v1306 = vor.u32 %v1305, %v1301
        %v1307 = vrot.slane %v1306, 4
        %v1309 = vshll.u32 %v1173, 16
        %v1311 = vrot.slane %v1309, 5
        %v1312 = vsel %vm1178, %v1307, %v1311
        %v1313 = vshrl.u32 %v1173, 16
        %v1315 = vrot.slane %v1313, 4
        %v1316 = vor.u32 %v1315, %v1311
        %v1317 = vrot.slane %v1316, 4
        %v1319 = vshll.u32 %v1174, 16
        %v1321 = vrot.slane %v1319, 5
        %v1322 = vsel %vm1178, %v1317, %v1321
        %v1323 = vshrl.u32 %v1174, 16
        %v1325 = vrot.slane %v1323, 4
        %v1326 = vor.u32 %v1325, %v1321
        %v1327 = vrot.slane %v1326, 4
        %v1329 = vshll.u32 %v1175, 16
        %v1331 = vrot.slane %v1329, 5
        %v1332 = vsel %vm1178, %v1327, %v1331
        %v1333 = vshrl.u32 %v1175, 16
        %v1335 = vrot.slane %v1333, 4
        %v1336 = vor.u32 %v1335, %v1331
        %v1337 = vrot.slane %v1336, 4
        %v1338 = vunpack.c.l.b16 %v1182
        %v1339 = vunpack.c.h.b16 %v1182
        %v1340 = vunpack.c.l.b16 0
        %v1341 = vunpack.c.h.b16 0
        %vm1342 = vcmp.ne.s32.totalorder %v1338, %v1340
        %vm1343 = vcmp.ne.s32.totalorder %v1339, %v1341
        %vm1344 = vmpackc.low %vm1343, %vm1342
        %v1345 = vunpack.c.l.b16 %v1192
        %v1346 = vunpack.c.h.b16 %v1192
        %v1347 = vunpack.c.l.b16 0
        %v1348 = vunpack.c.h.b16 0
        %vm1349 = vcmp.ne.s32.totalorder %v1345, %v1347
        %vm1350 = vcmp.ne.s32.totalorder %v1346, %v1348
        %vm1351 = vmpackc.low %vm1350, %vm1349
        %v1352 = vunpack.c.l.b16 %v1202
        %v1353 = vunpack.c.h.b16 %v1202
        %v1354 = vunpack.c.l.b16 0
        %v1355 = vunpack.c.h.b16 0
        %vm1356 = vcmp.ne.s32.totalorder %v1352, %v1354
        %vm1357 = vcmp.ne.s32.totalorder %v1353, %v1355
        %vm1358 = vmpackc.low %vm1357, %vm1356
        %v1359 = vunpack.c.l.b16 %v1212
        %v1360 = vunpack.c.h.b16 %v1212
        %v1361 = vunpack.c.l.b16 0
        %v1362 = vunpack.c.h.b16 0
        %vm1363 = vcmp.ne.s32.totalorder %v1359, %v1361
        %vm1364 = vcmp.ne.s32.totalorder %v1360, %v1362
        %vm1365 = vmpackc.low %vm1364, %vm1363
        %v1366 = vunpack.c.l.b16 %v1222
        %v1367 = vunpack.c.h.b16 %v1222
        %v1368 = vunpack.c.l.b16 0
        %v1369 = vunpack.c.h.b16 0
        %vm1370 = vcmp.ne.s32.totalorder %v1366, %v1368
        %vm1371 = vcmp.ne.s32.totalorder %v1367, %v1369
        %vm1372 = vmpackc.low %vm1371, %vm1370
        %v1373 = vunpack.c.l.b16 %v1232
        %v1374 = vunpack.c.h.b16 %v1232
        %v1375 = vunpack.c.l.b16 0
        %v1376 = vunpack.c.h.b16 0
        %vm1377 = vcmp.ne.s32.totalorder %v1373, %v1375
        %vm1378 = vcmp.ne.s32.totalorder %v1374, %v1376
        %vm1379 = vmpackc.low %vm1378, %vm1377
        %v1380 = vunpack.c.l.b16 %v1242
        %v1381 = vunpack.c.h.b16 %v1242
        %v1382 = vunpack.c.l.b16 0
        %v1383 = vunpack.c.h.b16 0
        %vm1384 = vcmp.ne.s32.totalorder %v1380, %v1382
        %vm1385 = vcmp.ne.s32.totalorder %v1381, %v1383
        %vm1386 = vmpackc.low %vm1385, %vm1384
        %v1387 = vunpack.c.l.b16 %v1252
        %v1388 = vunpack.c.h.b16 %v1252
        %v1389 = vunpack.c.l.b16 0
        %v1390 = vunpack.c.h.b16 0
        %vm1391 = vcmp.ne.s32.totalorder %v1387, %v1389
        %vm1392 = vcmp.ne.s32.totalorder %v1388, %v1390
        %vm1393 = vmpackc.low %vm1392, %vm1391
        %v1394 = vunpack.c.l.b16 %v1262
        %v1395 = vunpack.c.h.b16 %v1262
        %v1396 = vunpack.c.l.b16 0
        %v1397 = vunpack.c.h.b16 0
        %vm1398 = vcmp.ne.s32.totalorder %v1394, %v1396
        %vm1399 = vcmp.ne.s32.totalorder %v1395, %v1397
        %vm1400 = vmpackc.low %vm1399, %vm1398
        %v1401 = vunpack.c.l.b16 %v1272
        %v1402 = vunpack.c.h.b16 %v1272
        %v1403 = vunpack.c.l.b16 0
        %v1404 = vunpack.c.h.b16 0
        %vm1405 = vcmp.ne.s32.totalorder %v1401, %v1403
        %vm1406 = vcmp.ne.s32.totalorder %v1402, %v1404
        %vm1407 = vmpackc.low %vm1406, %vm1405
        %v1408 = vunpack.c.l.b16 %v1282
        %v1409 = vunpack.c.h.b16 %v1282
        %v1410 = vunpack.c.l.b16 0
        %v1411 = vunpack.c.h.b16 0
        %vm1412 = vcmp.ne.s32.totalorder %v1408, %v1410
        %vm1413 = vcmp.ne.s32.totalorder %v1409, %v1411
        %vm1414 = vmpackc.low %vm1413, %vm1412
        %v1415 = vunpack.c.l.b16 %v1292
        %v1416 = vunpack.c.h.b16 %v1292
        %v1417 = vunpack.c.l.b16 0
        %v1418 = vunpack.c.h.b16 0
        %vm1419 = vcmp.ne.s32.totalorder %v1415, %v1417
        %vm1420 = vcmp.ne.s32.totalorder %v1416, %v1418
        %vm1421 = vmpackc.low %vm1420, %vm1419
        %v1422 = vunpack.c.l.b16 %v1302
        %v1423 = vunpack.c.h.b16 %v1302
        %v1424 = vunpack.c.l.b16 0
        %v1425 = vunpack.c.h.b16 0
        %vm1426 = vcmp.ne.s32.totalorder %v1422, %v1424
        %vm1427 = vcmp.ne.s32.totalorder %v1423, %v1425
        %vm1428 = vmpackc.low %vm1427, %vm1426
        %v1429 = vunpack.c.l.b16 %v1312
        %v1430 = vunpack.c.h.b16 %v1312
        %v1431 = vunpack.c.l.b16 0
        %v1432 = vunpack.c.h.b16 0
        %vm1433 = vcmp.ne.s32.totalorder %v1429, %v1431
        %vm1434 = vcmp.ne.s32.totalorder %v1430, %v1432
        %vm1435 = vmpackc.low %vm1434, %vm1433
        %v1436 = vunpack.c.l.b16 %v1322
        %v1437 = vunpack.c.h.b16 %v1322
        %v1438 = vunpack.c.l.b16 0
        %v1439 = vunpack.c.h.b16 0
        %vm1440 = vcmp.ne.s32.totalorder %v1436, %v1438
        %vm1441 = vcmp.ne.s32.totalorder %v1437, %v1439
        %vm1442 = vmpackc.low %vm1441, %vm1440
        %v1443 = vunpack.c.l.b16 %v1332
        %v1444 = vunpack.c.h.b16 %v1332
        %v1445 = vunpack.c.l.b16 0
        %v1446 = vunpack.c.h.b16 0
        %vm1447 = vcmp.ne.s32.totalorder %v1443, %v1445
        %vm1448 = vcmp.ne.s32.totalorder %v1444, %v1446
        %vm1449 = vmpackc.low %vm1448, %vm1447
        %v1450 = vunpack.c.l.b16 %v1337
        %v1451 = vunpack.c.h.b16 %v1337
        %v1452 = vunpack.c.l.b16 0
        %v1453 = vunpack.c.h.b16 0
        %vm1454 = vcmp.ne.s32.totalorder %v1450, %v1452
        %vm1455 = vcmp.ne.s32.totalorder %v1451, %v1453
        %vm1456 = vmpackc.low %vm1455, %vm1454
        %v1457 = vsel %vm1344, %v1095, 0
        %v1458 = vsel %vm1351, %v1096, 0
        %v1459 = vsel %vm1358, %v1097, 0
        %v1460 = vsel %vm1365, %v1098, 0
        %v1461 = vsel %vm1372, %v1099, 0
        %v1462 = vsel %vm1379, %v1100, 0
        %v1463 = vsel %vm1386, %v1101, 0
        %v1464 = vsel %vm1393, %v1102, 0
        %v1465 = vsel %vm1400, %v1103, 0
        %v1466 = vsel %vm1407, %v1104, 0
        %v1467 = vsel %vm1414, %v1105, 0
        %v1468 = vsel %vm1421, %v1106, 0
        %v1469 = vsel %vm1428, %v1107, 0
        %v1470 = vsel %vm1435, %v1108, 0
        %v1471 = vsel %vm1442, %v1109, 0
        %v1472 = vsel %vm1449, %v1110, 0
        %v1473 = vsel %vm1456, %v1111, 0
        %v1474 = vld [vmem:[#allocation8] sm:$0xf]
        %v1475 = vld [vmem:[#allocation8 + $0x4] sm:$0xf]
        %v1476 = vld [vmem:[#allocation8 + $0x8] sm:$0xf]
        %v1477 = vld [vmem:[#allocation8 + $0xc] sm:$0xf]
        %s1478 = scalar_lea.vmem [#allocation8], 16
        %v1479 = vld [vmem:[%s1478] sm:$0xf]
        %v1480 = vld [vmem:[%s1478 + $0x4] sm:$0xf]
        %v1481 = vld [vmem:[%s1478 + $0x8] sm:$0xf]
        %v1482 = vld [vmem:[%s1478 + $0xc] sm:$0xf]
        %v1499 = vunpack.c.l.b16 %v1096
        %v1500 = vunpack.c.l.b16 %v1097
        %v1501 = vunpack.c.l.b16 %v1098
        %v1502 = vunpack.c.l.b16 %v1099
        %v1503 = vunpack.c.l.b16 %v1100
        %v1504 = vunpack.c.l.b16 %v1101
        %v1505 = vunpack.c.l.b16 %v1102
        %v1506 = vunpack.c.l.b16 %v1103
        %v1507 = vunpack.c.l.b16 %v1104
        %v1508 = vunpack.c.l.b16 %v1105
        %v1509 = vunpack.c.l.b16 %v1106
        %v1510 = vunpack.c.l.b16 %v1107
        %v1511 = vunpack.c.l.b16 %v1108
        %v1512 = vunpack.c.l.b16 %v1109
        %v1513 = vunpack.c.l.b16 %v1110
        %v1514 = vunpack.c.l.b16 %v1111
        %v1515 = vpack.c.b16 %v1500, %v1499
        %v1516 = vpack.c.b16 %v1502, %v1501
        %v1517 = vpack.c.b16 %v1504, %v1503
        %v1518 = vpack.c.b16 %v1506, %v1505
        %v1519 = vpack.c.b16 %v1508, %v1507
        %v1520 = vpack.c.b16 %v1510, %v1509
        %v1521 = vpack.c.b16 %v1512, %v1511
        %v1522 = vpack.c.b16 %v1514, %v1513
        %v1527 = vunpack.c.l.b16 %v1479
        %v1528 = vunpack.c.l.b16 %v1480
        %v1529 = vunpack.c.l.b16 %v1481
        %v1530 = vunpack.c.l.b16 %v1482
        %v1531 = vpack.c.b16 %v1528, %v1527
        %v1532 = vpack.c.b16 %v1530, %v1529
        %vm1535 = vcmask 261120
        %v1537 = vsel %vm1535, %v1515, 0
        %v1540 = vsel %vm1535, %v1516, 0
        %v1543 = vsel %vm1535, %v1517, 0
        %v1546 = vsel %vm1535, %v1518, 0
        %v1549 = vsel %vm1535, %v1519, 0
        %v1552 = vsel %vm1535, %v1520, 0
        %v1555 = vsel %vm1535, %v1521, 0
        %v1558 = vsel %vm1535, %v1522, 0
        %1560 = vmatpush.bf16.msra.mxu0 0
        %1561 = vmatpush.bf16.msra.mxu0 0
        %1562 = vmatpush.bf16.msra.mxu0 0
        %1563 = vmatpush.bf16.msra.mxu0 0
        %1564 = vmatpush.bf16.msra.mxu0 0
        %1565 = vmatpush.bf16.msra.mxu0 0
        %1566 = vmatpush.bf16.msra.mxu0 %v1532
        %1567 = vmatpush.bf16.msra.mxu0 %v1531
        %1568 = vmatmul.bf16.gmra.mxu0 %v1537
        %v1569 = vpop.f32.mrf.mxu0
        %v1570 = vadd.f32 0.0, %v1569
        %v1571 = vpop.f32.mrf.mxu0
        %v1572 = vadd.f32 0.0, %v1571
        %1573 = vmatmul.bf16.gmra.mxu0 %v1540
        %v1574 = vpop.f32.mrf.mxu0
        %v1575 = vadd.f32 0.0, %v1574
        %v1576 = vpop.f32.mrf.mxu0
        %v1577 = vadd.f32 0.0, %v1576
        %1578 = vmatmul.bf16.gmra.mxu0 %v1543
        %v1579 = vpop.f32.mrf.mxu0
        %v1580 = vadd.f32 0.0, %v1579
        %v1581 = vpop.f32.mrf.mxu0
        %v1582 = vadd.f32 0.0, %v1581
        %1583 = vmatmul.bf16.gmra.mxu0 %v1546
        %v1584 = vpop.f32.mrf.mxu0
        %v1585 = vadd.f32 0.0, %v1584
        %v1586 = vpop.f32.mrf.mxu0
        %v1587 = vadd.f32 0.0, %v1586
        %1588 = vmatmul.bf16.gmra.mxu0 %v1549
        %v1589 = vpop.f32.mrf.mxu0
        %v1590 = vadd.f32 0.0, %v1589
        %v1591 = vpop.f32.mrf.mxu0
        %v1592 = vadd.f32 0.0, %v1591
        %1593 = vmatmul.bf16.gmra.mxu0 %v1552
        %v1594 = vpop.f32.mrf.mxu0
        %v1595 = vadd.f32 0.0, %v1594
        %v1596 = vpop.f32.mrf.mxu0
        %v1597 = vadd.f32 0.0, %v1596
        %1598 = vmatmul.bf16.gmra.mxu0 %v1555
        %v1599 = vpop.f32.mrf.mxu0
        %v1600 = vadd.f32 0.0, %v1599
        %v1601 = vpop.f32.mrf.mxu0
        %v1602 = vadd.f32 0.0, %v1601
        %1603 = vmatmul.bf16.gmra.mxu0 %v1558
        %v1604 = vpop.f32.mrf.mxu0
        %v1605 = vadd.f32 0.0, %v1604
        %v1606 = vpop.f32.mrf.mxu0
        %v1607 = vadd.f32 0.0, %v1606
        %1608 = vdwg.mxu0
        %v1626 = vunpack.c.l.b16 %v1457
        %v1627 = vunpack.c.l.b16 %v1458
        %v1628 = vunpack.c.l.b16 %v1459
        %v1629 = vunpack.c.l.b16 %v1460
        %v1630 = vunpack.c.l.b16 %v1461
        %v1631 = vunpack.c.l.b16 %v1462
        %v1632 = vunpack.c.l.b16 %v1463
        %v1633 = vunpack.c.l.b16 %v1464
        %v1634 = vunpack.c.l.b16 %v1465
        %v1635 = vunpack.c.l.b16 %v1466
        %v1636 = vunpack.c.l.b16 %v1467
        %v1637 = vunpack.c.l.b16 %v1468
        %v1638 = vunpack.c.l.b16 %v1469
        %v1639 = vunpack.c.l.b16 %v1470
        %v1640 = vunpack.c.l.b16 %v1471
        %v1641 = vunpack.c.l.b16 %v1472
        %v1642 = vunpack.c.l.b16 %v1473
        %v1643 = vpack.c.b16 %v1627, %v1626
        %v1644 = vpack.c.b16 %v1629, %v1628
        %v1645 = vpack.c.b16 %v1631, %v1630
        %v1646 = vpack.c.b16 %v1633, %v1632
        %v1647 = vpack.c.b16 %v1635, %v1634
        %v1648 = vpack.c.b16 %v1637, %v1636
        %v1649 = vpack.c.b16 %v1639, %v1638
        %v1650 = vpack.c.b16 %v1641, %v1640
        %v1651 = vpack.c.b16 %v1642, %v1642
        %vm1652 = vsmask.f32 4352
        %v1654 = vshrl.u32 %v1643, 16
        %v1656 = vrot.slane %v1654, 3
        %v1657 = vshll.u32 %v1643, 16
        %v1659 = vrot.slane %v1657, 4
        %v1660 = vor.u32 %v1656, %v1659
        %v1662 = vshrl.u32 %v1644, 16
        %v1664 = vrot.slane %v1662, 3
        %v1665 = vshll.u32 %v1644, 16
        %v1667 = vrot.slane %v1665, 4
        %v1668 = vor.u32 %v1664, %v1667
        %v1669 = vsel %vm1652, %v1660, %v1668
        %v1671 = vshrl.u32 %v1645, 16
        %v1673 = vrot.slane %v1671, 3
        %v1674 = vshll.u32 %v1645, 16
        %v1676 = vrot.slane %v1674, 4
        %v1677 = vor.u32 %v1673, %v1676
        %v1678 = vsel %vm1652, %v1668, %v1677
        %v1680 = vshrl.u32 %v1646, 16
        %v1682 = vrot.slane %v1680, 3
        %v1683 = vshll.u32 %v1646, 16
        %v1685 = vrot.slane %v1683, 4
        %v1686 = vor.u32 %v1682, %v1685
        %v1687 = vsel %vm1652, %v1677, %v1686
        %v1689 = vshrl.u32 %v1647, 16
        %v1691 = vrot.slane %v1689, 3
        %v1692 = vshll.u32 %v1647, 16
        %v1694 = vrot.slane %v1692, 4
        %v1695 = vor.u32 %v1691, %v1694
        %v1696 = vsel %vm1652, %v1686, %v1695
        %v1698 = vshrl.u32 %v1648, 16
        %v1700 = vrot.slane %v1698, 3
        %v1701 = vshll.u32 %v1648, 16
        %v1703 = vrot.slane %v1701, 4
        %v1704 = vor.u32 %v1700, %v1703
        %v1705 = vsel %vm1652, %v1695, %v1704
        %v1707 = vshrl.u32 %v1649, 16
        %v1709 = vrot.slane %v1707, 3
        %v1710 = vshll.u32 %v1649, 16
        %v1712 = vrot.slane %v1710, 4
        %v1713 = vor.u32 %v1709, %v1712
        %v1714 = vsel %vm1652, %v1704, %v1713
        %v1716 = vshrl.u32 %v1650, 16
        %v1718 = vrot.slane %v1716, 3
        %v1719 = vshll.u32 %v1650, 16
        %v1721 = vrot.slane %v1719, 4
        %v1722 = vor.u32 %v1718, %v1721
        %v1723 = vsel %vm1652, %v1713, %v1722
        %v1725 = vshrl.u32 %v1651, 16
        %v1727 = vrot.slane %v1725, 3
        %v1728 = vshll.u32 %v1651, 16
        %v1730 = vrot.slane %v1728, 4
        %v1731 = vor.u32 %v1727, %v1730
        %v1732 = vsel %vm1652, %v1722, %v1731
        %v1737 = vunpack.c.l.b16 %v1474
        %v1738 = vunpack.c.l.b16 %v1475
        %v1739 = vunpack.c.l.b16 %v1476
        %v1740 = vunpack.c.l.b16 %v1477
        %v1741 = vpack.c.b16 %v1738, %v1737
        %v1742 = vpack.c.b16 %v1740, %v1739
        %v1746 = vsel %vm1535, %v1669, 0
        %v1749 = vsel %vm1535, %v1678, 0
        %v1752 = vsel %vm1535, %v1687, 0
        %v1755 = vsel %vm1535, %v1696, 0
        %v1758 = vsel %vm1535, %v1705, 0
        %v1761 = vsel %vm1535, %v1714, 0
        %v1764 = vsel %vm1535, %v1723, 0
        %v1767 = vsel %vm1535, %v1732, 0
        %1769 = vmatpush.bf16.msra.mxu0 0
        %1770 = vmatpush.bf16.msra.mxu0 0
        %1771 = vmatpush.bf16.msra.mxu0 0
        %1772 = vmatpush.bf16.msra.mxu0 0
        %1773 = vmatpush.bf16.msra.mxu0 0
        %1774 = vmatpush.bf16.msra.mxu0 0
        %1775 = vmatpush.bf16.msra.mxu0 %v1742
        %1776 = vmatpush.bf16.msra.mxu0 %v1741
        %1777 = vmatmul.bf16.gmra.mxu0 %v1746
        %v1778 = vpop.f32.mrf.mxu0
        %v1779 = vadd.f32 %v1570, %v1778
        %v1780 = vpop.f32.mrf.mxu0
        %v1781 = vadd.f32 %v1572, %v1780
        %1782 = vmatmul.bf16.gmra.mxu0 %v1749
        %v1783 = vpop.f32.mrf.mxu0
        %v1784 = vadd.f32 %v1575, %v1783
        %v1785 = vpop.f32.mrf.mxu0
        %v1786 = vadd.f32 %v1577, %v1785
        %1787 = vmatmul.bf16.gmra.mxu0 %v1752
        %v1788 = vpop.f32.mrf.mxu0
        %v1789 = vadd.f32 %v1580, %v1788
        %v1790 = vpop.f32.mrf.mxu0
        %v1791 = vadd.f32 %v1582, %v1790
        %1792 = vmatmul.bf16.gmra.mxu0 %v1755
        %v1793 = vpop.f32.mrf.mxu0
        %v1794 = vadd.f32 %v1585, %v1793
        %v1795 = vpop.f32.mrf.mxu0
        %v1796 = vadd.f32 %v1587, %v1795
        %1797 = vmatmul.bf16.gmra.mxu0 %v1758
        %v1798 = vpop.f32.mrf.mxu0
        %v1799 = vadd.f32 %v1590, %v1798
        %v1800 = vpop.f32.mrf.mxu0
        %v1801 = vadd.f32 %v1592, %v1800
        %1802 = vmatmul.bf16.gmra.mxu0 %v1761
        %v1803 = vpop.f32.mrf.mxu0
        %v1804 = vadd.f32 %v1595, %v1803
        %v1805 = vpop.f32.mrf.mxu0
        %v1806 = vadd.f32 %v1597, %v1805
        %1807 = vmatmul.bf16.gmra.mxu0 %v1764
        %v1808 = vpop.f32.mrf.mxu0
        %v1809 = vadd.f32 %v1600, %v1808
        %v1810 = vpop.f32.mrf.mxu0
        %v1811 = vadd.f32 %v1602, %v1810
        %1812 = vmatmul.bf16.gmra.mxu0 %v1767
        %v1813 = vpop.f32.mrf.mxu0
        %v1814 = vadd.f32 %v1605, %v1813
        %v1815 = vpop.f32.mrf.mxu0
        %v1816 = vadd.f32 %v1607, %v1815
        %1817 = vdwg.mxu0
        %v1818 = vld [vmem:[#allocation2 + $0x4] sm:$0xf]
        %v1819 = vld [vmem:[#allocation2 + $0x8] sm:$0xf]
        %v1820 = vld [vmem:[#allocation2 + $0xc] sm:$0xf]
        %v1821 = vld [vmem:[#allocation2 + $0x10] sm:$0xf]
        %v1822 = vld [vmem:[#allocation2 + $0x14] sm:$0xf]
        %v1823 = vld [vmem:[#allocation2 + $0x18] sm:$0xf]
        %v1824 = vld [vmem:[#allocation2 + $0x1c] sm:$0xf]
        %v1825 = vld [vmem:[#allocation2 + $0x20] sm:$0xf]
        %v1826 = vld [vmem:[#allocation2 + $0x24] sm:$0xf]
        %v1827 = vld [vmem:[#allocation2 + $0x28] sm:$0xf]
        %v1828 = vld [vmem:[#allocation2 + $0x2c] sm:$0xf]
        %v1829 = vld [vmem:[#allocation2 + $0x30] sm:$0xf]
        %v1830 = vld [vmem:[#allocation2 + $0x34] sm:$0xf]
        %v1831 = vld [vmem:[#allocation2 + $0x38] sm:$0xf]
        %v1832 = vld [vmem:[#allocation2 + $0x3c] sm:$0xf]
        %v1833 = vld [vmem:[#allocation2 + $0x40] sm:$0xf]
        %v1834 = vld [vmem:[#allocation2 + $0x44] sm:$0x1]
        %v1835 = vsel %vm1079, 1, 0
        %v1836 = vsel %vm1080, 1, 0
        %v1837 = vsel %vm1081, 1, 0
        %v1838 = vsel %vm1082, 1, 0
        %v1839 = vsel %vm1083, 1, 0
        %v1840 = vsel %vm1084, 1, 0
        %v1841 = vsel %vm1085, 1, 0
        %v1842 = vsel %vm1086, 1, 0
        %v1843 = vsel %vm1087, 1, 0
        %v1844 = vsel %vm1088, 1, 0
        %v1845 = vsel %vm1089, 1, 0
        %v1846 = vsel %vm1090, 1, 0
        %v1847 = vsel %vm1091, 1, 0
        %v1848 = vsel %vm1092, 1, 0
        %v1849 = vsel %vm1093, 1, 0
        %v1850 = vsel %vm1094, 1, 0
        %vm1851 = vcmp.eq.s32.totalorder %v1835, 1
        %vm1852 = vcmp.eq.s32.totalorder %v1836, 1
        %vm1853 = vcmp.eq.s32.totalorder %v1837, 1
        %vm1854 = vcmp.eq.s32.totalorder %v1838, 1
        %vm1855 = vcmp.eq.s32.totalorder %v1839, 1
        %vm1856 = vcmp.eq.s32.totalorder %v1840, 1
        %vm1857 = vcmp.eq.s32.totalorder %v1841, 1
        %vm1858 = vcmp.eq.s32.totalorder %v1842, 1
        %vm1859 = vcmp.eq.s32.totalorder %v1843, 1
        %vm1860 = vcmp.eq.s32.totalorder %v1844, 1
        %vm1861 = vcmp.eq.s32.totalorder %v1845, 1
        %vm1862 = vcmp.eq.s32.totalorder %v1846, 1
        %vm1863 = vcmp.eq.s32.totalorder %v1847, 1
        %vm1864 = vcmp.eq.s32.totalorder %v1848, 1
        %vm1865 = vcmp.eq.s32.totalorder %v1849, 1
        %vm1866 = vcmp.eq.s32.totalorder %v1850, 1
        %vm1867 = vmpackc.low %vm1851, %vm1851
        %vm1868 = vmpackc.low %vm1852, %vm1852
        %vm1869 = vmpackc.low %vm1853, %vm1853
        %vm1870 = vmpackc.low %vm1854, %vm1854
        %vm1871 = vmpackc.low %vm1855, %vm1855
        %vm1872 = vmpackc.low %vm1856, %vm1856
        %vm1873 = vmpackc.low %vm1857, %vm1857
        %vm1874 = vmpackc.low %vm1858, %vm1858
        %vm1875 = vmpackc.low %vm1859, %vm1859
        %vm1876 = vmpackc.low %vm1860, %vm1860
        %vm1877 = vmpackc.low %vm1861, %vm1861
        %vm1878 = vmpackc.low %vm1862, %vm1862
        %vm1879 = vmpackc.low %vm1863, %vm1863
        %vm1880 = vmpackc.low %vm1864, %vm1864
        %vm1881 = vmpackc.low %vm1865, %vm1865
        %vm1882 = vmpackc.low %vm1866, %vm1866
        %v1883 = vsel %vm1867, 65537, 0
        %v1884 = vsel %vm1868, 65537, 0
        %v1885 = vsel %vm1869, 65537, 0
        %v1886 = vsel %vm1870, 65537, 0
        %v1887 = vsel %vm1871, 65537, 0
        %v1888 = vsel %vm1872, 65537, 0
        %v1889 = vsel %vm1873, 65537, 0
        %v1890 = vsel %vm1874, 65537, 0
        %v1891 = vsel %vm1875, 65537, 0
        %v1892 = vsel %vm1876, 65537, 0
        %v1893 = vsel %vm1877, 65537, 0
        %v1894 = vsel %vm1878, 65537, 0
        %v1895 = vsel %vm1879, 65537, 0
        %v1896 = vsel %vm1880, 65537, 0
        %v1897 = vsel %vm1881, 65537, 0
        %v1898 = vsel %vm1882, 65537, 0
        %vm1899 = vsmask.f32 256
        %vm1900 = vsmask.f32 4368
        %vm1901 = vmor %vm1899, %vm1900
        %v1903 = vshrl.u32 %v1883, 16
        %v1905 = vrot.slane %v1903, 7
        %v1906 = vshll.u32 %v1883, 16
        %v1908 = vor.u32 %v1905, %v1906
        %v1909 = vrot.slane %v1905, 4
        %v1911 = vshrl.u32 %v1884, 16
        %v1913 = vrot.slane %v1911, 7
        %v1914 = vshll.u32 %v1884, 16
        %v1916 = vor.u32 %v1913, %v1914
        %v1917 = vsel %vm1901, %v1909, %v1916
        %v1918 = vrot.slane %v1913, 4
        %v1920 = vshrl.u32 %v1885, 16
        %v1922 = vrot.slane %v1920, 7
        %v1923 = vshll.u32 %v1885, 16
        %v1925 = vor.u32 %v1922, %v1923
        %v1926 = vsel %vm1901, %v1918, %v1925
        %v1927 = vrot.slane %v1922, 4
        %v1929 = vshrl.u32 %v1886, 16
        %v1931 = vrot.slane %v1929, 7
        %v1932 = vshll.u32 %v1886, 16
        %v1934 = vor.u32 %v1931, %v1932
        %v1935 = vsel %vm1901, %v1927, %v1934
        %v1936 = vrot.slane %v1931, 4
        %v1938 = vshrl.u32 %v1887, 16
        %v1940 = vrot.slane %v1938, 7
        %v1941 = vshll.u32 %v1887, 16
        %v1943 = vor.u32 %v1940, %v1941
        %v1944 = vsel %vm1901, %v1936, %v1943
        %v1945 = vrot.slane %v1940, 4
        %v1947 = vshrl.u32 %v1888, 16
        %v1949 = vrot.slane %v1947, 7
        %v1950 = vshll.u32 %v1888, 16
        %v1952 = vor.u32 %v1949, %v1950
        %v1953 = vsel %vm1901, %v1945, %v1952
        %v1954 = vrot.slane %v1949, 4
        %v1956 = vshrl.u32 %v1889, 16
        %v1958 = vrot.slane %v1956, 7
        %v1959 = vshll.u32 %v1889, 16
        %v1961 = vor.u32 %v1958, %v1959
        %v1962 = vsel %vm1901, %v1954, %v1961
        %v1963 = vrot.slane %v1958, 4
        %v1965 = vshrl.u32 %v1890, 16
        %v1967 = vrot.slane %v1965, 7
        %v1968 = vshll.u32 %v1890, 16
        %v1970 = vor.u32 %v1967, %v1968
        %v1971 = vsel %vm1901, %v1963, %v1970
        %v1972 = vrot.slane %v1967, 4
        %v1974 = vshrl.u32 %v1891, 16
        %v1976 = vrot.slane %v1974, 7
        %v1977 = vshll.u32 %v1891, 16
        %v1979 = vor.u32 %v1976, %v1977
        %v1980 = vsel %vm1901, %v1972, %v1979
        %v1981 = vrot.slane %v1976, 4
        %v1983 = vshrl.u32 %v1892, 16
        %v1985 = vrot.slane %v1983, 7
        %v1986 = vshll.u32 %v1892, 16
        %v1988 = vor.u32 %v1985, %v1986
        %v1989 = vsel %vm1901, %v1981, %v1988
        %v1990 = vrot.slane %v1985, 4
        %v1992 = vshrl.u32 %v1893, 16
        %v1994 = vrot.slane %v1992, 7
        %v1995 = vshll.u32 %v1893, 16
        %v1997 = vor.u32 %v1994, %v1995
        %v1998 = vsel %vm1901, %v1990, %v1997
        %v1999 = vrot.slane %v1994, 4
        %v2001 = vshrl.u32 %v1894, 16
        %v2003 = vrot.slane %v2001, 7
        %v2004 = vshll.u32 %v1894, 16
        %v2006 = vor.u32 %v2003, %v2004
        %v2007 = vsel %vm1901, %v1999, %v2006
        %v2008 = vrot.slane %v2003, 4
        %v2010 = vshrl.u32 %v1895, 16
        %v2012 = vrot.slane %v2010, 7
        %v2013 = vshll.u32 %v1895, 16
        %v2015 = vor.u32 %v2012, %v2013
        %v2016 = vsel %vm1901, %v2008, %v2015
        %v2017 = vrot.slane %v2012, 4
        %v2019 = vshrl.u32 %v1896, 16
        %v2021 = vrot.slane %v2019, 7
        %v2022 = vshll.u32 %v1896, 16
        %v2024 = vor.u32 %v2021, %v2022
        %v2025 = vsel %vm1901, %v2017, %v2024
        %v2026 = vrot.slane %v2021, 4
        %v2028 = vshrl.u32 %v1897, 16
        %v2030 = vrot.slane %v2028, 7
        %v2031 = vshll.u32 %v1897, 16
        %v2033 = vor.u32 %v2030, %v2031
        %v2034 = vsel %vm1901, %v2026, %v2033
        %v2035 = vrot.slane %v2030, 4
        %v2037 = vshrl.u32 %v1898, 16
        %v2039 = vrot.slane %v2037, 7
        %v2040 = vshll.u32 %v1898, 16
        %v2042 = vor.u32 %v2039, %v2040
        %v2043 = vsel %vm1901, %v2035, %v2042
        %v2044 = vrot.slane %v2039, 4
        %v2045 = vunpack.c.l.b16 %v1908
        %v2046 = vunpack.c.h.b16 %v1908
        %v2047 = vunpack.c.l.b16 0
        %v2048 = vunpack.c.h.b16 0
        %vm2049 = vcmp.ne.s32.totalorder %v2045, %v2047
        %vm2050 = vcmp.ne.s32.totalorder %v2046, %v2048
        %vm2051 = vmpackc.low %vm2050, %vm2049
        %v2052 = vunpack.c.l.b16 %v1917
        %v2053 = vunpack.c.h.b16 %v1917
        %v2054 = vunpack.c.l.b16 0
        %v2055 = vunpack.c.h.b16 0
        %vm2056 = vcmp.ne.s32.totalorder %v2052, %v2054
        %vm2057 = vcmp.ne.s32.totalorder %v2053, %v2055
        %vm2058 = vmpackc.low %vm2057, %vm2056
        %v2059 = vunpack.c.l.b16 %v1926
        %v2060 = vunpack.c.h.b16 %v1926
        %v2061 = vunpack.c.l.b16 0
        %v2062 = vunpack.c.h.b16 0
        %vm2063 = vcmp.ne.s32.totalorder %v2059, %v2061
        %vm2064 = vcmp.ne.s32.totalorder %v2060, %v2062
        %vm2065 = vmpackc.low %vm2064, %vm2063
        %v2066 = vunpack.c.l.b16 %v1935
        %v2067 = vunpack.c.h.b16 %v1935
        %v2068 = vunpack.c.l.b16 0
        %v2069 = vunpack.c.h.b16 0
        %vm2070 = vcmp.ne.s32.totalorder %v2066, %v2068
        %vm2071 = vcmp.ne.s32.totalorder %v2067, %v2069
        %vm2072 = vmpackc.low %vm2071, %vm2070
        %v2073 = vunpack.c.l.b16 %v1944
        %v2074 = vunpack.c.h.b16 %v1944
        %v2075 = vunpack.c.l.b16 0
        %v2076 = vunpack.c.h.b16 0
        %vm2077 = vcmp.ne.s32.totalorder %v2073, %v2075
        %vm2078 = vcmp.ne.s32.totalorder %v2074, %v2076
        %vm2079 = vmpackc.low %vm2078, %vm2077
        %v2080 = vunpack.c.l.b16 %v1953
        %v2081 = vunpack.c.h.b16 %v1953
        %v2082 = vunpack.c.l.b16 0
        %v2083 = vunpack.c.h.b16 0
        %vm2084 = vcmp.ne.s32.totalorder %v2080, %v2082
        %vm2085 = vcmp.ne.s32.totalorder %v2081, %v2083
        %vm2086 = vmpackc.low %vm2085, %vm2084
        %v2087 = vunpack.c.l.b16 %v1962
        %v2088 = vunpack.c.h.b16 %v1962
        %v2089 = vunpack.c.l.b16 0
        %v2090 = vunpack.c.h.b16 0
        %vm2091 = vcmp.ne.s32.totalorder %v2087, %v2089
        %vm2092 = vcmp.ne.s32.totalorder %v2088, %v2090
        %vm2093 = vmpackc.low %vm2092, %vm2091
        %v2094 = vunpack.c.l.b16 %v1971
        %v2095 = vunpack.c.h.b16 %v1971
        %v2096 = vunpack.c.l.b16 0
        %v2097 = vunpack.c.h.b16 0
        %vm2098 = vcmp.ne.s32.totalorder %v2094, %v2096
        %vm2099 = vcmp.ne.s32.totalorder %v2095, %v2097
        %vm2100 = vmpackc.low %vm2099, %vm2098
        %v2101 = vunpack.c.l.b16 %v1980
        %v2102 = vunpack.c.h.b16 %v1980
        %v2103 = vunpack.c.l.b16 0
        %v2104 = vunpack.c.h.b16 0
        %vm2105 = vcmp.ne.s32.totalorder %v2101, %v2103
        %vm2106 = vcmp.ne.s32.totalorder %v2102, %v2104
        %vm2107 = vmpackc.low %vm2106, %vm2105
        %v2108 = vunpack.c.l.b16 %v1989
        %v2109 = vunpack.c.h.b16 %v1989
        %v2110 = vunpack.c.l.b16 0
        %v2111 = vunpack.c.h.b16 0
        %vm2112 = vcmp.ne.s32.totalorder %v2108, %v2110
        %vm2113 = vcmp.ne.s32.totalorder %v2109, %v2111
        %vm2114 = vmpackc.low %vm2113, %vm2112
        %v2115 = vunpack.c.l.b16 %v1998
        %v2116 = vunpack.c.h.b16 %v1998
        %v2117 = vunpack.c.l.b16 0
        %v2118 = vunpack.c.h.b16 0
        %vm2119 = vcmp.ne.s32.totalorder %v2115, %v2117
        %vm2120 = vcmp.ne.s32.totalorder %v2116, %v2118
        %vm2121 = vmpackc.low %vm2120, %vm2119
        %v2122 = vunpack.c.l.b16 %v2007
        %v2123 = vunpack.c.h.b16 %v2007
        %v2124 = vunpack.c.l.b16 0
        %v2125 = vunpack.c.h.b16 0
        %vm2126 = vcmp.ne.s32.totalorder %v2122, %v2124
        %vm2127 = vcmp.ne.s32.totalorder %v2123, %v2125
        %vm2128 = vmpackc.low %vm2127, %vm2126
        %v2129 = vunpack.c.l.b16 %v2016
        %v2130 = vunpack.c.h.b16 %v2016
        %v2131 = vunpack.c.l.b16 0
        %v2132 = vunpack.c.h.b16 0
        %vm2133 = vcmp.ne.s32.totalorder %v2129, %v2131
        %vm2134 = vcmp.ne.s32.totalorder %v2130, %v2132
        %vm2135 = vmpackc.low %vm2134, %vm2133
        %v2136 = vunpack.c.l.b16 %v2025
        %v2137 = vunpack.c.h.b16 %v2025
        %v2138 = vunpack.c.l.b16 0
        %v2139 = vunpack.c.h.b16 0
        %vm2140 = vcmp.ne.s32.totalorder %v2136, %v2138
        %vm2141 = vcmp.ne.s32.totalorder %v2137, %v2139
        %vm2142 = vmpackc.low %vm2141, %vm2140
        %v2143 = vunpack.c.l.b16 %v2034
        %v2144 = vunpack.c.h.b16 %v2034
        %v2145 = vunpack.c.l.b16 0
        %v2146 = vunpack.c.h.b16 0
        %vm2147 = vcmp.ne.s32.totalorder %v2143, %v2145
        %vm2148 = vcmp.ne.s32.totalorder %v2144, %v2146
        %vm2149 = vmpackc.low %vm2148, %vm2147
        %v2150 = vunpack.c.l.b16 %v2043
        %v2151 = vunpack.c.h.b16 %v2043
        %v2152 = vunpack.c.l.b16 0
        %v2153 = vunpack.c.h.b16 0
        %vm2154 = vcmp.ne.s32.totalorder %v2150, %v2152
        %vm2155 = vcmp.ne.s32.totalorder %v2151, %v2153
        %vm2156 = vmpackc.low %vm2155, %vm2154
        %v2157 = vunpack.c.l.b16 %v2044
        %v2158 = vunpack.c.h.b16 %v2044
        %v2159 = vunpack.c.l.b16 0
        %v2160 = vunpack.c.h.b16 0
        %vm2161 = vcmp.ne.s32.totalorder %v2157, %v2159
        %vm2162 = vcmp.ne.s32.totalorder %v2158, %v2160
        %vm2163 = vmpackc.low %vm2162, %vm2161
        %v2164 = vsel %vm2051, %v1818, 0
        %v2165 = vsel %vm2058, %v1819, 0
        %v2166 = vsel %vm2065, %v1820, 0
        %v2167 = vsel %vm2072, %v1821, 0
        %v2168 = vsel %vm2079, %v1822, 0
        %v2169 = vsel %vm2086, %v1823, 0
        %v2170 = vsel %vm2093, %v1824, 0
        %v2171 = vsel %vm2100, %v1825, 0
        %v2172 = vsel %vm2107, %v1826, 0
        %v2173 = vsel %vm2114, %v1827, 0
        %v2174 = vsel %vm2121, %v1828, 0
        %v2175 = vsel %vm2128, %v1829, 0
        %v2176 = vsel %vm2135, %v1830, 0
        %v2177 = vsel %vm2142, %v1831, 0
        %v2178 = vsel %vm2149, %v1832, 0
        %v2179 = vsel %vm2156, %v1833, 0
        %v2180 = vsel %vm2163, %v1834, 0
        %s2181 = scalar_lea.vmem [#allocation8], 32
        %v2182 = vld [vmem:[%s2181] sm:$0xf]
        %v2183 = vld [vmem:[%s2181 + $0x4] sm:$0xf]
        %v2184 = vld [vmem:[%s2181 + $0x8] sm:$0xf]
        %v2185 = vld [vmem:[%s2181 + $0xc] sm:$0xf]
        %v2203 = vunpack.c.l.b16 %v2164
        %v2204 = vunpack.c.l.b16 %v2165
        %v2205 = vunpack.c.l.b16 %v2166
        %v2206 = vunpack.c.l.b16 %v2167
        %v2207 = vunpack.c.l.b16 %v2168
        %v2208 = vunpack.c.l.b16 %v2169
        %v2209 = vunpack.c.l.b16 %v2170
        %v2210 = vunpack.c.l.b16 %v2171
        %v2211 = vunpack.c.l.b16 %v2172
        %v2212 = vunpack.c.l.b16 %v2173
        %v2213 = vunpack.c.l.b16 %v2174
        %v2214 = vunpack.c.l.b16 %v2175
        %v2215 = vunpack.c.l.b16 %v2176
        %v2216 = vunpack.c.l.b16 %v2177
        %v2217 = vunpack.c.l.b16 %v2178
        %v2218 = vunpack.c.l.b16 %v2179
        %v2219 = vunpack.c.l.b16 %v2180
        %v2220 = vpack.c.b16 %v2204, %v2203
        %v2221 = vpack.c.b16 %v2206, %v2205
        %v2222 = vpack.c.b16 %v2208, %v2207
        %v2223 = vpack.c.b16 %v2210, %v2209
        %v2224 = vpack.c.b16 %v2212, %v2211
        %v2225 = vpack.c.b16 %v2214, %v2213
        %v2226 = vpack.c.b16 %v2216, %v2215
        %v2227 = vpack.c.b16 %v2218, %v2217
        %v2228 = vpack.c.b16 %v2219, %v2219
        %vm2229 = vsmask.f32 7424
        %v2231 = vshrl.u32 %v2220, 16
        %v2233 = vshll.u32 %v2220, 16
        %v2235 = vrot.slane %v2233, 1
        %v2236 = vor.u32 %v2231, %v2235
        %v2238 = vshll.u32 %v2221, 16
        %v2240 = vrot.slane %v2238, 1
        %v2241 = vsel %vm2229, %v2236, %v2240
        %v2242 = vshrl.u32 %v2221, 16
        %v2244 = vor.u32 %v2242, %v2240
        %v2246 = vshll.u32 %v2222, 16
        %v2248 = vrot.slane %v2246, 1
        %v2249 = vsel %vm2229, %v2244, %v2248
        %v2250 = vshrl.u32 %v2222, 16
        %v2252 = vor.u32 %v2250, %v2248
        %v2254 = vshll.u32 %v2223, 16
        %v2256 = vrot.slane %v2254, 1
        %v2257 = vsel %vm2229, %v2252, %v2256
        %v2258 = vshrl.u32 %v2223, 16
        %v2260 = vor.u32 %v2258, %v2256
        %v2262 = vshll.u32 %v2224, 16
        %v2264 = vrot.slane %v2262, 1
        %v2265 = vsel %vm2229, %v2260, %v2264
        %v2266 = vshrl.u32 %v2224, 16
        %v2268 = vor.u32 %v2266, %v2264
        %v2270 = vshll.u32 %v2225, 16
        %v2272 = vrot.slane %v2270, 1
        %v2273 = vsel %vm2229, %v2268, %v2272
        %v2274 = vshrl.u32 %v2225, 16
        %v2276 = vor.u32 %v2274, %v2272
        %v2278 = vshll.u32 %v2226, 16
        %v2280 = vrot.slane %v2278, 1
        %v2281 = vsel %vm2229, %v2276, %v2280
        %v2282 = vshrl.u32 %v2226, 16
        %v2284 = vor.u32 %v2282, %v2280
        %v2286 = vshll.u32 %v2227, 16
        %v2288 = vrot.slane %v2286, 1
        %v2289 = vsel %vm2229, %v2284, %v2288
        %v2290 = vshrl.u32 %v2227, 16
        %v2292 = vor.u32 %v2290, %v2288
        %v2294 = vshll.u32 %v2228, 16
        %v2296 = vrot.slane %v2294, 1
        %v2297 = vsel %vm2229, %v2292, %v2296
        %v2302 = vunpack.c.l.b16 %v2182
        %v2303 = vunpack.c.l.b16 %v2183
        %v2304 = vunpack.c.l.b16 %v2184
        %v2305 = vunpack.c.l.b16 %v2185
        %v2306 = vpack.c.b16 %v2303, %v2302
        %v2307 = vpack.c.b16 %v2305, %v2304
        %v2311 = vsel %vm1535, %v2241, 0
        %v2314 = vsel %vm1535, %v2249, 0
        %v2317 = vsel %vm1535, %v2257, 0
        %v2320 = vsel %vm1535, %v2265, 0
        %v2323 = vsel %vm1535, %v2273, 0
        %v2326 = vsel %vm1535, %v2281, 0
        %v2329 = vsel %vm1535, %v2289, 0
        %v2332 = vsel %vm1535, %v2297, 0
        %2334 = vmatpush.bf16.msra.mxu0 0
        %2335 = vmatpush.bf16.msra.mxu0 0
        %2336 = vmatpush.bf16.msra.mxu0 0
        %2337 = vmatpush.bf16.msra.mxu0 0
        %2338 = vmatpush.bf16.msra.mxu0 0
        %2339 = vmatpush.bf16.msra.mxu0 0
        %2340 = vmatpush.bf16.msra.mxu0 %v2307
        %2341 = vmatpush.bf16.msra.mxu0 %v2306
        %2342 = vmatmul.bf16.gmra.mxu0 %v2311
        %v2343 = vpop.f32.mrf.mxu0
        %v2344 = vadd.f32 0.0, %v2343
        %v2345 = vpop.f32.mrf.mxu0
        %v2346 = vadd.f32 0.0, %v2345
        %2347 = vmatmul.bf16.gmra.mxu0 %v2314
        %v2348 = vpop.f32.mrf.mxu0
        %v2349 = vadd.f32 0.0, %v2348
        %v2350 = vpop.f32.mrf.mxu0
        %v2351 = vadd.f32 0.0, %v2350
        %2352 = vmatmul.bf16.gmra.mxu0 %v2317
        %v2353 = vpop.f32.mrf.mxu0
        %v2354 = vadd.f32 0.0, %v2353
        %v2355 = vpop.f32.mrf.mxu0
        %v2356 = vadd.f32 0.0, %v2355
        %2357 = vmatmul.bf16.gmra.mxu0 %v2320
        %v2358 = vpop.f32.mrf.mxu0
        %v2359 = vadd.f32 0.0, %v2358
        %v2360 = vpop.f32.mrf.mxu0
        %v2361 = vadd.f32 0.0, %v2360
        %2362 = vmatmul.bf16.gmra.mxu0 %v2323
        %v2363 = vpop.f32.mrf.mxu0
        %v2364 = vadd.f32 0.0, %v2363
        %v2365 = vpop.f32.mrf.mxu0
        %v2366 = vadd.f32 0.0, %v2365
        %2367 = vmatmul.bf16.gmra.mxu0 %v2326
        %v2368 = vpop.f32.mrf.mxu0
        %v2369 = vadd.f32 0.0, %v2368
        %v2370 = vpop.f32.mrf.mxu0
        %v2371 = vadd.f32 0.0, %v2370
        %2372 = vmatmul.bf16.gmra.mxu0 %v2329
        %v2373 = vpop.f32.mrf.mxu0
        %v2374 = vadd.f32 0.0, %v2373
        %v2375 = vpop.f32.mrf.mxu0
        %v2376 = vadd.f32 0.0, %v2375
        %2377 = vmatmul.bf16.gmra.mxu0 %v2332
        %v2378 = vpop.f32.mrf.mxu0
        %v2379 = vadd.f32 0.0, %v2378
        %v2380 = vpop.f32.mrf.mxu0
        %v2381 = vadd.f32 0.0, %v2380
        %2382 = vdwg.mxu0
        %v2383 = vadd.f32 %v1779, %v2344
        %v2384 = vadd.f32 %v1781, %v2346
        %v2385 = vadd.f32 %v1784, %v2349
        %v2386 = vadd.f32 %v1786, %v2351
        %v2387 = vadd.f32 %v1789, %v2354
        %v2388 = vadd.f32 %v1791, %v2356
        %v2389 = vadd.f32 %v1794, %v2359
        %v2390 = vadd.f32 %v1796, %v2361
        %v2391 = vadd.f32 %v1799, %v2364
        %v2392 = vadd.f32 %v1801, %v2366
        %v2393 = vadd.f32 %v1804, %v2369
        %v2394 = vadd.f32 %v1806, %v2371
        %v2395 = vadd.f32 %v1809, %v2374
        %v2396 = vadd.f32 %v1811, %v2376
        %v2397 = vadd.f32 %v1814, %v2379
        %v2398 = vadd.f32 %v1816, %v2381
        %v2399 = vld [vmem:[#allocation2 + $0x8] sm:$0x8]
        %v2400 = vld [vmem:[#allocation2 + $0xc] sm:$0xf]
        %v2401 = vld [vmem:[#allocation2 + $0x10] sm:$0xf]
        %v2402 = vld [vmem:[#allocation2 + $0x14] sm:$0xf]
        %v2403 = vld [vmem:[#allocation2 + $0x18] sm:$0xf]
        %v2404 = vld [vmem:[#allocation2 + $0x1c] sm:$0xf]
        %v2405 = vld [vmem:[#allocation2 + $0x20] sm:$0xf]
        %v2406 = vld [vmem:[#allocation2 + $0x24] sm:$0xf]
        %v2407 = vld [vmem:[#allocation2 + $0x28] sm:$0xf]
        %v2408 = vld [vmem:[#allocation2 + $0x2c] sm:$0xf]
        %v2409 = vld [vmem:[#allocation2 + $0x30] sm:$0xf]
        %v2410 = vld [vmem:[#allocation2 + $0x34] sm:$0xf]
        %v2411 = vld [vmem:[#allocation2 + $0x38] sm:$0xf]
        %v2412 = vld [vmem:[#allocation2 + $0x3c] sm:$0xf]
        %v2413 = vld [vmem:[#allocation2 + $0x40] sm:$0xf]
        %v2414 = vld [vmem:[#allocation2 + $0x44] sm:$0xf]
        %v2415 = vld [vmem:[#allocation2 + $0x48] sm:$0xf]
        %v2416 = vsel %vm1344, %v2399, 0
        %v2417 = vsel %vm1351, %v2400, 0
        %v2418 = vsel %vm1358, %v2401, 0
        %v2419 = vsel %vm1365, %v2402, 0
        %v2420 = vsel %vm1372, %v2403, 0
        %v2421 = vsel %vm1379, %v2404, 0
        %v2422 = vsel %vm1386, %v2405, 0
        %v2423 = vsel %vm1393, %v2406, 0
        %v2424 = vsel %vm1400, %v2407, 0
        %v2425 = vsel %vm1407, %v2408, 0
        %v2426 = vsel %vm1414, %v2409, 0
        %v2427 = vsel %vm1421, %v2410, 0
        %v2428 = vsel %vm1428, %v2411, 0
        %v2429 = vsel %vm1435, %v2412, 0
        %v2430 = vsel %vm1442, %v2413, 0
        %v2431 = vsel %vm1449, %v2414, 0
        %v2432 = vsel %vm1456, %v2415, 0
        %s2433 = scalar_lea.vmem [#allocation8], 48
        %v2434 = vld [vmem:[%s2433] sm:$0xf]
        %v2435 = vld [vmem:[%s2433 + $0x4] sm:$0xf]
        %v2436 = vld [vmem:[%s2433 + $0x8] sm:$0xf]
        %v2437 = vld [vmem:[%s2433 + $0xc] sm:$0xf]
        %v2455 = vunpack.c.l.b16 %v2416
        %v2456 = vunpack.c.l.b16 %v2417
        %v2457 = vunpack.c.l.b16 %v2418
        %v2458 = vunpack.c.l.b16 %v2419
        %v2459 = vunpack.c.l.b16 %v2420
        %v2460 = vunpack.c.l.b16 %v2421
        %v2461 = vunpack.c.l.b16 %v2422
        %v2462 = vunpack.c.l.b16 %v2423
        %v2463 = vunpack.c.l.b16 %v2424
        %v2464 = vunpack.c.l.b16 %v2425
        %v2465 = vunpack.c.l.b16 %v2426
        %v2466 = vunpack.c.l.b16 %v2427
        %v2467 = vunpack.c.l.b16 %v2428
        %v2468 = vunpack.c.l.b16 %v2429
        %v2469 = vunpack.c.l.b16 %v2430
        %v2470 = vunpack.c.l.b16 %v2431
        %v2471 = vunpack.c.l.b16 %v2432
        %v2472 = vpack.c.b16 %v2456, %v2455
        %v2473 = vpack.c.b16 %v2458, %v2457
        %v2474 = vpack.c.b16 %v2460, %v2459
        %v2475 = vpack.c.b16 %v2462, %v2461
        %v2476 = vpack.c.b16 %v2464, %v2463
        %v2477 = vpack.c.b16 %v2466, %v2465
        %v2478 = vpack.c.b16 %v2468, %v2467
        %v2479 = vpack.c.b16 %v2470, %v2469
        %v2480 = vpack.c.b16 %v2471, %v2471
        %v2482 = vshrl.u32 %v2472, 16
        %v2484 = vrot.slane %v2482, 3
        %v2485 = vshll.u32 %v2472, 16
        %v2487 = vrot.slane %v2485, 4
        %v2488 = vor.u32 %v2484, %v2487
        %v2490 = vshrl.u32 %v2473, 16
        %v2492 = vrot.slane %v2490, 3
        %v2493 = vshll.u32 %v2473, 16
        %v2495 = vrot.slane %v2493, 4
        %v2496 = vor.u32 %v2492, %v2495
        %v2497 = vsel %vm1652, %v2488, %v2496
        %v2499 = vshrl.u32 %v2474, 16
        %v2501 = vrot.slane %v2499, 3
        %v2502 = vshll.u32 %v2474, 16
        %v2504 = vrot.slane %v2502, 4
        %v2505 = vor.u32 %v2501, %v2504
        %v2506 = vsel %vm1652, %v2496, %v2505
        %v2508 = vshrl.u32 %v2475, 16
        %v2510 = vrot.slane %v2508, 3
        %v2511 = vshll.u32 %v2475, 16
        %v2513 = vrot.slane %v2511, 4
        %v2514 = vor.u32 %v2510, %v2513
        %v2515 = vsel %vm1652, %v2505, %v2514
        %v2517 = vshrl.u32 %v2476, 16
        %v2519 = vrot.slane %v2517, 3
        %v2520 = vshll.u32 %v2476, 16
        %v2522 = vrot.slane %v2520, 4
        %v2523 = vor.u32 %v2519, %v2522
        %v2524 = vsel %vm1652, %v2514, %v2523
        %v2526 = vshrl.u32 %v2477, 16
        %v2528 = vrot.slane %v2526, 3
        %v2529 = vshll.u32 %v2477, 16
        %v2531 = vrot.slane %v2529, 4
        %v2532 = vor.u32 %v2528, %v2531
        %v2533 = vsel %vm1652, %v2523, %v2532
        %v2535 = vshrl.u32 %v2478, 16
        %v2537 = vrot.slane %v2535, 3
        %v2538 = vshll.u32 %v2478, 16
        %v2540 = vrot.slane %v2538, 4
        %v2541 = vor.u32 %v2537, %v2540
        %v2542 = vsel %vm1652, %v2532, %v2541
        %v2544 = vshrl.u32 %v2479, 16
        %v2546 = vrot.slane %v2544, 3
        %v2547 = vshll.u32 %v2479, 16
        %v2549 = vrot.slane %v2547, 4
        %v2550 = vor.u32 %v2546, %v2549
        %v2551 = vsel %vm1652, %v2541, %v2550
        %v2553 = vshrl.u32 %v2480, 16
        %v2555 = vrot.slane %v2553, 3
        %v2556 = vshll.u32 %v2480, 16
        %v2558 = vrot.slane %v2556, 4
        %v2559 = vor.u32 %v2555, %v2558
        %v2560 = vsel %vm1652, %v2550, %v2559
        %v2565 = vunpack.c.l.b16 %v2434
        %v2566 = vunpack.c.l.b16 %v2435
        %v2567 = vunpack.c.l.b16 %v2436
        %v2568 = vunpack.c.l.b16 %v2437
        %v2569 = vpack.c.b16 %v2566, %v2565
        %v2570 = vpack.c.b16 %v2568, %v2567
        %v2574 = vsel %vm1535, %v2497, 0
        %v2577 = vsel %vm1535, %v2506, 0
        %v2580 = vsel %vm1535, %v2515, 0
        %v2583 = vsel %vm1535, %v2524, 0
        %v2586 = vsel %vm1535, %v2533, 0
        %v2589 = vsel %vm1535, %v2542, 0
        %v2592 = vsel %vm1535, %v2551, 0
        %v2595 = vsel %vm1535, %v2560, 0
        %2597 = vmatpush.bf16.msra.mxu0 0
        %2598 = vmatpush.bf16.msra.mxu0 0
        %2599 = vmatpush.bf16.msra.mxu0 0
        %2600 = vmatpush.bf16.msra.mxu0 0
        %2601 = vmatpush.bf16.msra.mxu0 0
        %2602 = vmatpush.bf16.msra.mxu0 0
        %2603 = vmatpush.bf16.msra.mxu0 %v2570
        %2604 = vmatpush.bf16.msra.mxu0 %v2569
        %2605 = vmatmul.bf16.gmra.mxu0 %v2574
        %v2606 = vpop.f32.mrf.mxu0
        %v2607 = vadd.f32 0.0, %v2606
        %v2608 = vpop.f32.mrf.mxu0
        %v2609 = vadd.f32 0.0, %v2608
        %2610 = vmatmul.bf16.gmra.mxu0 %v2577
        %v2611 = vpop.f32.mrf.mxu0
        %v2612 = vadd.f32 0.0, %v2611
        %v2613 = vpop.f32.mrf.mxu0
        %v2614 = vadd.f32 0.0, %v2613
        %2615 = vmatmul.bf16.gmra.mxu0 %v2580
        %v2616 = vpop.f32.mrf.mxu0
        %v2617 = vadd.f32 0.0, %v2616
        %v2618 = vpop.f32.mrf.mxu0
        %v2619 = vadd.f32 0.0, %v2618
        %2620 = vmatmul.bf16.gmra.mxu0 %v2583
        %v2621 = vpop.f32.mrf.mxu0
        %v2622 = vadd.f32 0.0, %v2621
        %v2623 = vpop.f32.mrf.mxu0
        %v2624 = vadd.f32 0.0, %v2623
        %2625 = vmatmul.bf16.gmra.mxu0 %v2586
        %v2626 = vpop.f32.mrf.mxu0
        %v2627 = vadd.f32 0.0, %v2626
        %v2628 = vpop.f32.mrf.mxu0
        %v2629 = vadd.f32 0.0, %v2628
        %2630 = vmatmul.bf16.gmra.mxu0 %v2589
        %v2631 = vpop.f32.mrf.mxu0
        %v2632 = vadd.f32 0.0, %v2631
        %v2633 = vpop.f32.mrf.mxu0
        %v2634 = vadd.f32 0.0, %v2633
        %2635 = vmatmul.bf16.gmra.mxu0 %v2592
        %v2636 = vpop.f32.mrf.mxu0
        %v2637 = vadd.f32 0.0, %v2636
        %v2638 = vpop.f32.mrf.mxu0
        %v2639 = vadd.f32 0.0, %v2638
        %2640 = vmatmul.bf16.gmra.mxu0 %v2595
        %v2641 = vpop.f32.mrf.mxu0
        %v2642 = vadd.f32 0.0, %v2641
        %v2643 = vpop.f32.mrf.mxu0
        %v2644 = vadd.f32 0.0, %v2643
        %2645 = vdwg.mxu0
        %v2646 = vadd.f32 %v2383, %v2607
        %v2647 = vadd.f32 %v2384, %v2609
        %v2648 = vadd.f32 %v2385, %v2612
        %v2649 = vadd.f32 %v2386, %v2614
        %v2650 = vadd.f32 %v2387, %v2617
        %v2651 = vadd.f32 %v2388, %v2619
        %v2652 = vadd.f32 %v2389, %v2622
        %v2653 = vadd.f32 %v2390, %v2624
        %v2654 = vadd.f32 %v2391, %v2627
        %v2655 = vadd.f32 %v2392, %v2629
        %v2656 = vadd.f32 %v2393, %v2632
        %v2657 = vadd.f32 %v2394, %v2634
        %v2658 = vadd.f32 %v2395, %v2637
        %v2659 = vadd.f32 %v2396, %v2639
        %v2660 = vadd.f32 %v2397, %v2642
        %v2661 = vadd.f32 %v2398, %v2644
        %s2662 = scalar_lea.vmem [#allocation8], 64
        %v2663 = vld [vmem:[%s2662] sm:$0xf]
        %v2664 = vld [vmem:[%s2662 + $0x4] sm:$0xf]
        %v2665 = vld [vmem:[%s2662 + $0x8] sm:$0xf]
        %v2666 = vld [vmem:[%s2662 + $0xc] sm:$0xf]
        %v2683 = vunpack.c.l.b16 %v2400
        %v2684 = vunpack.c.l.b16 %v2401
        %v2685 = vunpack.c.l.b16 %v2402
        %v2686 = vunpack.c.l.b16 %v2403
        %v2687 = vunpack.c.l.b16 %v2404
        %v2688 = vunpack.c.l.b16 %v2405
        %v2689 = vunpack.c.l.b16 %v2406
        %v2690 = vunpack.c.l.b16 %v2407
        %v2691 = vunpack.c.l.b16 %v2408
        %v2692 = vunpack.c.l.b16 %v2409
        %v2693 = vunpack.c.l.b16 %v2410
        %v2694 = vunpack.c.l.b16 %v2411
        %v2695 = vunpack.c.l.b16 %v2412
        %v2696 = vunpack.c.l.b16 %v2413
        %v2697 = vunpack.c.l.b16 %v2414
        %v2698 = vunpack.c.l.b16 %v2415
        %v2699 = vpack.c.b16 %v2684, %v2683
        %v2700 = vpack.c.b16 %v2686, %v2685
        %v2701 = vpack.c.b16 %v2688, %v2687
        %v2702 = vpack.c.b16 %v2690, %v2689
        %v2703 = vpack.c.b16 %v2692, %v2691
        %v2704 = vpack.c.b16 %v2694, %v2693
        %v2705 = vpack.c.b16 %v2696, %v2695
        %v2706 = vpack.c.b16 %v2698, %v2697
        %v2711 = vunpack.c.l.b16 %v2663
        %v2712 = vunpack.c.l.b16 %v2664
        %v2713 = vunpack.c.l.b16 %v2665
        %v2714 = vunpack.c.l.b16 %v2666
        %v2715 = vpack.c.b16 %v2712, %v2711
        %v2716 = vpack.c.b16 %v2714, %v2713
        %v2720 = vsel %vm1535, %v2699, 0
        %v2723 = vsel %vm1535, %v2700, 0
        %v2726 = vsel %vm1535, %v2701, 0
        %v2729 = vsel %vm1535, %v2702, 0
        %v2732 = vsel %vm1535, %v2703, 0
        %v2735 = vsel %vm1535, %v2704, 0
        %v2738 = vsel %vm1535, %v2705, 0
        %v2741 = vsel %vm1535, %v2706, 0
        %2743 = vmatpush.bf16.msra.mxu0 0
        %2744 = vmatpush.bf16.msra.mxu0 0
        %2745 = vmatpush.bf16.msra.mxu0 0
        %2746 = vmatpush.bf16.msra.mxu0 0
        %2747 = vmatpush.bf16.msra.mxu0 0
        %2748 = vmatpush.bf16.msra.mxu0 0
        %2749 = vmatpush.bf16.msra.mxu0 %v2716
        %2750 = vmatpush.bf16.msra.mxu0 %v2715
        %2751 = vmatmul.bf16.gmra.mxu0 %v2720
        %v2752 = vpop.f32.mrf.mxu0
        %v2753 = vadd.f32 0.0, %v2752
        %v2754 = vpop.f32.mrf.mxu0
        %v2755 = vadd.f32 0.0, %v2754
        %2756 = vmatmul.bf16.gmra.mxu0 %v2723
        %v2757 = vpop.f32.mrf.mxu0
        %v2758 = vadd.f32 0.0, %v2757
        %v2759 = vpop.f32.mrf.mxu0
        %v2760 = vadd.f32 0.0, %v2759
        %2761 = vmatmul.bf16.gmra.mxu0 %v2726
        %v2762 = vpop.f32.mrf.mxu0
        %v2763 = vadd.f32 0.0, %v2762
        %v2764 = vpop.f32.mrf.mxu0
        %v2765 = vadd.f32 0.0, %v2764
        %2766 = vmatmul.bf16.gmra.mxu0 %v2729
        %v2767 = vpop.f32.mrf.mxu0
        %v2768 = vadd.f32 0.0, %v2767
        %v2769 = vpop.f32.mrf.mxu0
        %v2770 = vadd.f32 0.0, %v2769
        %2771 = vmatmul.bf16.gmra.mxu0 %v2732
        %v2772 = vpop.f32.mrf.mxu0
        %v2773 = vadd.f32 0.0, %v2772
        %v2774 = vpop.f32.mrf.mxu0
        %v2775 = vadd.f32 0.0, %v2774
        %2776 = vmatmul.bf16.gmra.mxu0 %v2735
        %v2777 = vpop.f32.mrf.mxu0
        %v2778 = vadd.f32 0.0, %v2777
        %v2779 = vpop.f32.mrf.mxu0
        %v2780 = vadd.f32 0.0, %v2779
        %2781 = vmatmul.bf16.gmra.mxu0 %v2738
        %v2782 = vpop.f32.mrf.mxu0
        %v2783 = vadd.f32 0.0, %v2782
        %v2784 = vpop.f32.mrf.mxu0
        %v2785 = vadd.f32 0.0, %v2784
        %2786 = vmatmul.bf16.gmra.mxu0 %v2741
        %v2787 = vpop.f32.mrf.mxu0
        %v2788 = vadd.f32 0.0, %v2787
        %v2789 = vpop.f32.mrf.mxu0
        %v2790 = vadd.f32 0.0, %v2789
        %2791 = vdwg.mxu0
        %v2792 = vadd.f32 %v2646, %v2753
        %v2793 = vadd.f32 %v2647, %v2755
        %v2794 = vadd.f32 %v2648, %v2758
        %v2795 = vadd.f32 %v2649, %v2760
        %v2796 = vadd.f32 %v2650, %v2763
        %v2797 = vadd.f32 %v2651, %v2765
        %v2798 = vadd.f32 %v2652, %v2768
        %v2799 = vadd.f32 %v2653, %v2770
        %v2800 = vadd.f32 %v2654, %v2773
        %v2801 = vadd.f32 %v2655, %v2775
        %v2802 = vadd.f32 %v2656, %v2778
        %v2803 = vadd.f32 %v2657, %v2780
        %v2804 = vadd.f32 %v2658, %v2783
        %v2805 = vadd.f32 %v2659, %v2785
        %v2806 = vadd.f32 %v2660, %v2788
        %v2807 = vadd.f32 %v2661, %v2790
        %v2808 = vld [vmem:[#allocation2 + $0xc] sm:$0xf]
        %v2809 = vld [vmem:[#allocation2 + $0x10] sm:$0xf]
        %v2810 = vld [vmem:[#allocation2 + $0x14] sm:$0xf]
        %v2811 = vld [vmem:[#allocation2 + $0x18] sm:$0xf]
        %v2812 = vld [vmem:[#allocation2 + $0x1c] sm:$0xf]
        %v2813 = vld [vmem:[#allocation2 + $0x20] sm:$0xf]
        %v2814 = vld [vmem:[#allocation2 + $0x24] sm:$0xf]
        %v2815 = vld [vmem:[#allocation2 + $0x28] sm:$0xf]
        %v2816 = vld [vmem:[#allocation2 + $0x2c] sm:$0xf]
        %v2817 = vld [vmem:[#allocation2 + $0x30] sm:$0xf]
        %v2818 = vld [vmem:[#allocation2 + $0x34] sm:$0xf]
        %v2819 = vld [vmem:[#allocation2 + $0x38] sm:$0xf]
        %v2820 = vld [vmem:[#allocation2 + $0x3c] sm:$0xf]
        %v2821 = vld [vmem:[#allocation2 + $0x40] sm:$0xf]
        %v2822 = vld [vmem:[#allocation2 + $0x44] sm:$0xf]
        %v2823 = vld [vmem:[#allocation2 + $0x48] sm:$0xf]
        %v2824 = vld [vmem:[#allocation2 + $0x4c] sm:$0x1]
        %v2825 = vsel %vm2051, %v2808, 0
        %v2826 = vsel %vm2058, %v2809, 0
        %v2827 = vsel %vm2065, %v2810, 0
        %v2828 = vsel %vm2072, %v2811, 0
        %v2829 = vsel %vm2079, %v2812, 0
        %v2830 = vsel %vm2086, %v2813, 0
        %v2831 = vsel %vm2093, %v2814, 0
        %v2832 = vsel %vm2100, %v2815, 0
        %v2833 = vsel %vm2107, %v2816, 0
        %v2834 = vsel %vm2114, %v2817, 0
        %v2835 = vsel %vm2121, %v2818, 0
        %v2836 = vsel %vm2128, %v2819, 0
        %v2837 = vsel %vm2135, %v2820, 0
        %v2838 = vsel %vm2142, %v2821, 0
        %v2839 = vsel %vm2149, %v2822, 0
        %v2840 = vsel %vm2156, %v2823, 0
        %v2841 = vsel %vm2163, %v2824, 0
        %s2842 = scalar_lea.vmem [#allocation8], 80
        %v2843 = vld [vmem:[%s2842] sm:$0xf]
        %v2844 = vld [vmem:[%s2842 + $0x4] sm:$0xf]
        %v2845 = vld [vmem:[%s2842 + $0x8] sm:$0xf]
        %v2846 = vld [vmem:[%s2842 + $0xc] sm:$0xf]
        %v2864 = vunpack.c.l.b16 %v2825
        %v2865 = vunpack.c.l.b16 %v2826
        %v2866 = vunpack.c.l.b16 %v2827
        %v2867 = vunpack.c.l.b16 %v2828
        %v2868 = vunpack.c.l.b16 %v2829
        %v2869 = vunpack.c.l.b16 %v2830
        %v2870 = vunpack.c.l.b16 %v2831
        %v2871 = vunpack.c.l.b16 %v2832
        %v2872 = vunpack.c.l.b16 %v2833
        %v2873 = vunpack.c.l.b16 %v2834
        %v2874 = vunpack.c.l.b16 %v2835
        %v2875 = vunpack.c.l.b16 %v2836
        %v2876 = vunpack.c.l.b16 %v2837
        %v2877 = vunpack.c.l.b16 %v2838
        %v2878 = vunpack.c.l.b16 %v2839
        %v2879 = vunpack.c.l.b16 %v2840
        %v2880 = vunpack.c.l.b16 %v2841
        %v2881 = vpack.c.b16 %v2865, %v2864
        %v2882 = vpack.c.b16 %v2867, %v2866
        %v2883 = vpack.c.b16 %v2869, %v2868
        %v2884 = vpack.c.b16 %v2871, %v2870
        %v2885 = vpack.c.b16 %v2873, %v2872
        %v2886 = vpack.c.b16 %v2875, %v2874
        %v2887 = vpack.c.b16 %v2877, %v2876
        %v2888 = vpack.c.b16 %v2879, %v2878
        %v2889 = vpack.c.b16 %v2880, %v2880
        %v2891 = vshrl.u32 %v2881, 16
        %v2893 = vshll.u32 %v2881, 16
        %v2895 = vrot.slane %v2893, 1
        %v2896 = vor.u32 %v2891, %v2895
        %v2898 = vshll.u32 %v2882, 16
        %v2900 = vrot.slane %v2898, 1
        %v2901 = vsel %vm2229, %v2896, %v2900
        %v2902 = vshrl.u32 %v2882, 16
        %v2904 = vor.u32 %v2902, %v2900
        %v2906 = vshll.u32 %v2883, 16
        %v2908 = vrot.slane %v2906, 1
        %v2909 = vsel %vm2229, %v2904, %v2908
        %v2910 = vshrl.u32 %v2883, 16
        %v2912 = vor.u32 %v2910, %v2908
        %v2914 = vshll.u32 %v2884, 16
        %v2916 = vrot.slane %v2914, 1
        %v2917 = vsel %vm2229, %v2912, %v2916
        %v2918 = vshrl.u32 %v2884, 16
        %v2920 = vor.u32 %v2918, %v2916
        %v2922 = vshll.u32 %v2885, 16
        %v2924 = vrot.slane %v2922, 1
        %v2925 = vsel %vm2229, %v2920, %v2924
        %v2926 = vshrl.u32 %v2885, 16
        %v2928 = vor.u32 %v2926, %v2924
        %v2930 = vshll.u32 %v2886, 16
        %v2932 = vrot.slane %v2930, 1
        %v2933 = vsel %vm2229, %v2928, %v2932
        %v2934 = vshrl.u32 %v2886, 16
        %v2936 = vor.u32 %v2934, %v2932
        %v2938 = vshll.u32 %v2887, 16
        %v2940 = vrot.slane %v2938, 1
        %v2941 = vsel %vm2229, %v2936, %v2940
        %v2942 = vshrl.u32 %v2887, 16
        %v2944 = vor.u32 %v2942, %v2940
        %v2946 = vshll.u32 %v2888, 16
        %v2948 = vrot.slane %v2946, 1
        %v2949 = vsel %vm2229, %v2944, %v2948
        %v2950 = vshrl.u32 %v2888, 16
        %v2952 = vor.u32 %v2950, %v2948
        %v2954 = vshll.u32 %v2889, 16
        %v2956 = vrot.slane %v2954, 1
        %v2957 = vsel %vm2229, %v2952, %v2956
        %v2962 = vunpack.c.l.b16 %v2843
        %v2963 = vunpack.c.l.b16 %v2844
        %v2964 = vunpack.c.l.b16 %v2845
        %v2965 = vunpack.c.l.b16 %v2846
        %v2966 = vpack.c.b16 %v2963, %v2962
        %v2967 = vpack.c.b16 %v2965, %v2964
        %v2971 = vsel %vm1535, %v2901, 0
        %v2974 = vsel %vm1535, %v2909, 0
        %v2977 = vsel %vm1535, %v2917, 0
        %v2980 = vsel %vm1535, %v2925, 0
        %v2983 = vsel %vm1535, %v2933, 0
        %v2986 = vsel %vm1535, %v2941, 0
        %v2989 = vsel %vm1535, %v2949, 0
        %v2992 = vsel %vm1535, %v2957, 0
        %2994 = vmatpush.bf16.msra.mxu0 0
        %2995 = vmatpush.bf16.msra.mxu0 0
        %2996 = vmatpush.bf16.msra.mxu0 0
        %2997 = vmatpush.bf16.msra.mxu0 0
        %2998 = vmatpush.bf16.msra.mxu0 0
        %2999 = vmatpush.bf16.msra.mxu0 0
        %3000 = vmatpush.bf16.msra.mxu0 %v2967
        %3001 = vmatpush.bf16.msra.mxu0 %v2966
        %3002 = vmatmul.bf16.gmra.mxu0 %v2971
        %v3003 = vpop.f32.mrf.mxu0
        %v3004 = vadd.f32 0.0, %v3003
        %v3005 = vpop.f32.mrf.mxu0
        %v3006 = vadd.f32 0.0, %v3005
        %3007 = vmatmul.bf16.gmra.mxu0 %v2974
        %v3008 = vpop.f32.mrf.mxu0
        %v3009 = vadd.f32 0.0, %v3008
        %v3010 = vpop.f32.mrf.mxu0
        %v3011 = vadd.f32 0.0, %v3010
        %3012 = vmatmul.bf16.gmra.mxu0 %v2977
        %v3013 = vpop.f32.mrf.mxu0
        %v3014 = vadd.f32 0.0, %v3013
        %v3015 = vpop.f32.mrf.mxu0
        %v3016 = vadd.f32 0.0, %v3015
        %3017 = vmatmul.bf16.gmra.mxu0 %v2980
        %v3018 = vpop.f32.mrf.mxu0
        %v3019 = vadd.f32 0.0, %v3018
        %v3020 = vpop.f32.mrf.mxu0
        %v3021 = vadd.f32 0.0, %v3020
        %3022 = vmatmul.bf16.gmra.mxu0 %v2983
        %v3023 = vpop.f32.mrf.mxu0
        %v3024 = vadd.f32 0.0, %v3023
        %v3025 = vpop.f32.mrf.mxu0
        %v3026 = vadd.f32 0.0, %v3025
        %3027 = vmatmul.bf16.gmra.mxu0 %v2986
        %v3028 = vpop.f32.mrf.mxu0
        %v3029 = vadd.f32 0.0, %v3028
        %v3030 = vpop.f32.mrf.mxu0
        %v3031 = vadd.f32 0.0, %v3030
        %3032 = vmatmul.bf16.gmra.mxu0 %v2989
        %v3033 = vpop.f32.mrf.mxu0
        %v3034 = vadd.f32 0.0, %v3033
        %v3035 = vpop.f32.mrf.mxu0
        %v3036 = vadd.f32 0.0, %v3035
        %3037 = vmatmul.bf16.gmra.mxu0 %v2992
        %v3038 = vpop.f32.mrf.mxu0
        %v3039 = vadd.f32 0.0, %v3038
        %v3040 = vpop.f32.mrf.mxu0
        %v3041 = vadd.f32 0.0, %v3040
        %3042 = vdwg.mxu0
        %v3043 = vadd.f32 %v2792, %v3004
        %v3044 = vadd.f32 %v2793, %v3006
        %v3045 = vadd.f32 %v2794, %v3009
        %v3046 = vadd.f32 %v2795, %v3011
        %v3047 = vadd.f32 %v2796, %v3014
        %v3048 = vadd.f32 %v2797, %v3016
        %v3049 = vadd.f32 %v2798, %v3019
        %v3050 = vadd.f32 %v2799, %v3021
        %v3051 = vadd.f32 %v2800, %v3024
        %v3052 = vadd.f32 %v2801, %v3026
        %v3053 = vadd.f32 %v2802, %v3029
        %v3054 = vadd.f32 %v2803, %v3031
        %v3055 = vadd.f32 %v2804, %v3034
        %v3056 = vadd.f32 %v2805, %v3036
        %v3057 = vadd.f32 %v2806, %v3039
        %v3058 = vadd.f32 %v2807, %v3041
        %v3059 = vld [vmem:[#allocation2 + $0x10] sm:$0x8]
        %v3060 = vld [vmem:[#allocation2 + $0x14] sm:$0xf]
        %v3061 = vld [vmem:[#allocation2 + $0x18] sm:$0xf]
        %v3062 = vld [vmem:[#allocation2 + $0x1c] sm:$0xf]
        %v3063 = vld [vmem:[#allocation2 + $0x20] sm:$0xf]
        %v3064 = vld [vmem:[#allocation2 + $0x24] sm:$0xf]
        %v3065 = vld [vmem:[#allocation2 + $0x28] sm:$0xf]
        %v3066 = vld [vmem:[#allocation2 + $0x2c] sm:$0xf]
        %v3067 = vld [vmem:[#allocation2 + $0x30] sm:$0xf]
        %v3068 = vld [vmem:[#allocation2 + $0x34] sm:$0xf]
        %v3069 = vld [vmem:[#allocation2 + $0x38] sm:$0xf]
        %v3070 = vld [vmem:[#allocation2 + $0x3c] sm:$0xf]
        %v3071 = vld [vmem:[#allocation2 + $0x40] sm:$0xf]
        %v3072 = vld [vmem:[#allocation2 + $0x44] sm:$0xf]
        %v3073 = vld [vmem:[#allocation2 + $0x48] sm:$0xf]
        %v3074 = vld [vmem:[#allocation2 + $0x4c] sm:$0xf]
        %v3075 = vld [vmem:[#allocation2 + $0x50] sm:$0xf]
        %v3076 = vsel %vm1344, %v3059, 0
        %v3077 = vsel %vm1351, %v3060, 0
        %v3078 = vsel %vm1358, %v3061, 0
        %v3079 = vsel %vm1365, %v3062, 0
        %v3080 = vsel %vm1372, %v3063, 0
        %v3081 = vsel %vm1379, %v3064, 0
        %v3082 = vsel %vm1386, %v3065, 0
        %v3083 = vsel %vm1393, %v3066, 0
        %v3084 = vsel %vm1400, %v3067, 0
        %v3085 = vsel %vm1407, %v3068, 0
        %v3086 = vsel %vm1414, %v3069, 0
        %v3087 = vsel %vm1421, %v3070, 0
        %v3088 = vsel %vm1428, %v3071, 0
        %v3089 = vsel %vm1435, %v3072, 0
        %v3090 = vsel %vm1442, %v3073, 0
        %v3091 = vsel %vm1449, %v3074, 0
        %v3092 = vsel %vm1456, %v3075, 0
        %s3093 = scalar_lea.vmem [#allocation8], 96
        %v3094 = vld [vmem:[%s3093] sm:$0xf]
        %v3095 = vld [vmem:[%s3093 + $0x4] sm:$0xf]
        %v3096 = vld [vmem:[%s3093 + $0x8] sm:$0xf]
        %v3097 = vld [vmem:[%s3093 + $0xc] sm:$0xf]
        %v3115 = vunpack.c.l.b16 %v3076
        %v3116 = vunpack.c.l.b16 %v3077
        %v3117 = vunpack.c.l.b16 %v3078
        %v3118 = vunpack.c.l.b16 %v3079
        %v3119 = vunpack.c.l.b16 %v3080
        %v3120 = vunpack.c.l.b16 %v3081
        %v3121 = vunpack.c.l.b16 %v3082
        %v3122 = vunpack.c.l.b16 %v3083
        %v3123 = vunpack.c.l.b16 %v3084
        %v3124 = vunpack.c.l.b16 %v3085
        %v3125 = vunpack.c.l.b16 %v3086
        %v3126 = vunpack.c.l.b16 %v3087
        %v3127 = vunpack.c.l.b16 %v3088
        %v3128 = vunpack.c.l.b16 %v3089
        %v3129 = vunpack.c.l.b16 %v3090
        %v3130 = vunpack.c.l.b16 %v3091
        %v3131 = vunpack.c.l.b16 %v3092
        %v3132 = vpack.c.b16 %v3116, %v3115
        %v3133 = vpack.c.b16 %v3118, %v3117
        %v3134 = vpack.c.b16 %v3120, %v3119
        %v3135 = vpack.c.b16 %v3122, %v3121
        %v3136 = vpack.c.b16 %v3124, %v3123
        %v3137 = vpack.c.b16 %v3126, %v3125
        %v3138 = vpack.c.b16 %v3128, %v3127
        %v3139 = vpack.c.b16 %v3130, %v3129
        %v3140 = vpack.c.b16 %v3131, %v3131
        %v3142 = vshrl.u32 %v3132, 16
        %v3144 = vrot.slane %v3142, 3
        %v3145 = vshll.u32 %v3132, 16
        %v3147 = vrot.slane %v3145, 4
        %v3148 = vor.u32 %v3144, %v3147
        %v3150 = vshrl.u32 %v3133, 16
        %v3152 = vrot.slane %v3150, 3
        %v3153 = vshll.u32 %v3133, 16
        %v3155 = vrot.slane %v3153, 4
        %v3156 = vor.u32 %v3152, %v3155
        %v3157 = vsel %vm1652, %v3148, %v3156
        %v3159 = vshrl.u32 %v3134, 16
        %v3161 = vrot.slane %v3159, 3
        %v3162 = vshll.u32 %v3134, 16
        %v3164 = vrot.slane %v3162, 4
        %v3165 = vor.u32 %v3161, %v3164
        %v3166 = vsel %vm1652, %v3156, %v3165
        %v3168 = vshrl.u32 %v3135, 16
        %v3170 = vrot.slane %v3168, 3
        %v3171 = vshll.u32 %v3135, 16
        %v3173 = vrot.slane %v3171, 4
        %v3174 = vor.u32 %v3170, %v3173
        %v3175 = vsel %vm1652, %v3165, %v3174
        %v3177 = vshrl.u32 %v3136, 16
        %v3179 = vrot.slane %v3177, 3
        %v3180 = vshll.u32 %v3136, 16
        %v3182 = vrot.slane %v3180, 4
        %v3183 = vor.u32 %v3179, %v3182
        %v3184 = vsel %vm1652, %v3174, %v3183
        %v3186 = vshrl.u32 %v3137, 16
        %v3188 = vrot.slane %v3186, 3
        %v3189 = vshll.u32 %v3137, 16
        %v3191 = vrot.slane %v3189, 4
        %v3192 = vor.u32 %v3188, %v3191
        %v3193 = vsel %vm1652, %v3183, %v3192
        %v3195 = vshrl.u32 %v3138, 16
        %v3197 = vrot.slane %v3195, 3
        %v3198 = vshll.u32 %v3138, 16
        %v3200 = vrot.slane %v3198, 4
        %v3201 = vor.u32 %v3197, %v3200
        %v3202 = vsel %vm1652, %v3192, %v3201
        %v3204 = vshrl.u32 %v3139, 16
        %v3206 = vrot.slane %v3204, 3
        %v3207 = vshll.u32 %v3139, 16
        %v3209 = vrot.slane %v3207, 4
        %v3210 = vor.u32 %v3206, %v3209
        %v3211 = vsel %vm1652, %v3201, %v3210
        %v3213 = vshrl.u32 %v3140, 16
        %v3215 = vrot.slane %v3213, 3
        %v3216 = vshll.u32 %v3140, 16
        %v3218 = vrot.slane %v3216, 4
        %v3219 = vor.u32 %v3215, %v3218
        %v3220 = vsel %vm1652, %v3210, %v3219
        %v3225 = vunpack.c.l.b16 %v3094
        %v3226 = vunpack.c.l.b16 %v3095
        %v3227 = vunpack.c.l.b16 %v3096
        %v3228 = vunpack.c.l.b16 %v3097
        %v3229 = vpack.c.b16 %v3226, %v3225
        %v3230 = vpack.c.b16 %v3228, %v3227
        %v3234 = vsel %vm1535, %v3157, 0
        %v3237 = vsel %vm1535, %v3166, 0
        %v3240 = vsel %vm1535, %v3175, 0
        %v3243 = vsel %vm1535, %v3184, 0
        %v3246 = vsel %vm1535, %v3193, 0
        %v3249 = vsel %vm1535, %v3202, 0
        %v3252 = vsel %vm1535, %v3211, 0
        %v3255 = vsel %vm1535, %v3220, 0
        %3257 = vmatpush.bf16.msra.mxu0 0
        %3258 = vmatpush.bf16.msra.mxu0 0
        %3259 = vmatpush.bf16.msra.mxu0 0
        %3260 = vmatpush.bf16.msra.mxu0 0
        %3261 = vmatpush.bf16.msra.mxu0 0
        %3262 = vmatpush.bf16.msra.mxu0 0
        %3263 = vmatpush.bf16.msra.mxu0 %v3230
        %3264 = vmatpush.bf16.msra.mxu0 %v3229
        %3265 = vmatmul.bf16.gmra.mxu0 %v3234
        %v3266 = vpop.f32.mrf.mxu0
        %v3267 = vadd.f32 0.0, %v3266
        %v3268 = vpop.f32.mrf.mxu0
        %v3269 = vadd.f32 0.0, %v3268
        %3270 = vmatmul.bf16.gmra.mxu0 %v3237
        %v3271 = vpop.f32.mrf.mxu0
        %v3272 = vadd.f32 0.0, %v3271
        %v3273 = vpop.f32.mrf.mxu0
        %v3274 = vadd.f32 0.0, %v3273
        %3275 = vmatmul.bf16.gmra.mxu0 %v3240
        %v3276 = vpop.f32.mrf.mxu0
        %v3277 = vadd.f32 0.0, %v3276
        %v3278 = vpop.f32.mrf.mxu0
        %v3279 = vadd.f32 0.0, %v3278
        %3280 = vmatmul.bf16.gmra.mxu0 %v3243
        %v3281 = vpop.f32.mrf.mxu0
        %v3282 = vadd.f32 0.0, %v3281
        %v3283 = vpop.f32.mrf.mxu0
        %v3284 = vadd.f32 0.0, %v3283
        %3285 = vmatmul.bf16.gmra.mxu0 %v3246
        %v3286 = vpop.f32.mrf.mxu0
        %v3287 = vadd.f32 0.0, %v3286
        %v3288 = vpop.f32.mrf.mxu0
        %v3289 = vadd.f32 0.0, %v3288
        %3290 = vmatmul.bf16.gmra.mxu0 %v3249
        %v3291 = vpop.f32.mrf.mxu0
        %v3292 = vadd.f32 0.0, %v3291
        %v3293 = vpop.f32.mrf.mxu0
        %v3294 = vadd.f32 0.0, %v3293
        %3295 = vmatmul.bf16.gmra.mxu0 %v3252
        %v3296 = vpop.f32.mrf.mxu0
        %v3297 = vadd.f32 0.0, %v3296
        %v3298 = vpop.f32.mrf.mxu0
        %v3299 = vadd.f32 0.0, %v3298
        %3300 = vmatmul.bf16.gmra.mxu0 %v3255
        %v3301 = vpop.f32.mrf.mxu0
        %v3302 = vadd.f32 0.0, %v3301
        %v3303 = vpop.f32.mrf.mxu0
        %v3304 = vadd.f32 0.0, %v3303
        %3305 = vdwg.mxu0
        %v3306 = vadd.f32 %v3043, %v3267
        %v3307 = vadd.f32 %v3044, %v3269
        %v3308 = vadd.f32 %v3045, %v3272
        %v3309 = vadd.f32 %v3046, %v3274
        %v3310 = vadd.f32 %v3047, %v3277
        %v3311 = vadd.f32 %v3048, %v3279
        %v3312 = vadd.f32 %v3049, %v3282
        %v3313 = vadd.f32 %v3050, %v3284
        %v3314 = vadd.f32 %v3051, %v3287
        %v3315 = vadd.f32 %v3052, %v3289
        %v3316 = vadd.f32 %v3053, %v3292
        %v3317 = vadd.f32 %v3054, %v3294
        %v3318 = vadd.f32 %v3055, %v3297
        %v3319 = vadd.f32 %v3056, %v3299
        %v3320 = vadd.f32 %v3057, %v3302
        %v3321 = vadd.f32 %v3058, %v3304
        %s3322 = scalar_lea.vmem [#allocation8], 112
        %v3323 = vld [vmem:[%s3322] sm:$0xf]
        %v3324 = vld [vmem:[%s3322 + $0x4] sm:$0xf]
        %v3325 = vld [vmem:[%s3322 + $0x8] sm:$0xf]
        %v3326 = vld [vmem:[%s3322 + $0xc] sm:$0xf]
        %v3343 = vunpack.c.l.b16 %v3060
        %v3344 = vunpack.c.l.b16 %v3061
        %v3345 = vunpack.c.l.b16 %v3062
        %v3346 = vunpack.c.l.b16 %v3063
        %v3347 = vunpack.c.l.b16 %v3064
        %v3348 = vunpack.c.l.b16 %v3065
        %v3349 = vunpack.c.l.b16 %v3066
        %v3350 = vunpack.c.l.b16 %v3067
        %v3351 = vunpack.c.l.b16 %v3068
        %v3352 = vunpack.c.l.b16 %v3069
        %v3353 = vunpack.c.l.b16 %v3070
        %v3354 = vunpack.c.l.b16 %v3071
        %v3355 = vunpack.c.l.b16 %v3072
        %v3356 = vunpack.c.l.b16 %v3073
        %v3357 = vunpack.c.l.b16 %v3074
        %v3358 = vunpack.c.l.b16 %v3075
        %v3359 = vpack.c.b16 %v3344, %v3343
        %v3360 = vpack.c.b16 %v3346, %v3345
        %v3361 = vpack.c.b16 %v3348, %v3347
        %v3362 = vpack.c.b16 %v3350, %v3349
        %v3363 = vpack.c.b16 %v3352, %v3351
        %v3364 = vpack.c.b16 %v3354, %v3353
        %v3365 = vpack.c.b16 %v3356, %v3355
        %v3366 = vpack.c.b16 %v3358, %v3357
        %v3371 = vunpack.c.l.b16 %v3323
        %v3372 = vunpack.c.l.b16 %v3324
        %v3373 = vunpack.c.l.b16 %v3325
        %v3374 = vunpack.c.l.b16 %v3326
        %v3375 = vpack.c.b16 %v3372, %v3371
        %v3376 = vpack.c.b16 %v3374, %v3373
        %v3380 = vsel %vm1535, %v3359, 0
        %v3383 = vsel %vm1535, %v3360, 0
        %v3386 = vsel %vm1535, %v3361, 0
        %v3389 = vsel %vm1535, %v3362, 0
        %v3392 = vsel %vm1535, %v3363, 0
        %v3395 = vsel %vm1535, %v3364, 0
        %v3398 = vsel %vm1535, %v3365, 0
        %v3401 = vsel %vm1535, %v3366, 0
        %3403 = vmatpush.bf16.msra.mxu0 0
        %3404 = vmatpush.bf16.msra.mxu0 0
        %3405 = vmatpush.bf16.msra.mxu0 0
        %3406 = vmatpush.bf16.msra.mxu0 0
        %3407 = vmatpush.bf16.msra.mxu0 0
        %3408 = vmatpush.bf16.msra.mxu0 0
        %3409 = vmatpush.bf16.msra.mxu0 %v3376
        %3410 = vmatpush.bf16.msra.mxu0 %v3375
        %3411 = vmatmul.bf16.gmra.mxu0 %v3380
        %v3412 = vpop.f32.mrf.mxu0
        %v3413 = vadd.f32 0.0, %v3412
        %v3414 = vpop.f32.mrf.mxu0
        %v3415 = vadd.f32 0.0, %v3414
        %3416 = vmatmul.bf16.gmra.mxu0 %v3383
        %v3417 = vpop.f32.mrf.mxu0
        %v3418 = vadd.f32 0.0, %v3417
        %v3419 = vpop.f32.mrf.mxu0
        %v3420 = vadd.f32 0.0, %v3419
        %3421 = vmatmul.bf16.gmra.mxu0 %v3386
        %v3422 = vpop.f32.mrf.mxu0
        %v3423 = vadd.f32 0.0, %v3422
        %v3424 = vpop.f32.mrf.mxu0
        %v3425 = vadd.f32 0.0, %v3424
        %3426 = vmatmul.bf16.gmra.mxu0 %v3389
        %v3427 = vpop.f32.mrf.mxu0
        %v3428 = vadd.f32 0.0, %v3427
        %v3429 = vpop.f32.mrf.mxu0
        %v3430 = vadd.f32 0.0, %v3429
        %3431 = vmatmul.bf16.gmra.mxu0 %v3392
        %v3432 = vpop.f32.mrf.mxu0
        %v3433 = vadd.f32 0.0, %v3432
        %v3434 = vpop.f32.mrf.mxu0
        %v3435 = vadd.f32 0.0, %v3434
        %3436 = vmatmul.bf16.gmra.mxu0 %v3395
        %v3437 = vpop.f32.mrf.mxu0
        %v3438 = vadd.f32 0.0, %v3437
        %v3439 = vpop.f32.mrf.mxu0
        %v3440 = vadd.f32 0.0, %v3439
        %3441 = vmatmul.bf16.gmra.mxu0 %v3398
        %v3442 = vpop.f32.mrf.mxu0
        %v3443 = vadd.f32 0.0, %v3442
        %v3444 = vpop.f32.mrf.mxu0
        %v3445 = vadd.f32 0.0, %v3444
        %3446 = vmatmul.bf16.gmra.mxu0 %v3401
        %v3447 = vpop.f32.mrf.mxu0
        %v3448 = vadd.f32 0.0, %v3447
        %v3449 = vpop.f32.mrf.mxu0
        %v3450 = vadd.f32 0.0, %v3449
        %3451 = vdwg.mxu0
        %v3452 = vadd.f32 %v3306, %v3413
        %v3453 = vadd.f32 %v3307, %v3415
        %v3454 = vadd.f32 %v3308, %v3418
        %v3455 = vadd.f32 %v3309, %v3420
        %v3456 = vadd.f32 %v3310, %v3423
        %v3457 = vadd.f32 %v3311, %v3425
        %v3458 = vadd.f32 %v3312, %v3428
        %v3459 = vadd.f32 %v3313, %v3430
        %v3460 = vadd.f32 %v3314, %v3433
        %v3461 = vadd.f32 %v3315, %v3435
        %v3462 = vadd.f32 %v3316, %v3438
        %v3463 = vadd.f32 %v3317, %v3440
        %v3464 = vadd.f32 %v3318, %v3443
        %v3465 = vadd.f32 %v3319, %v3445
        %v3466 = vadd.f32 %v3320, %v3448
        %v3467 = vadd.f32 %v3321, %v3450
        %v3468 = vld [vmem:[#allocation2 + $0x14] sm:$0xf]
        %v3469 = vld [vmem:[#allocation2 + $0x18] sm:$0xf]
        %v3470 = vld [vmem:[#allocation2 + $0x1c] sm:$0xf]
        %v3471 = vld [vmem:[#allocation2 + $0x20] sm:$0xf]
        %v3472 = vld [vmem:[#allocation2 + $0x24] sm:$0xf]
        %v3473 = vld [vmem:[#allocation2 + $0x28] sm:$0xf]
        %v3474 = vld [vmem:[#allocation2 + $0x2c] sm:$0xf]
        %v3475 = vld [vmem:[#allocation2 + $0x30] sm:$0xf]
        %v3476 = vld [vmem:[#allocation2 + $0x34] sm:$0xf]
        %v3477 = vld [vmem:[#allocation2 + $0x38] sm:$0xf]
        %v3478 = vld [vmem:[#allocation2 + $0x3c] sm:$0xf]
        %v3479 = vld [vmem:[#allocation2 + $0x40] sm:$0xf]
        %v3480 = vld [vmem:[#allocation2 + $0x44] sm:$0xf]
        %v3481 = vld [vmem:[#allocation2 + $0x48] sm:$0xf]
        %v3482 = vld [vmem:[#allocation2 + $0x4c] sm:$0xf]
        %v3483 = vld [vmem:[#allocation2 + $0x50] sm:$0xf]
        %v3484 = vld [vmem:[#allocation2 + $0x54] sm:$0x1]
        %v3485 = vsel %vm2051, %v3468, 0
        %v3486 = vsel %vm2058, %v3469, 0
        %v3487 = vsel %vm2065, %v3470, 0
        %v3488 = vsel %vm2072, %v3471, 0
        %v3489 = vsel %vm2079, %v3472, 0
        %v3490 = vsel %vm2086, %v3473, 0
        %v3491 = vsel %vm2093, %v3474, 0
        %v3492 = vsel %vm2100, %v3475, 0
        %v3493 = vsel %vm2107, %v3476, 0
        %v3494 = vsel %vm2114, %v3477, 0
        %v3495 = vsel %vm2121, %v3478, 0
        %v3496 = vsel %vm2128, %v3479, 0
        %v3497 = vsel %vm2135, %v3480, 0
        %v3498 = vsel %vm2142, %v3481, 0
        %v3499 = vsel %vm2149, %v3482, 0
        %v3500 = vsel %vm2156, %v3483, 0
        %v3501 = vsel %vm2163, %v3484, 0
        %s3502 = scalar_lea.vmem [#allocation8], 128
        %v3503 = vld [vmem:[%s3502] sm:$0xf]
        %v3504 = vld [vmem:[%s3502 + $0x4] sm:$0xf]
        %v3505 = vld [vmem:[%s3502 + $0x8] sm:$0xf]
        %v3506 = vld [vmem:[%s3502 + $0xc] sm:$0xf]
        %v3524 = vunpack.c.l.b16 %v3485
        %v3525 = vunpack.c.l.b16 %v3486
        %v3526 = vunpack.c.l.b16 %v3487
        %v3527 = vunpack.c.l.b16 %v3488
        %v3528 = vunpack.c.l.b16 %v3489
        %v3529 = vunpack.c.l.b16 %v3490
        %v3530 = vunpack.c.l.b16 %v3491
        %v3531 = vunpack.c.l.b16 %v3492
        %v3532 = vunpack.c.l.b16 %v3493
        %v3533 = vunpack.c.l.b16 %v3494
        %v3534 = vunpack.c.l.b16 %v3495
        %v3535 = vunpack.c.l.b16 %v3496
        %v3536 = vunpack.c.l.b16 %v3497
        %v3537 = vunpack.c.l.b16 %v3498
        %v3538 = vunpack.c.l.b16 %v3499
        %v3539 = vunpack.c.l.b16 %v3500
        %v3540 = vunpack.c.l.b16 %v3501
        %v3541 = vpack.c.b16 %v3525, %v3524
        %v3542 = vpack.c.b16 %v3527, %v3526
        %v3543 = vpack.c.b16 %v3529, %v3528
        %v3544 = vpack.c.b16 %v3531, %v3530
        %v3545 = vpack.c.b16 %v3533, %v3532
        %v3546 = vpack.c.b16 %v3535, %v3534
        %v3547 = vpack.c.b16 %v3537, %v3536
        %v3548 = vpack.c.b16 %v3539, %v3538
        %v3549 = vpack.c.b16 %v3540, %v3540
        %v3551 = vshrl.u32 %v3541, 16
        %v3553 = vshll.u32 %v3541, 16
        %v3555 = vrot.slane %v3553, 1
        %v3556 = vor.u32 %v3551, %v3555
        %v3558 = vshll.u32 %v3542, 16
        %v3560 = vrot.slane %v3558, 1
        %v3561 = vsel %vm2229, %v3556, %v3560
        %v3562 = vshrl.u32 %v3542, 16
        %v3564 = vor.u32 %v3562, %v3560
        %v3566 = vshll.u32 %v3543, 16
        %v3568 = vrot.slane %v3566, 1
        %v3569 = vsel %vm2229, %v3564, %v3568
        %v3570 = vshrl.u32 %v3543, 16
        %v3572 = vor.u32 %v3570, %v3568
        %v3574 = vshll.u32 %v3544, 16
        %v3576 = vrot.slane %v3574, 1
        %v3577 = vsel %vm2229, %v3572, %v3576
        %v3578 = vshrl.u32 %v3544, 16
        %v3580 = vor.u32 %v3578, %v3576
        %v3582 = vshll.u32 %v3545, 16
        %v3584 = vrot.slane %v3582, 1
        %v3585 = vsel %vm2229, %v3580, %v3584
        %v3586 = vshrl.u32 %v3545, 16
        %v3588 = vor.u32 %v3586, %v3584
        %v3590 = vshll.u32 %v3546, 16
        %v3592 = vrot.slane %v3590, 1
        %v3593 = vsel %vm2229, %v3588, %v3592
        %v3594 = vshrl.u32 %v3546, 16
        %v3596 = vor.u32 %v3594, %v3592
        %v3598 = vshll.u32 %v3547, 16
        %v3600 = vrot.slane %v3598, 1
        %v3601 = vsel %vm2229, %v3596, %v3600
        %v3602 = vshrl.u32 %v3547, 16
        %v3604 = vor.u32 %v3602, %v3600
        %v3606 = vshll.u32 %v3548, 16
        %v3608 = vrot.slane %v3606, 1
        %v3609 = vsel %vm2229, %v3604, %v3608
        %v3610 = vshrl.u32 %v3548, 16
        %v3612 = vor.u32 %v3610, %v3608
        %v3614 = vshll.u32 %v3549, 16
        %v3616 = vrot.slane %v3614, 1
        %v3617 = vsel %vm2229, %v3612, %v3616
        %v3622 = vunpack.c.l.b16 %v3503
        %v3623 = vunpack.c.l.b16 %v3504
        %v3624 = vunpack.c.l.b16 %v3505
        %v3625 = vunpack.c.l.b16 %v3506
        %v3626 = vpack.c.b16 %v3623, %v3622
        %v3627 = vpack.c.b16 %v3625, %v3624
        %v3631 = vsel %vm1535, %v3561, 0
        %v3634 = vsel %vm1535, %v3569, 0
        %v3637 = vsel %vm1535, %v3577, 0
        %v3640 = vsel %vm1535, %v3585, 0
        %v3643 = vsel %vm1535, %v3593, 0
        %v3646 = vsel %vm1535, %v3601, 0
        %v3649 = vsel %vm1535, %v3609, 0
        %v3652 = vsel %vm1535, %v3617, 0
        %3654 = vmatpush.bf16.msra.mxu0 0
        %3655 = vmatpush.bf16.msra.mxu0 0
        %3656 = vmatpush.bf16.msra.mxu0 0
        %3657 = vmatpush.bf16.msra.mxu0 0
        %3658 = vmatpush.bf16.msra.mxu0 0
        %3659 = vmatpush.bf16.msra.mxu0 0
        %3660 = vmatpush.bf16.msra.mxu0 %v3627
        %3661 = vmatpush.bf16.msra.mxu0 %v3626
        %3662 = vmatmul.bf16.gmra.mxu0 %v3631
        %v3663 = vpop.f32.mrf.mxu0
        %v3664 = vadd.f32 0.0, %v3663
        %v3665 = vpop.f32.mrf.mxu0
        %v3666 = vadd.f32 0.0, %v3665
        %3667 = vmatmul.bf16.gmra.mxu0 %v3634
        %v3668 = vpop.f32.mrf.mxu0
        %v3669 = vadd.f32 0.0, %v3668
        %v3670 = vpop.f32.mrf.mxu0
        %v3671 = vadd.f32 0.0, %v3670
        %3672 = vmatmul.bf16.gmra.mxu0 %v3637
        %v3673 = vpop.f32.mrf.mxu0
        %v3674 = vadd.f32 0.0, %v3673
        %v3675 = vpop.f32.mrf.mxu0
        %v3676 = vadd.f32 0.0, %v3675
        %3677 = vmatmul.bf16.gmra.mxu0 %v3640
        %v3678 = vpop.f32.mrf.mxu0
        %v3679 = vadd.f32 0.0, %v3678
        %v3680 = vpop.f32.mrf.mxu0
        %v3681 = vadd.f32 0.0, %v3680
        %3682 = vmatmul.bf16.gmra.mxu0 %v3643
        %v3683 = vpop.f32.mrf.mxu0
        %v3684 = vadd.f32 0.0, %v3683
        %v3685 = vpop.f32.mrf.mxu0
        %v3686 = vadd.f32 0.0, %v3685
        %3687 = vmatmul.bf16.gmra.mxu0 %v3646
        %v3688 = vpop.f32.mrf.mxu0
        %v3689 = vadd.f32 0.0, %v3688
        %v3690 = vpop.f32.mrf.mxu0
        %v3691 = vadd.f32 0.0, %v3690
        %3692 = vmatmul.bf16.gmra.mxu0 %v3649
        %v3693 = vpop.f32.mrf.mxu0
        %v3694 = vadd.f32 0.0, %v3693
        %v3695 = vpop.f32.mrf.mxu0
        %v3696 = vadd.f32 0.0, %v3695
        %3697 = vmatmul.bf16.gmra.mxu0 %v3652
        %v3698 = vpop.f32.mrf.mxu0
        %v3699 = vadd.f32 0.0, %v3698
        %v3700 = vpop.f32.mrf.mxu0
        %v3701 = vadd.f32 0.0, %v3700
        %3702 = vdwg.mxu0
        %v3703 = vadd.f32 %v3452, %v3664
        %v3704 = vadd.f32 %v3453, %v3666
        %v3705 = vadd.f32 %v3454, %v3669
        %v3706 = vadd.f32 %v3455, %v3671
        %v3707 = vadd.f32 %v3456, %v3674
        %v3708 = vadd.f32 %v3457, %v3676
        %v3709 = vadd.f32 %v3458, %v3679
        %v3710 = vadd.f32 %v3459, %v3681
        %v3711 = vadd.f32 %v3460, %v3684
        %v3712 = vadd.f32 %v3461, %v3686
        %v3713 = vadd.f32 %v3462, %v3689
        %v3714 = vadd.f32 %v3463, %v3691
        %v3715 = vadd.f32 %v3464, %v3694
        %v3716 = vadd.f32 %v3465, %v3696
        %v3717 = vadd.f32 %v3466, %v3699
        %v3718 = vadd.f32 %v3467, %v3701
        %v3719 = vld [vmem:[%s5] sm:$0x1]
        %v3721 = vperm.slane %v3719, 0
        %v3723 = vadd.f32 %v3703, %v3721
        %v3724 = vadd.f32 %v3704, %v3721
        %v3725 = vadd.f32 %v3705, %v3721
        %v3726 = vadd.f32 %v3706, %v3721
        %v3727 = vadd.f32 %v3707, %v3721
        %v3728 = vadd.f32 %v3708, %v3721
        %v3729 = vadd.f32 %v3709, %v3721
        %v3730 = vadd.f32 %v3710, %v3721
        %v3731 = vadd.f32 %v3711, %v3721
        %v3732 = vadd.f32 %v3712, %v3721
        %v3733 = vadd.f32 %v3713, %v3721
        %v3734 = vadd.f32 %v3714, %v3721
        %v3735 = vadd.f32 %v3715, %v3721
        %v3736 = vadd.f32 %v3716, %v3721
        %v3737 = vadd.f32 %v3717, %v3721
        %v3738 = vadd.f32 %v3718, %v3721
        %v3739 = vmax.f32 %v3723, 0.0
        %v3740 = vmax.f32 %v3724, 0.0
        %v3741 = vmax.f32 %v3725, 0.0
        %v3742 = vmax.f32 %v3726, 0.0
        %v3743 = vmax.f32 %v3727, 0.0
        %v3744 = vmax.f32 %v3728, 0.0
        %v3745 = vmax.f32 %v3729, 0.0
        %v3746 = vmax.f32 %v3730, 0.0
        %v3747 = vmax.f32 %v3731, 0.0
        %v3748 = vmax.f32 %v3732, 0.0
        %v3749 = vmax.f32 %v3733, 0.0
        %v3750 = vmax.f32 %v3734, 0.0
        %v3751 = vmax.f32 %v3735, 0.0
        %v3752 = vmax.f32 %v3736, 0.0
        %v3753 = vmax.f32 %v3737, 0.0
        %v3754 = vmax.f32 %v3738, 0.0
        %v3755 = vpack.c.bf16 %v3740, %v3739
        %v3756 = vpack.c.bf16 %v3742, %v3741
        %v3757 = vpack.c.bf16 %v3744, %v3743
        %v3758 = vpack.c.bf16 %v3746, %v3745
        %v3759 = vpack.c.bf16 %v3748, %v3747
        %v3760 = vpack.c.bf16 %v3750, %v3749
        %v3761 = vpack.c.bf16 %v3752, %v3751
        %v3762 = vpack.c.bf16 %v3754, %v3753
        %v3763 = vld [vmem:[%s6] sm:$0xf]
        %v3764 = vld [vmem:[%s6 + $0x4] sm:$0xf]
        %v3765 = vld [vmem:[%s6 + $0x8] sm:$0xf]
        %v3766 = vld [vmem:[%s6 + $0xc] sm:$0xf]
        %v3767 = vld [vmem:[%s7] sm:$0x1]
        %v3769 = vperm.slane %v3767, 0
        %v3775 = vunpack.c.l.b16 %v3763
        %v3776 = vunpack.c.l.b16 %v3764
        %v3777 = vunpack.c.l.b16 %v3765
        %v3778 = vunpack.c.l.b16 %v3766
        %v3779 = vpack.c.b16 %v3776, %v3775
        %v3780 = vpack.c.b16 %v3778, %v3777
        %v3784 = vsel %vm1535, %v3755, 0
        %v3787 = vsel %vm1535, %v3756, 0
        %v3790 = vsel %vm1535, %v3757, 0
        %v3793 = vsel %vm1535, %v3758, 0
        %v3796 = vsel %vm1535, %v3759, 0
        %v3799 = vsel %vm1535, %v3760, 0
        %v3802 = vsel %vm1535, %v3761, 0
        %v3805 = vsel %vm1535, %v3762, 0
        %3807 = vmatpush.bf16.msra.mxu0 0
        %3808 = vmatpush.bf16.msra.mxu0 0
        %3809 = vmatpush.bf16.msra.mxu0 0
        %3810 = vmatpush.bf16.msra.mxu0 0
        %3811 = vmatpush.bf16.msra.mxu0 0
        %3812 = vmatpush.bf16.msra.mxu0 0
        %3813 = vmatpush.bf16.msra.mxu0 %v3780
        %3814 = vmatpush.bf16.msra.mxu0 %v3779
        %3815 = vmatmul.bf16.gmra.mxu0 %v3784
        %v3816 = vpop.f32.mrf.mxu0
        %v3817 = vadd.f32 %v3769, %v3816
        %v3818 = vpop.f32.mrf.mxu0
        %v3819 = vadd.f32 %v3769, %v3818
        %3820 = vmatmul.bf16.gmra.mxu0 %v3787
        %v3821 = vpop.f32.mrf.mxu0
        %v3822 = vadd.f32 %v3769, %v3821
        %v3823 = vpop.f32.mrf.mxu0
        %v3824 = vadd.f32 %v3769, %v3823
        %3825 = vmatmul.bf16.gmra.mxu0 %v3790
        %v3826 = vpop.f32.mrf.mxu0
        %v3827 = vadd.f32 %v3769, %v3826
        %v3828 = vpop.f32.mrf.mxu0
        %v3829 = vadd.f32 %v3769, %v3828
        %3830 = vmatmul.bf16.gmra.mxu0 %v3793
        %v3831 = vpop.f32.mrf.mxu0
        %v3832 = vadd.f32 %v3769, %v3831
        %v3833 = vpop.f32.mrf.mxu0
        %v3834 = vadd.f32 %v3769, %v3833
        %3835 = vmatmul.bf16.gmra.mxu0 %v3796
        %v3836 = vpop.f32.mrf.mxu0
        %v3837 = vadd.f32 %v3769, %v3836
        %v3838 = vpop.f32.mrf.mxu0
        %v3839 = vadd.f32 %v3769, %v3838
        %3840 = vmatmul.bf16.gmra.mxu0 %v3799
        %v3841 = vpop.f32.mrf.mxu0
        %v3842 = vadd.f32 %v3769, %v3841
        %v3843 = vpop.f32.mrf.mxu0
        %v3844 = vadd.f32 %v3769, %v3843
        %3845 = vmatmul.bf16.gmra.mxu0 %v3802
        %v3846 = vpop.f32.mrf.mxu0
        %v3847 = vadd.f32 %v3769, %v3846
        %v3848 = vpop.f32.mrf.mxu0
        %v3849 = vadd.f32 %v3769, %v3848
        %3850 = vmatmul.bf16.gmra.mxu0 %v3805
        %v3851 = vpop.f32.mrf.mxu0
        %v3852 = vadd.f32 %v3769, %v3851
        %v3853 = vpop.f32.mrf.mxu0
        %v3854 = vadd.f32 %v3769, %v3853
        %3855 = vdwg.mxu0
        %v3856 = vld [vmem:[%s358] sm:$0xff]
        %v3857 = vld [vmem:[%s358 + $0x8] sm:$0xff]
        %v3858 = vld [vmem:[%s358 + $0x10] sm:$0xff]
        %v3859 = vld [vmem:[%s358 + $0x18] sm:$0xff]
        %v3860 = vld [vmem:[%s358 + $0x20] sm:$0xff]
        %v3861 = vld [vmem:[%s358 + $0x28] sm:$0xff]
        %v3862 = vld [vmem:[%s358 + $0x30] sm:$0xff]
        %v3863 = vld [vmem:[%s358 + $0x38] sm:$0xff]
        %v3864 = vld [vmem:[%s358 + $0x40] sm:$0xff]
        %v3865 = vld [vmem:[%s358 + $0x48] sm:$0xff]
        %v3866 = vld [vmem:[%s358 + $0x50] sm:$0xff]
        %v3867 = vld [vmem:[%s358 + $0x58] sm:$0xff]
        %v3868 = vld [vmem:[%s358 + $0x60] sm:$0xff]
        %v3869 = vld [vmem:[%s358 + $0x68] sm:$0xff]
        %v3870 = vld [vmem:[%s358 + $0x70] sm:$0xff]
        %v3871 = vld [vmem:[%s358 + $0x78] sm:$0xff]
        %v3872 = vadd.f32 %v3817, %v3856
        %v3873 = vadd.f32 %v3819, %v3857
        %v3874 = vadd.f32 %v3822, %v3858
        %v3875 = vadd.f32 %v3824, %v3859
        %v3876 = vadd.f32 %v3827, %v3860
        %v3877 = vadd.f32 %v3829, %v3861
        %v3878 = vadd.f32 %v3832, %v3862
        %v3879 = vadd.f32 %v3834, %v3863
        %v3880 = vadd.f32 %v3837, %v3864
        %v3881 = vadd.f32 %v3839, %v3865
        %v3882 = vadd.f32 %v3842, %v3866
        %v3883 = vadd.f32 %v3844, %v3867
        %v3884 = vadd.f32 %v3847, %v3868
        %v3885 = vadd.f32 %v3849, %v3869
        %v3886 = vadd.f32 %v3852, %v3870
        %v3887 = vadd.f32 %v3854, %v3871
        %v3888 = vmax.f32 %v3872, 0.0
        %v3889 = vmax.f32 %v3873, 0.0
        %v3890 = vmax.f32 %v3874, 0.0
        %v3891 = vmax.f32 %v3875, 0.0
        %v3892 = vmax.f32 %v3876, 0.0
        %v3893 = vmax.f32 %v3877, 0.0
        %v3894 = vmax.f32 %v3878, 0.0
        %v3895 = vmax.f32 %v3879, 0.0
        %v3896 = vmax.f32 %v3880, 0.0
        %v3897 = vmax.f32 %v3881, 0.0
        %v3898 = vmax.f32 %v3882, 0.0
        %v3899 = vmax.f32 %v3883, 0.0
        %v3900 = vmax.f32 %v3884, 0.0
        %v3901 = vmax.f32 %v3885, 0.0
        %v3902 = vmax.f32 %v3886, 0.0
        %v3903 = vmax.f32 %v3887, 0.0
        %3904 = vst [vmem:[%s401] sm:$0xff] %v3888
        %3905 = vst [vmem:[%s401 + $0x8] sm:$0xff] %v3889
        %3906 = vst [vmem:[%s401 + $0x10] sm:$0xff] %v3890
        %3907 = vst [vmem:[%s401 + $0x18] sm:$0xff] %v3891
        %3908 = vst [vmem:[%s401 + $0x20] sm:$0xff] %v3892
        %3909 = vst [vmem:[%s401 + $0x28] sm:$0xff] %v3893
        %3910 = vst [vmem:[%s401 + $0x30] sm:$0xff] %v3894
        %3911 = vst [vmem:[%s401 + $0x38] sm:$0xff] %v3895
        %3912 = vst [vmem:[%s401 + $0x40] sm:$0xff] %v3896
        %3913 = vst [vmem:[%s401 + $0x48] sm:$0xff] %v3897
        %3914 = vst [vmem:[%s401 + $0x50] sm:$0xff] %v3898
        %3915 = vst [vmem:[%s401 + $0x58] sm:$0xff] %v3899
        %3916 = vst [vmem:[%s401 + $0x60] sm:$0xff] %v3900
        %3917 = vst [vmem:[%s401 + $0x68] sm:$0xff] %v3901
        %3918 = vst [vmem:[%s401 + $0x70] sm:$0xff] %v3902
        %3919 = vst [vmem:[%s401 + $0x78] sm:$0xff] %v3903
        %s3920 = sand.u32 %s230, 1
        %s3921 = scalar_lea.sflag [#allocation5], %s3920
        %s3922 = sand.u32 %s230, 1
        %s3923 = smul.addr %s3922, 128
        %s3924 = scalar_lea.vmem [#allocation9], %s3923
        // Predicated region
        $region65: #{tpu_custom_call.1} parent=51 // pred_check
          %p3925 = pneg %p240
        $region66: #{tpu_custom_call.1} parent=51 // pred_check_branch
          %3927 = sbr.rel (%p3925) target = $region68
        $region67: #{tpu_custom_call.1} parent=51 // pred_region
          %s3928 = smul.u32 16, %s33
          %3930 = vsyncadd %s3921, 0
          %s3931 = smul.addr %s32, 32
          %s3932 = sadd.s32 %s3928, %s3931
          %s3933 = smul.addr %s3932, 8
          %s3934 = scalar_lea.hbm %s8, %s3933
          %s3935 = sshll.u32 %s3924, 4
          %s3936 = int_to_ptr.vmem [resolvable:$true] %s3935
          %s3937 = sshll.u32 %s3934, 4
          %s3938 = int_to_ptr.hbm [resolvable:$true] %s3937
          %3943 = dma.vmem_to_hbm [thread:$0]  %s3936, 2048, %s3938, %s3921, 128, 128, 8
        $region68: #{tpu_custom_call.1} parent=51 // pred_fallthru
          _
      $region52: #{tpu_custom_call.1} parent=5 // pred_fallthru
        _
      %p3944 = scmp.le.s32.totalorder 2, %s23
      // Predicated region
      $region69: #{tpu_custom_call.1} parent=5 // pred_check
        %p3945 = pneg %p3944
      $region70: #{tpu_custom_call.1} parent=5 // pred_check_branch
        %3947 = sbr.rel (%p3945) target = $region72
      $region71: #{tpu_custom_call.1} parent=5 // pred_region
        %s3948 = ssub.s32 %s23, 2
        // Predicated region
        $region73: #{tpu_custom_call.1} parent=71 // pred_check
          %p3949 = pneg %p246
        $region74: #{tpu_custom_call.1} parent=71 // pred_check_branch
          %3951 = sbr.rel (%p3949) target = $region76
        $region75: #{tpu_custom_call.1} parent=71 // pred_region
          %s3952 = sand.u32 %s231, 1
          %s3953 = scalar_lea.sflag [#allocation5], %s3952
          %s3954 = sand.u32 %s231, 1
          %s3955 = smul.addr %s3954, 128
          %s3956 = scalar_lea.vmem [#allocation9], %s3955
          %3958 = dma.done %s3953, 2048
        $region76: #{tpu_custom_call.1} parent=71 // pred_fallthru
          _
      $region72: #{tpu_custom_call.1} parent=5 // pred_fallthru
        _
    $region6: #{tpu_custom_call.1} parent=1 // loop_footer
      %s27 = sadd.s32 1, %s23
    $region7: #{tpu_custom_call.1} parent=1 // loop_footer_branch
      %22 = sbr.rel target = $region3
    $region8: #{tpu_custom_call.1} parent=1 // loop_exit
      _
    %3959 = vsyncpa [#allocation4], 1
    %s3960 = scalar_lea.sflag [#allocation4], 1
    %3961 = vsyncpa %s3960, 1
    %3962 = vsyncpa [#allocation7], 1
    %s3963 = scalar_lea.sflag [#allocation7], 1
    %3964 = vsyncpa %s3963, 1
    %3965 = vsyncpa [#allocation5], 1
    %s3966 = scalar_lea.sflag [#allocation5], 1
    %3967 = vsyncpa %s3966, 1

</llo_original>
